<compile_context>
chip_gen: v7x
topology: tpu7x:2x2x1
jax: 0.10.0
libtpu: 0.0.40
codegen_flags: <defaults>
</compile_context>

<pallas_src>
import jax
import jax.numpy as jnp
from jax.experimental import pallas as pl
from jax.experimental.pallas import tpu as pltpu


# ----------------------------------------------------------------------------
# Fused kernel: one lane-dense output-column panel per grid step.
#   result_panel = (x @ W_panel + b_panel + t * t_freq_panel) + scale * (cond @ Wc_panel)
# which equals  out_uncond + scale * (out - out_uncond)  for the affine-in-cond model.
# ----------------------------------------------------------------------------
def _fused_cfg_kernel(x_ref, cond_ref, ts_ref, scale_ref,
                      w_ref, wc_ref, bias_ref, o_ref):
    # MXU matmuls against the current contiguous weight panels (bf16 in, f32 acc).
    base = jnp.dot(x_ref[...], w_ref[...],
                   preferred_element_type=jnp.float32)            # [B, TN]
    cproj = jnp.dot(cond_ref[...], wc_ref[...],
                    preferred_element_type=jnp.float32)            # [B, TN]
    b_pan = bias_ref[0:1, :]                                       # [1, TN] f32
    tf_pan = bias_ref[1:2, :]                                      # [1, TN] f32
    # base == out_uncond for this panel; t-embedding on the VPU (free under mem-bound).
    base = base + b_pan + ts_ref[...] * tf_pan
    # out_uncond + scale * (out - out_uncond)  ==  base + scale * cproj
    o_ref[...] = (base + scale_ref[...] * cproj).astype(o_ref.dtype)


# ----------------------------------------------------------------------------
# Generation-aware sizing.
# ----------------------------------------------------------------------------
def _vmem_budget():
    """Returns (max W-panel bytes, vmem_limit_bytes).
    v5e/v6e have 128 MiB physical VMEM -> larger panels amortize per-step overhead.
    v7x has 64 MiB per TensorCore (scoped default 32 MiB) -> stay conservative;
    unknown chips fall back to the conservative budget."""
    try:
        kind = jax.devices()[0].device_kind.lower()
    except Exception:  # pragma: no cover
        kind = ""
    if ("v5" in kind) or ("v6" in kind):
        return 16 << 20, 64 << 20
    return 10 << 20, 44 << 20


def _pick_tn(D, max_panel_bytes, dtype_bytes=2):
    """Largest lane-dense panel width: multiple of 128, divides D, and a single bf16
    (D, TN) W panel stays under max_panel_bytes (two are kept in flight).  For small D
    this collapses to TN = D (single contiguous load, grid of 1)."""
    assert D % 128 == 0, "feature dim must be a multiple of 128 (pad upstream otherwise)"
    cap = max(128, (max_panel_bytes // (D * dtype_bytes)) // 128 * 128)
    tn = min(D, cap)
    while D % tn:
        tn -= 128
    return max(tn, 128)


# ----------------------------------------------------------------------------
# One-time parameter preparation: bf16 cast + contiguous panelization.
# (Do this ONCE at model-load time, never per forward call.)
# ----------------------------------------------------------------------------
def prepare_cfg_params(params, *, max_panel_bytes):
    W = params["W"]              # [D, D]
    Wc = params["W_cond"]        # [C, D]
    D = W.shape[0]
    C = Wc.shape[0]
    assert W.shape == (D, D) and Wc.shape == (C, D)

    TN = _pick_tn(D, max_panel_bytes)
    nt = D // TN

    # Column panel n of a row-major matrix is strided; re-lay it out as [nt, ·, TN] so
    # each grid step streams ONE contiguous block from HBM.
    W_panels = W.astype(jnp.bfloat16).reshape(D, nt, TN).transpose(1, 0, 2)    # [nt, D, TN]
    Wc_panels = Wc.astype(jnp.bfloat16).reshape(C, nt, TN).transpose(1, 0, 2)  # [nt, C, TN]
    bias = jnp.concatenate(
        [params["b"].reshape(1, D).astype(jnp.float32),
         params["t_freq"].reshape(1, D).astype(jnp.float32)], axis=0)          # [2, D]
    bias_panels = bias.reshape(2, nt, TN).transpose(1, 0, 2)                   # [nt, 2, TN]

    return {"W_panels": W_panels, "Wc_panels": Wc_panels, "bias_panels": bias_panels,
            "D": D, "C": C, "TN": TN, "nt": nt}


# ----------------------------------------------------------------------------
# ClassifierFreeSampleModel.forward
# ----------------------------------------------------------------------------
def classifier_free_sample_forward(x, timesteps, y, prepped, *, vmem_limit_bytes):
    """x: [B, njoints, nfeats, nframes]; timesteps: [B]; y: {'cond': [B, C], 'scale': [B]}.
    `prepped` comes from prepare_cfg_params (bf16, pre-panelized weights).
    NOTE: the biggest end-to-end lever is batching more samples per call (B up to ~128-512)
    so the W stream is amortized across them."""
    B, J, F, T = x.shape
    D = J * F * T
    assert D == prepped["D"], "x feature size must match prepared weights"
    C, TN, nt = prepped["C"], prepped["TN"], prepped["nt"]

    W_panels = prepped["W_panels"]
    Wc_panels = prepped["Wc_panels"]
    bias_panels = prepped["bias_panels"]
    # Weights must already be bf16 + panelized (no per-call D^2 cast on the hot path).
    assert W_panels.dtype == jnp.bfloat16 and Wc_panels.dtype == jnp.bfloat16
    assert W_panels.shape == (nt, D, TN) and Wc_panels.shape == (nt, C, TN)

    x_flat = x.reshape(B, D).astype(jnp.bfloat16)
    cond = y["cond"].astype(jnp.bfloat16)
    ts = timesteps.astype(jnp.float32).reshape(B, 1)
    scale = y["scale"].astype(jnp.float32).reshape(B, 1)   # .view(-1,1,1,1) analogue

    resident = lambda shape: pl.BlockSpec(shape, lambda n: (0, 0))      # same block each step
    panel3 = lambda rows: pl.BlockSpec((None, rows, TN), lambda n: (n, 0, 0))  # contiguous panel n

    flops = 2 * B * D * D + 2 * B * C * D
    bytes_accessed = ((D * D + C * D) * 2        # bf16 weights streamed once (contiguous)
                      + 2 * D * 4                # stacked bias (b, t_freq)
                      + B * (D * 2 + C * 2 + 2 * 4)
                      + B * D * 4)               # f32 output
    # TODO(synk): optional further HBM-bytes wins not applied here: int8 weights on
    # v5e/v6e / fp8 on v7x (generation-specific MXU paths), bf16 output if downstream
    # tolerates it, and pltpu.CORE_PARALLEL on the panel axis for v7x megacore.

    out_flat = pl.pallas_call(
        _fused_cfg_kernel,
        out_shape=jax.ShapeDtypeStruct((B, D), jnp.float32),
        grid=(nt,),
        in_specs=[
            resident((B, D)),        # x_flat   (resident across panels)
            resident((B, C)),        # cond
            resident((B, 1)),        # timesteps
            resident((B, 1)),        # scale
            panel3(D),               # W       [D, TN]  contiguous panel
            panel3(C),               # W_cond  [C, TN]  contiguous panel
            panel3(2),               # bias    [2, TN]  (b row 0, t_freq row 1)
        ],
        out_specs=pl.BlockSpec((B, TN), lambda n: (0, n)),
        compiler_params=pltpu.CompilerParams(
            dimension_semantics=("parallel",),
            vmem_limit_bytes=vmem_limit_bytes),
        cost_estimate=pl.CostEstimate(flops=flops, transcendentals=0,
                                      bytes_accessed=bytes_accessed),
    )(x_flat, cond, ts, scale, W_panels, Wc_panels, bias_panels)

    return out_flat.reshape(B, J, F, T)


# ----------------------------------------------------------------------------
if __name__ == "__main__":
    key = jax.random.PRNGKey(0)
    k_x, k_w, k_b, k_c, k_wc = jax.random.split(key, 5)

    B, J, F, T = 2, 4, 16, 16          # batch, njoints, nfeats, nframes
    D = J * F * T                      # 1024 -> single contiguous panel (grid=(1,))
    C = 128                            # conditioning (text/action) embedding dim

    x = jax.random.normal(k_x, (B, J, F, T), dtype=jnp.float32)
    timesteps = jnp.array([3, 17], dtype=jnp.int32)
    y = {
        "cond": jax.random.normal(k_c, (B, C), dtype=jnp.float32),
        "scale": jnp.array([2.5, 1.0], dtype=jnp.float32),
    }

    params = {
        # Stored bf16 (MXU-native; halves the dominant HBM stream).
        "W": (0.05 * jax.random.normal(k_w, (D, D), dtype=jnp.float32)).astype(jnp.bfloat16),
        "W_cond": (0.05 * jax.random.normal(k_wc, (C, D), dtype=jnp.float32)).astype(jnp.bfloat16),
        "b": 0.01 * jax.random.normal(k_b, (1, D), dtype=jnp.float32),
        "t_freq": 0.001 * jnp.arange(D, dtype=jnp.float32),
    }

    # One-time prep (bf16 cast + contiguous panelization), generation-aware sizing.
    max_panel_bytes, vmem_limit = _vmem_budget()
    prepped = prepare_cfg_params(params, max_panel_bytes=max_panel_bytes)

    result = classifier_free_sample_forward(x, timesteps, y, prepped,
                                            vmem_limit_bytes=vmem_limit)
    jax.block_until_ready(result)

    # Pure-JAX reference of the ORIGINAL two-branch CFG formula (same bf16 weights,
    # f32 accumulation via precision="highest").
    x_bf = x.reshape(B, D).astype(jnp.bfloat16).astype(jnp.float32)
    cond_bf = y["cond"].astype(jnp.bfloat16).astype(jnp.float32)
    Wf = params["W"].astype(jnp.float32)
    Wcf = params["W_cond"].astype(jnp.float32)
    t_emb = timesteps.astype(jnp.float32)[:, None] * params["t_freq"][None, :]
    base = jnp.dot(x_bf, Wf, precision="highest") + params["b"] + t_emb
    out_c = base + jnp.dot(cond_bf, Wcf, precision="highest")   # conditioned
    out_u = base                                                # unconditioned (cond masked)
    ref = (out_u + y["scale"].reshape(B, 1) * (out_c - out_u)).reshape(B, J, F, T)

    assert jnp.allclose(result, ref, atol=1e-3, rtol=1e-3), \
        float(jnp.max(jnp.abs(result - ref)))

    print("KERNEL_OK")
</pallas_src>

<mosaic_0001>
module attributes {stable_mosaic.version = 11 : i64} {
  func.func @_fused_cfg_kernel(%arg0: i32, %arg1: memref<2x1024xbf16, #tpu.memory_space<vmem>>, %arg2: memref<2x128xbf16, #tpu.memory_space<vmem>>, %arg3: memref<2x1xf32, #tpu.memory_space<vmem>>, %arg4: memref<2x1xf32, #tpu.memory_space<vmem>>, %arg5: memref<1x1024x1024xbf16, #tpu.memory_space<vmem>>, %arg6: memref<1x128x1024xbf16, #tpu.memory_space<vmem>>, %arg7: memref<1x2x1024xf32, #tpu.memory_space<vmem>>, %arg8: memref<2x1024xf32, #tpu.memory_space<vmem>>) attributes {dimension_semantics = [#tpu.dimension_semantics<parallel>], iteration_bounds = array<i64: 1>, scalar_prefetch = 0 : i64, scratch_operands = 0 : i64, tpu.core_type = #tpu.core_type<tc>, window_params = [{pipeline_mode = #tpu.pipeline_mode<synchronous>, transform_indices = @transform_0, window_bounds = array<i64: 2, 1024>}, {pipeline_mode = #tpu.pipeline_mode<synchronous>, transform_indices = @transform_1, window_bounds = array<i64: 2, 128>}, {pipeline_mode = #tpu.pipeline_mode<synchronous>, transform_indices = @transform_2, window_bounds = array<i64: 2, 1>}, {pipeline_mode = #tpu.pipeline_mode<synchronous>, transform_indices = @transform_3, window_bounds = array<i64: 2, 1>}, {transform_indices = @transform_4, window_bounds = array<i64: 1, 1024, 1024>}, {transform_indices = @transform_5, window_bounds = array<i64: 1, 128, 1024>}, {transform_indices = @transform_6, window_bounds = array<i64: 1, 2, 1024>}, {transform_indices = @transform_7, window_bounds = array<i64: 2, 1024>}]} {
    %c0 = arith.constant 0 : index
    %c0_0 = arith.constant 0 : index
    %0 = vector.load %arg1[%c0, %c0_0] : memref<2x1024xbf16, #tpu.memory_space<vmem>>, vector<2x1024xbf16>
    %c0_1 = arith.constant 0 : index
    %c0_2 = arith.constant 0 : index
    %c0_3 = arith.constant 0 : index
    %1 = vector.load %arg5[%c0_1, %c0_2, %c0_3] : memref<1x1024x1024xbf16, #tpu.memory_space<vmem>>, vector<1x1024x1024xbf16>
    %2 = vector.shape_cast %1 : vector<1x1024x1024xbf16> to vector<1024x1024xbf16>
    %cst = arith.constant dense<0.000000e+00> : vector<2x1024xf32>
    %3 = tpu.matmul %0, %2, %cst {dimension_numbers = #tpu.dot_dimension_numbers<[1], [0], [0], [1], [0, 0, 1, 1], [], []>} : vector<2x1024xbf16>, vector<1024x1024xbf16>, vector<2x1024xf32> -> vector<2x1024xf32>
    %c0_4 = arith.constant 0 : index
    %c0_5 = arith.constant 0 : index
    %4 = vector.load %arg2[%c0_4, %c0_5] : memref<2x128xbf16, #tpu.memory_space<vmem>>, vector<2x128xbf16>
    %c0_6 = arith.constant 0 : index
    %c0_7 = arith.constant 0 : index
    %c0_8 = arith.constant 0 : index
    %5 = vector.load %arg6[%c0_6, %c0_7, %c0_8] : memref<1x128x1024xbf16, #tpu.memory_space<vmem>>, vector<1x128x1024xbf16>
    %6 = vector.shape_cast %5 : vector<1x128x1024xbf16> to vector<128x1024xbf16>
    %cst_9 = arith.constant dense<0.000000e+00> : vector<2x1024xf32>
    %7 = tpu.matmul %4, %6, %cst_9 {dimension_numbers = #tpu.dot_dimension_numbers<[1], [0], [0], [1], [0, 0, 1, 1], [], []>} : vector<2x128xbf16>, vector<128x1024xbf16>, vector<2x1024xf32> -> vector<2x1024xf32>
    %c0_10 = arith.constant 0 : index
    %c0_11 = arith.constant 0 : index
    %c0_12 = arith.constant 0 : index
    %8 = vector.load %arg7[%c0_10, %c0_11, %c0_12] : memref<1x2x1024xf32, #tpu.memory_space<vmem>>, vector<1x1x1024xf32>
    %9 = vector.shape_cast %8 : vector<1x1x1024xf32> to vector<1x1024xf32>
    %c0_13 = arith.constant 0 : index
    %c1 = arith.constant 1 : index
    %c0_14 = arith.constant 0 : index
    %10 = vector.load %arg7[%c0_13, %c1, %c0_14] : memref<1x2x1024xf32, #tpu.memory_space<vmem>>, vector<1x1x1024xf32>
    %11 = vector.shape_cast %10 : vector<1x1x1024xf32> to vector<1x1024xf32>
    %12 = vector.broadcast %9 : vector<1x1024xf32> to vector<2x1024xf32>
    %13 = arith.addf %3, %12 : vector<2x1024xf32>
    %c0_15 = arith.constant 0 : index
    %c0_16 = arith.constant 0 : index
    %14 = vector.load %arg3[%c0_15, %c0_16] : memref<2x1xf32, #tpu.memory_space<vmem>>, vector<2x1xf32>
    %15 = vector.broadcast %14 : vector<2x1xf32> to vector<2x1024xf32>
    %16 = vector.broadcast %11 : vector<1x1024xf32> to vector<2x1024xf32>
    %17 = arith.mulf %15, %16 : vector<2x1024xf32>
    %18 = arith.addf %13, %17 : vector<2x1024xf32>
    %c0_17 = arith.constant 0 : index
    %c0_18 = arith.constant 0 : index
    %19 = vector.load %arg4[%c0_17, %c0_18] : memref<2x1xf32, #tpu.memory_space<vmem>>, vector<2x1xf32>
    %20 = vector.broadcast %19 : vector<2x1xf32> to vector<2x1024xf32>
    %21 = arith.mulf %20, %7 : vector<2x1024xf32>
    %22 = arith.addf %18, %21 : vector<2x1024xf32>
    %c0_19 = arith.constant 0 : index
    %c0_20 = arith.constant 0 : index
    %23 = vector.load %arg8[%c0_19, %c0_20] : memref<2x1024xf32, #tpu.memory_space<vmem>>, vector<2x1024xf32>
    tpu.vector_store %arg8[%c0_19, %c0_20], %22 {strides = array<i32>} : memref<2x1024xf32, #tpu.memory_space<vmem>>, vector<2x1024xf32>,
    return
  }
  func.func @transform_0(%arg0: i32) -> (i32, i32) {
    %c0_i32 = arith.constant 0 : i32
    %c0_i32_0 = arith.constant 0 : i32
    %c0_i32_1 = arith.constant 0 : i32
    return %c0_i32, %c0_i32_0 : i32, i32
  }
  func.func @transform_1(%arg0: i32) -> (i32, i32) {
    %c0_i32 = arith.constant 0 : i32
    %c0_i32_0 = arith.constant 0 : i32
    %c0_i32_1 = arith.constant 0 : i32
    return %c0_i32, %c0_i32_0 : i32, i32
  }
  func.func @transform_2(%arg0: i32) -> (i32, i32) {
    %c0_i32 = arith.constant 0 : i32
    %c0_i32_0 = arith.constant 0 : i32
    %c0_i32_1 = arith.constant 0 : i32
    return %c0_i32, %c0_i32_0 : i32, i32
  }
  func.func @transform_3(%arg0: i32) -> (i32, i32) {
    %c0_i32 = arith.constant 0 : i32
    %c0_i32_0 = arith.constant 0 : i32
    %c0_i32_1 = arith.constant 0 : i32
    return %c0_i32, %c0_i32_0 : i32, i32
  }
  func.func @transform_4(%arg0: i32) -> (i32, i32, i32) {
    %c0_i32 = arith.constant 0 : i32
    %c0_i32_0 = arith.constant 0 : i32
    %c0_i32_1 = arith.constant 0 : i32
    return %arg0, %c0_i32, %c0_i32_0 : i32, i32, i32
  }
  func.func @transform_5(%arg0: i32) -> (i32, i32, i32) {
    %c0_i32 = arith.constant 0 : i32
    %c0_i32_0 = arith.constant 0 : i32
    %c0_i32_1 = arith.constant 0 : i32
    return %arg0, %c0_i32, %c0_i32_0 : i32, i32, i32
  }
  func.func @transform_6(%arg0: i32) -> (i32, i32, i32) {
    %c0_i32 = arith.constant 0 : i32
    %c0_i32_0 = arith.constant 0 : i32
    %c0_i32_1 = arith.constant 0 : i32
    return %arg0, %c0_i32, %c0_i32_0 : i32, i32, i32
  }
  func.func @transform_7(%arg0: i32) -> (i32, i32) {
    %c0_i32 = arith.constant 0 : i32
    %c0_i32_0 = arith.constant 0 : i32
    return %c0_i32, %arg0 : i32, i32
  }
}

</mosaic_0001>

<llo_original>
// kernel: tpu_custom_call.1
$region0: #{tpu_custom_call.1}
  #allocation0 [shape = 'u32[]', space=smem, size = 0x4, offset = 0x4, fixed_abs, tag = 'smem constant byte address 0x4 - core index']
  #allocation1 [shape = 'u32[144,128]{1,0:T(1,128)}', space=vmem, size = 0x12000, scoped, tag = 'internal scratch']
  %s0 = inlined_call_operand.hbm [shape: bf16[2,1024], index: 0, kind: input, shape index: {}]
  %s1 = inlined_call_operand.hbm [shape: bf16[2,128], index: 1, kind: input, shape index: {}]
  %s2 = inlined_call_operand.vmem [shape: f32[2,1], index: 2, kind: input, shape index: {}]
  %s3 = inlined_call_operand.vmem [shape: f32[2,1], index: 3, kind: input, shape index: {}]
  %s4 = inlined_call_operand.hbm [shape: bf16[1,1024,1024], index: 4, kind: input, shape index: {}]
  %s5 = inlined_call_operand.hbm [shape: bf16[1,128,1024], index: 5, kind: input, shape index: {}]
  %s6 = inlined_call_operand.hbm [shape: f32[1,2,1024], index: 6, kind: input, shape index: {}]
  %s7 = inlined_call_operand.hbm [shape: f32[2,1024], index: 7, kind: output, shape index: {}]
  %s8 = sld [smem:[#allocation0]]
  $region58: #{tpu_custom_call.1} parent=0
    _
  %s10 = ssub.s32 1, %s8
  %s11 = scalar_select 0, %s10, %s8
  $region1: #{tpu_custom_call.1} parent=0
    #allocation2 [shape = 'u8[4096]{0}', space=vmem, size = 0x1000, scoped, tag = 'input window, operand 0, single buffered']
    #allocation3 [shape = 's32[1]{0}', space=sflag, size = 0x4, scoped, tag = 'scoped memory for tpu_custom_call.1']
    #allocation4 [shape = 's32[1]{0}', space=sflag, size = 0x4, scoped, tag = 'scoped memory for tpu_custom_call.1']
    #allocation5 [shape = 'u8[512]{0}', space=vmem, size = 0x400, scoped, tag = 'input window, operand 1, single buffered']
    #allocation6 [shape = 's32[1]{0}', space=sflag, size = 0x4, scoped, tag = 'scoped memory for tpu_custom_call.1']
    #allocation7 [shape = 'u8[2097152]{0}', space=vmem, size = 0x200000, scoped, tag = 'input window, operand 4, single buffered']
    #allocation8 [shape = 'u8[262144]{0}', space=vmem, size = 0x40000, scoped, tag = 'input window, operand 5, single buffered']
    #allocation9 [shape = 's32[1]{0}', space=sflag, size = 0x4, scoped, tag = 'scoped memory for tpu_custom_call.1']
    #allocation10 [shape = 'u8[8192]{0}', space=vmem, size = 0x2000, scoped, tag = 'input window, operand 6, single buffered']
    #allocation11 [shape = 'u8[8192]{0}', space=vmem, size = 0x2000, scoped, tag = 'output window, operand 0, single buffered']
    %12 = vsyncpa [#allocation3], 0
    %13 = vsyncpa [#allocation6], 0
    %14 = vsyncpa [#allocation9], 0
    %15 = vsyncpa [#allocation4], 0
    // Predicated region
    $region2: #{tpu_custom_call.1} parent=1 // pred_check
      _
    $region3: #{tpu_custom_call.1} parent=1 // pred_check_branch
      %17 = sbr.rel (0) target = $region5
    $region4: #{tpu_custom_call.1} parent=1 // pred_region
      %s19 = ssub.s32 128, 128
      %20 = vsyncadd [#allocation3], %s19
      %s22 = sshll.u32 [#allocation2], 4
      %s23 = int_to_ptr.vmem [resolvable:$true] %s22
      %25 = dma.hbm_to_vmem [thread:$0]  %s0, 128, %s23, [#allocation3]
    $region5: #{tpu_custom_call.1} parent=1 // pred_fallthru
      _
    // Predicated region
    $region6: #{tpu_custom_call.1} parent=1 // pred_check
      _
    $region7: #{tpu_custom_call.1} parent=1 // pred_check_branch
      %27 = sbr.rel (0) target = $region9
    $region8: #{tpu_custom_call.1} parent=1 // pred_region
      %s29 = ssub.s32 16, 16
      %30 = vsyncadd [#allocation6], %s29
      %s32 = sshll.u32 [#allocation5], 4
      %s33 = int_to_ptr.vmem [resolvable:$true] %s32
      %35 = dma.hbm_to_vmem [thread:$0]  %s1, 16, %s33, [#allocation6]
    $region9: #{tpu_custom_call.1} parent=1 // pred_fallthru
      _
    // Predicated region
    $region10: #{tpu_custom_call.1} parent=1 // pred_check
      _
    $region11: #{tpu_custom_call.1} parent=1 // pred_check_branch
      %37 = sbr.rel (0) target = $region13
    $region12: #{tpu_custom_call.1} parent=1 // pred_region
      _
    $region13: #{tpu_custom_call.1} parent=1 // pred_fallthru
      _
    // Predicated region
    $region14: #{tpu_custom_call.1} parent=1 // pred_check
      _
    $region15: #{tpu_custom_call.1} parent=1 // pred_check_branch
      %39 = sbr.rel (0) target = $region17
    $region16: #{tpu_custom_call.1} parent=1 // pred_region
      _
    $region17: #{tpu_custom_call.1} parent=1 // pred_fallthru
      _
    // Predicated region
    $region18: #{tpu_custom_call.1} parent=1 // pred_check
      _
    $region19: #{tpu_custom_call.1} parent=1 // pred_check_branch
      %41 = sbr.rel (0) target = $region21
    $region20: #{tpu_custom_call.1} parent=1 // pred_region
      %s43 = ssub.s32 65536, 65536
      %44 = vsyncadd [#allocation6], %s43
      %s45 = sshll.u32 [#allocation7], 4
      %s46 = int_to_ptr.vmem [resolvable:$true] %s45
      %51 = dma.hbm_to_vmem [thread:$0]  %s4, 65536, %s46, [#allocation6], 512, 512, 32
    $region21: #{tpu_custom_call.1} parent=1 // pred_fallthru
      _
    // Predicated region
    $region22: #{tpu_custom_call.1} parent=1 // pred_check
      _
    $region23: #{tpu_custom_call.1} parent=1 // pred_check_branch
      %53 = sbr.rel (0) target = $region25
    $region24: #{tpu_custom_call.1} parent=1 // pred_region
      %s55 = ssub.s32 8192, 8192
      %56 = vsyncadd [#allocation9], %s55
      %s57 = sshll.u32 [#allocation8], 4
      %s58 = int_to_ptr.vmem [resolvable:$true] %s57
      %63 = dma.hbm_to_vmem [thread:$0]  %s5, 8192, %s58, [#allocation9], 512, 512, 32
    $region25: #{tpu_custom_call.1} parent=1 // pred_fallthru
      _
    // Predicated region
    $region26: #{tpu_custom_call.1} parent=1 // pred_check
      _
    $region27: #{tpu_custom_call.1} parent=1 // pred_check_branch
      %65 = sbr.rel (0) target = $region29
    $region28: #{tpu_custom_call.1} parent=1 // pred_region
      %s67 = ssub.s32 256, 256
      %68 = vsyncadd [#allocation9], %s67
      %s70 = sshll.u32 [#allocation10], 4
      %s71 = int_to_ptr.vmem [resolvable:$true] %s70
      %73 = dma.hbm_to_vmem [thread:$0]  %s6, 256, %s71, [#allocation9]
    $region29: #{tpu_custom_call.1} parent=1 // pred_fallthru
      _
    // Predicated region
    $region30: #{tpu_custom_call.1} parent=1 // pred_check
      _
    $region31: #{tpu_custom_call.1} parent=1 // pred_check_branch
      %75 = sbr.rel (0) target = $region33
    $region32: #{tpu_custom_call.1} parent=1 // pred_region
      %76 = dma.done [#allocation3], 128
    $region33: #{tpu_custom_call.1} parent=1 // pred_fallthru
      _
    // Predicated region
    $region34: #{tpu_custom_call.1} parent=1 // pred_check
      _
    $region35: #{tpu_custom_call.1} parent=1 // pred_check_branch
      %78 = sbr.rel (0) target = $region37
    $region36: #{tpu_custom_call.1} parent=1 // pred_region
      %79 = dma.done [#allocation6], 16
    $region37: #{tpu_custom_call.1} parent=1 // pred_fallthru
      _
    // Predicated region
    $region38: #{tpu_custom_call.1} parent=1 // pred_check
      _
    $region39: #{tpu_custom_call.1} parent=1 // pred_check_branch
      %81 = sbr.rel (0) target = $region41
    $region40: #{tpu_custom_call.1} parent=1 // pred_region
      %82 = dma.done [#allocation6], 65536
    $region41: #{tpu_custom_call.1} parent=1 // pred_fallthru
      _
    // Predicated region
    $region42: #{tpu_custom_call.1} parent=1 // pred_check
      _
    $region43: #{tpu_custom_call.1} parent=1 // pred_check_branch
      %84 = sbr.rel (0) target = $region45
    $region44: #{tpu_custom_call.1} parent=1 // pred_region
      %85 = dma.done [#allocation9], 8192
    $region45: #{tpu_custom_call.1} parent=1 // pred_fallthru
      _
    // Predicated region
    $region46: #{tpu_custom_call.1} parent=1 // pred_check
      _
    $region47: #{tpu_custom_call.1} parent=1 // pred_check_branch
      %87 = sbr.rel (0) target = $region49
    $region48: #{tpu_custom_call.1} parent=1 // pred_region
      %88 = dma.done [#allocation9], 256
    $region49: #{tpu_custom_call.1} parent=1 // pred_fallthru
      _
    %v90 = vld [vmem:[#allocation2] sm:$0xff]
    %v91 = vld [vmem:[#allocation7] sm:$0xff]
    %v92 = vld [vmem:[#allocation7 + $0x8] sm:$0xff]
    %v93 = vld [vmem:[#allocation7 + $0x10] sm:$0xff]
    %v94 = vld [vmem:[#allocation7 + $0x18] sm:$0xff]
    %v95 = vld [vmem:[#allocation7 + $0x20] sm:$0xff]
    %v96 = vld [vmem:[#allocation7 + $0x28] sm:$0xff]
    %v97 = vld [vmem:[#allocation7 + $0x30] sm:$0xff]
    %v98 = vld [vmem:[#allocation7 + $0x38] sm:$0xff]
    %v99 = vld [vmem:[#allocation7 + $0x40] sm:$0xff]
    %v100 = vld [vmem:[#allocation7 + $0x48] sm:$0xff]
    %v101 = vld [vmem:[#allocation7 + $0x50] sm:$0xff]
    %v102 = vld [vmem:[#allocation7 + $0x58] sm:$0xff]
    %v103 = vld [vmem:[#allocation7 + $0x60] sm:$0xff]
    %v104 = vld [vmem:[#allocation7 + $0x68] sm:$0xff]
    %v105 = vld [vmem:[#allocation7 + $0x70] sm:$0xff]
    %v106 = vld [vmem:[#allocation7 + $0x78] sm:$0xff]
    %v107 = vld [vmem:[#allocation7 + $0x80] sm:$0xff]
    %v108 = vld [vmem:[#allocation7 + $0x88] sm:$0xff]
    %v109 = vld [vmem:[#allocation7 + $0x90] sm:$0xff]
    %v110 = vld [vmem:[#allocation7 + $0x98] sm:$0xff]
    %v111 = vld [vmem:[#allocation7 + $0xa0] sm:$0xff]
    %v112 = vld [vmem:[#allocation7 + $0xa8] sm:$0xff]
    %v113 = vld [vmem:[#allocation7 + $0xb0] sm:$0xff]
    %v114 = vld [vmem:[#allocation7 + $0xb8] sm:$0xff]
    %v115 = vld [vmem:[#allocation7 + $0xc0] sm:$0xff]
    %v116 = vld [vmem:[#allocation7 + $0xc8] sm:$0xff]
    %v117 = vld [vmem:[#allocation7 + $0xd0] sm:$0xff]
    %v118 = vld [vmem:[#allocation7 + $0xd8] sm:$0xff]
    %v119 = vld [vmem:[#allocation7 + $0xe0] sm:$0xff]
    %v120 = vld [vmem:[#allocation7 + $0xe8] sm:$0xff]
    %v121 = vld [vmem:[#allocation7 + $0xf0] sm:$0xff]
    %v122 = vld [vmem:[#allocation7 + $0xf8] sm:$0xff]
    %v123 = vld [vmem:[#allocation7 + $0x100] sm:$0xff]
    %v124 = vld [vmem:[#allocation7 + $0x108] sm:$0xff]
    %v125 = vld [vmem:[#allocation7 + $0x110] sm:$0xff]
    %v126 = vld [vmem:[#allocation7 + $0x118] sm:$0xff]
    %v127 = vld [vmem:[#allocation7 + $0x120] sm:$0xff]
    %v128 = vld [vmem:[#allocation7 + $0x128] sm:$0xff]
    %v129 = vld [vmem:[#allocation7 + $0x130] sm:$0xff]
    %v130 = vld [vmem:[#allocation7 + $0x138] sm:$0xff]
    %v131 = vld [vmem:[#allocation7 + $0x140] sm:$0xff]
    %v132 = vld [vmem:[#allocation7 + $0x148] sm:$0xff]
    %v133 = vld [vmem:[#allocation7 + $0x150] sm:$0xff]
    %v134 = vld [vmem:[#allocation7 + $0x158] sm:$0xff]
    %v135 = vld [vmem:[#allocation7 + $0x160] sm:$0xff]
    %v136 = vld [vmem:[#allocation7 + $0x168] sm:$0xff]
    %v137 = vld [vmem:[#allocation7 + $0x170] sm:$0xff]
    %v138 = vld [vmem:[#allocation7 + $0x178] sm:$0xff]
    %v139 = vld [vmem:[#allocation7 + $0x180] sm:$0xff]
    %v140 = vld [vmem:[#allocation7 + $0x188] sm:$0xff]
    %v141 = vld [vmem:[#allocation7 + $0x190] sm:$0xff]
    %v142 = vld [vmem:[#allocation7 + $0x198] sm:$0xff]
    %v143 = vld [vmem:[#allocation7 + $0x1a0] sm:$0xff]
    %v144 = vld [vmem:[#allocation7 + $0x1a8] sm:$0xff]
    %v145 = vld [vmem:[#allocation7 + $0x1b0] sm:$0xff]
    %v146 = vld [vmem:[#allocation7 + $0x1b8] sm:$0xff]
    %v147 = vld [vmem:[#allocation7 + $0x1c0] sm:$0xff]
    %v148 = vld [vmem:[#allocation7 + $0x1c8] sm:$0xff]
    %v149 = vld [vmem:[#allocation7 + $0x1d0] sm:$0xff]
    %v150 = vld [vmem:[#allocation7 + $0x1d8] sm:$0xff]
    %v151 = vld [vmem:[#allocation7 + $0x1e0] sm:$0xff]
    %v152 = vld [vmem:[#allocation7 + $0x1e8] sm:$0xff]
    %v153 = vld [vmem:[#allocation7 + $0x1f0] sm:$0xff]
    %v154 = vld [vmem:[#allocation7 + $0x1f8] sm:$0xff]
    %v155 = vld [vmem:[#allocation7 + $0x200] sm:$0xff]
    %v156 = vld [vmem:[#allocation7 + $0x208] sm:$0xff]
    %v157 = vld [vmem:[#allocation7 + $0x210] sm:$0xff]
    %v158 = vld [vmem:[#allocation7 + $0x218] sm:$0xff]
    %v159 = vld [vmem:[#allocation7 + $0x220] sm:$0xff]
    %v160 = vld [vmem:[#allocation7 + $0x228] sm:$0xff]
    %v161 = vld [vmem:[#allocation7 + $0x230] sm:$0xff]
    %v162 = vld [vmem:[#allocation7 + $0x238] sm:$0xff]
    %v163 = vld [vmem:[#allocation7 + $0x240] sm:$0xff]
    %v164 = vld [vmem:[#allocation7 + $0x248] sm:$0xff]
    %v165 = vld [vmem:[#allocation7 + $0x250] sm:$0xff]
    %v166 = vld [vmem:[#allocation7 + $0x258] sm:$0xff]
    %v167 = vld [vmem:[#allocation7 + $0x260] sm:$0xff]
    %v168 = vld [vmem:[#allocation7 + $0x268] sm:$0xff]
    %v169 = vld [vmem:[#allocation7 + $0x270] sm:$0xff]
    %v170 = vld [vmem:[#allocation7 + $0x278] sm:$0xff]
    %v171 = vld [vmem:[#allocation7 + $0x280] sm:$0xff]
    %v172 = vld [vmem:[#allocation7 + $0x288] sm:$0xff]
    %v173 = vld [vmem:[#allocation7 + $0x290] sm:$0xff]
    %v174 = vld [vmem:[#allocation7 + $0x298] sm:$0xff]
    %v175 = vld [vmem:[#allocation7 + $0x2a0] sm:$0xff]
    %v176 = vld [vmem:[#allocation7 + $0x2a8] sm:$0xff]
    %v177 = vld [vmem:[#allocation7 + $0x2b0] sm:$0xff]
    %v178 = vld [vmem:[#allocation7 + $0x2b8] sm:$0xff]
    %v179 = vld [vmem:[#allocation7 + $0x2c0] sm:$0xff]
    %v180 = vld [vmem:[#allocation7 + $0x2c8] sm:$0xff]
    %v181 = vld [vmem:[#allocation7 + $0x2d0] sm:$0xff]
    %v182 = vld [vmem:[#allocation7 + $0x2d8] sm:$0xff]
    %v183 = vld [vmem:[#allocation7 + $0x2e0] sm:$0xff]
    %v184 = vld [vmem:[#allocation7 + $0x2e8] sm:$0xff]
    %v185 = vld [vmem:[#allocation7 + $0x2f0] sm:$0xff]
    %v186 = vld [vmem:[#allocation7 + $0x2f8] sm:$0xff]
    %v187 = vld [vmem:[#allocation7 + $0x300] sm:$0xff]
    %v188 = vld [vmem:[#allocation7 + $0x308] sm:$0xff]
    %v189 = vld [vmem:[#allocation7 + $0x310] sm:$0xff]
    %v190 = vld [vmem:[#allocation7 + $0x318] sm:$0xff]
    %v191 = vld [vmem:[#allocation7 + $0x320] sm:$0xff]
    %v192 = vld [vmem:[#allocation7 + $0x328] sm:$0xff]
    %v193 = vld [vmem:[#allocation7 + $0x330] sm:$0xff]
    %v194 = vld [vmem:[#allocation7 + $0x338] sm:$0xff]
    %v195 = vld [vmem:[#allocation7 + $0x340] sm:$0xff]
    %v196 = vld [vmem:[#allocation7 + $0x348] sm:$0xff]
    %v197 = vld [vmem:[#allocation7 + $0x350] sm:$0xff]
    %v198 = vld [vmem:[#allocation7 + $0x358] sm:$0xff]
    %v199 = vld [vmem:[#allocation7 + $0x360] sm:$0xff]
    %v200 = vld [vmem:[#allocation7 + $0x368] sm:$0xff]
    %v201 = vld [vmem:[#allocation7 + $0x370] sm:$0xff]
    %v202 = vld [vmem:[#allocation7 + $0x378] sm:$0xff]
    %v203 = vld [vmem:[#allocation7 + $0x380] sm:$0xff]
    %v204 = vld [vmem:[#allocation7 + $0x388] sm:$0xff]
    %v205 = vld [vmem:[#allocation7 + $0x390] sm:$0xff]
    %v206 = vld [vmem:[#allocation7 + $0x398] sm:$0xff]
    %v207 = vld [vmem:[#allocation7 + $0x3a0] sm:$0xff]
    %v208 = vld [vmem:[#allocation7 + $0x3a8] sm:$0xff]
    %v209 = vld [vmem:[#allocation7 + $0x3b0] sm:$0xff]
    %v210 = vld [vmem:[#allocation7 + $0x3b8] sm:$0xff]
    %v211 = vld [vmem:[#allocation7 + $0x3c0] sm:$0xff]
    %v212 = vld [vmem:[#allocation7 + $0x3c8] sm:$0xff]
    %v213 = vld [vmem:[#allocation7 + $0x3d0] sm:$0xff]
    %v214 = vld [vmem:[#allocation7 + $0x3d8] sm:$0xff]
    %v215 = vld [vmem:[#allocation7 + $0x3e0] sm:$0xff]
    %v216 = vld [vmem:[#allocation7 + $0x3e8] sm:$0xff]
    %v217 = vld [vmem:[#allocation7 + $0x3f0] sm:$0xff]
    %v218 = vld [vmem:[#allocation7 + $0x3f8] sm:$0xff]
    %v219 = vld [vmem:[#allocation7 + $0x400] sm:$0xff]
    %v220 = vld [vmem:[#allocation7 + $0x408] sm:$0xff]
    %v221 = vld [vmem:[#allocation7 + $0x410] sm:$0xff]
    %v222 = vld [vmem:[#allocation7 + $0x418] sm:$0xff]
    %v223 = vld [vmem:[#allocation7 + $0x420] sm:$0xff]
    %v224 = vld [vmem:[#allocation7 + $0x428] sm:$0xff]
    %v225 = vld [vmem:[#allocation7 + $0x430] sm:$0xff]
    %v226 = vld [vmem:[#allocation7 + $0x438] sm:$0xff]
    %v227 = vld [vmem:[#allocation7 + $0x440] sm:$0xff]
    %v228 = vld [vmem:[#allocation7 + $0x448] sm:$0xff]
    %v229 = vld [vmem:[#allocation7 + $0x450] sm:$0xff]
    %v230 = vld [vmem:[#allocation7 + $0x458] sm:$0xff]
    %v231 = vld [vmem:[#allocation7 + $0x460] sm:$0xff]
    %v232 = vld [vmem:[#allocation7 + $0x468] sm:$0xff]
    %v233 = vld [vmem:[#allocation7 + $0x470] sm:$0xff]
    %v234 = vld [vmem:[#allocation7 + $0x478] sm:$0xff]
    %v235 = vld [vmem:[#allocation7 + $0x480] sm:$0xff]
    %v236 = vld [vmem:[#allocation7 + $0x488] sm:$0xff]
    %v237 = vld [vmem:[#allocation7 + $0x490] sm:$0xff]
    %v238 = vld [vmem:[#allocation7 + $0x498] sm:$0xff]
    %v239 = vld [vmem:[#allocation7 + $0x4a0] sm:$0xff]
    %v240 = vld [vmem:[#allocation7 + $0x4a8] sm:$0xff]
    %v241 = vld [vmem:[#allocation7 + $0x4b0] sm:$0xff]
    %v242 = vld [vmem:[#allocation7 + $0x4b8] sm:$0xff]
    %v243 = vld [vmem:[#allocation7 + $0x4c0] sm:$0xff]
    %v244 = vld [vmem:[#allocation7 + $0x4c8] sm:$0xff]
    %v245 = vld [vmem:[#allocation7 + $0x4d0] sm:$0xff]
    %v246 = vld [vmem:[#allocation7 + $0x4d8] sm:$0xff]
    %v247 = vld [vmem:[#allocation7 + $0x4e0] sm:$0xff]
    %v248 = vld [vmem:[#allocation7 + $0x4e8] sm:$0xff]
    %v249 = vld [vmem:[#allocation7 + $0x4f0] sm:$0xff]
    %v250 = vld [vmem:[#allocation7 + $0x4f8] sm:$0xff]
    %v251 = vld [vmem:[#allocation7 + $0x500] sm:$0xff]
    %v252 = vld [vmem:[#allocation7 + $0x508] sm:$0xff]
    %v253 = vld [vmem:[#allocation7 + $0x510] sm:$0xff]
    %v254 = vld [vmem:[#allocation7 + $0x518] sm:$0xff]
    %v255 = vld [vmem:[#allocation7 + $0x520] sm:$0xff]
    %v256 = vld [vmem:[#allocation7 + $0x528] sm:$0xff]
    %v257 = vld [vmem:[#allocation7 + $0x530] sm:$0xff]
    %v258 = vld [vmem:[#allocation7 + $0x538] sm:$0xff]
    %v259 = vld [vmem:[#allocation7 + $0x540] sm:$0xff]
    %v260 = vld [vmem:[#allocation7 + $0x548] sm:$0xff]
    %v261 = vld [vmem:[#allocation7 + $0x550] sm:$0xff]
    %v262 = vld [vmem:[#allocation7 + $0x558] sm:$0xff]
    %v263 = vld [vmem:[#allocation7 + $0x560] sm:$0xff]
    %v264 = vld [vmem:[#allocation7 + $0x568] sm:$0xff]
    %v265 = vld [vmem:[#allocation7 + $0x570] sm:$0xff]
    %v266 = vld [vmem:[#allocation7 + $0x578] sm:$0xff]
    %v267 = vld [vmem:[#allocation7 + $0x580] sm:$0xff]
    %v268 = vld [vmem:[#allocation7 + $0x588] sm:$0xff]
    %v269 = vld [vmem:[#allocation7 + $0x590] sm:$0xff]
    %v270 = vld [vmem:[#allocation7 + $0x598] sm:$0xff]
    %v271 = vld [vmem:[#allocation7 + $0x5a0] sm:$0xff]
    %v272 = vld [vmem:[#allocation7 + $0x5a8] sm:$0xff]
    %v273 = vld [vmem:[#allocation7 + $0x5b0] sm:$0xff]
    %v274 = vld [vmem:[#allocation7 + $0x5b8] sm:$0xff]
    %v275 = vld [vmem:[#allocation7 + $0x5c0] sm:$0xff]
    %v276 = vld [vmem:[#allocation7 + $0x5c8] sm:$0xff]
    %v277 = vld [vmem:[#allocation7 + $0x5d0] sm:$0xff]
    %v278 = vld [vmem:[#allocation7 + $0x5d8] sm:$0xff]
    %v279 = vld [vmem:[#allocation7 + $0x5e0] sm:$0xff]
    %v280 = vld [vmem:[#allocation7 + $0x5e8] sm:$0xff]
    %v281 = vld [vmem:[#allocation7 + $0x5f0] sm:$0xff]
    %v282 = vld [vmem:[#allocation7 + $0x5f8] sm:$0xff]
    %v283 = vld [vmem:[#allocation7 + $0x600] sm:$0xff]
    %v284 = vld [vmem:[#allocation7 + $0x608] sm:$0xff]
    %v285 = vld [vmem:[#allocation7 + $0x610] sm:$0xff]
    %v286 = vld [vmem:[#allocation7 + $0x618] sm:$0xff]
    %v287 = vld [vmem:[#allocation7 + $0x620] sm:$0xff]
    %v288 = vld [vmem:[#allocation7 + $0x628] sm:$0xff]
    %v289 = vld [vmem:[#allocation7 + $0x630] sm:$0xff]
    %v290 = vld [vmem:[#allocation7 + $0x638] sm:$0xff]
    %v291 = vld [vmem:[#allocation7 + $0x640] sm:$0xff]
    %v292 = vld [vmem:[#allocation7 + $0x648] sm:$0xff]
    %v293 = vld [vmem:[#allocation7 + $0x650] sm:$0xff]
    %v294 = vld [vmem:[#allocation7 + $0x658] sm:$0xff]
    %v295 = vld [vmem:[#allocation7 + $0x660] sm:$0xff]
    %v296 = vld [vmem:[#allocation7 + $0x668] sm:$0xff]
    %v297 = vld [vmem:[#allocation7 + $0x670] sm:$0xff]
    %v298 = vld [vmem:[#allocation7 + $0x678] sm:$0xff]
    %v299 = vld [vmem:[#allocation7 + $0x680] sm:$0xff]
    %v300 = vld [vmem:[#allocation7 + $0x688] sm:$0xff]
    %v301 = vld [vmem:[#allocation7 + $0x690] sm:$0xff]
    %v302 = vld [vmem:[#allocation7 + $0x698] sm:$0xff]
    %v303 = vld [vmem:[#allocation7 + $0x6a0] sm:$0xff]
    %v304 = vld [vmem:[#allocation7 + $0x6a8] sm:$0xff]
    %v305 = vld [vmem:[#allocation7 + $0x6b0] sm:$0xff]
    %v306 = vld [vmem:[#allocation7 + $0x6b8] sm:$0xff]
    %v307 = vld [vmem:[#allocation7 + $0x6c0] sm:$0xff]
    %v308 = vld [vmem:[#allocation7 + $0x6c8] sm:$0xff]
    %v309 = vld [vmem:[#allocation7 + $0x6d0] sm:$0xff]
    %v310 = vld [vmem:[#allocation7 + $0x6d8] sm:$0xff]
    %v311 = vld [vmem:[#allocation7 + $0x6e0] sm:$0xff]
    %v312 = vld [vmem:[#allocation7 + $0x6e8] sm:$0xff]
    %v313 = vld [vmem:[#allocation7 + $0x6f0] sm:$0xff]
    %v314 = vld [vmem:[#allocation7 + $0x6f8] sm:$0xff]
    %v315 = vld [vmem:[#allocation7 + $0x700] sm:$0xff]
    %v316 = vld [vmem:[#allocation7 + $0x708] sm:$0xff]
    %v317 = vld [vmem:[#allocation7 + $0x710] sm:$0xff]
    %v318 = vld [vmem:[#allocation7 + $0x718] sm:$0xff]
    %v319 = vld [vmem:[#allocation7 + $0x720] sm:$0xff]
    %v320 = vld [vmem:[#allocation7 + $0x728] sm:$0xff]
    %v321 = vld [vmem:[#allocation7 + $0x730] sm:$0xff]
    %v322 = vld [vmem:[#allocation7 + $0x738] sm:$0xff]
    %v323 = vld [vmem:[#allocation7 + $0x740] sm:$0xff]
    %v324 = vld [vmem:[#allocation7 + $0x748] sm:$0xff]
    %v325 = vld [vmem:[#allocation7 + $0x750] sm:$0xff]
    %v326 = vld [vmem:[#allocation7 + $0x758] sm:$0xff]
    %v327 = vld [vmem:[#allocation7 + $0x760] sm:$0xff]
    %v328 = vld [vmem:[#allocation7 + $0x768] sm:$0xff]
    %v329 = vld [vmem:[#allocation7 + $0x770] sm:$0xff]
    %v330 = vld [vmem:[#allocation7 + $0x778] sm:$0xff]
    %v331 = vld [vmem:[#allocation7 + $0x780] sm:$0xff]
    %v332 = vld [vmem:[#allocation7 + $0x788] sm:$0xff]
    %v333 = vld [vmem:[#allocation7 + $0x790] sm:$0xff]
    %v334 = vld [vmem:[#allocation7 + $0x798] sm:$0xff]
    %v335 = vld [vmem:[#allocation7 + $0x7a0] sm:$0xff]
    %v336 = vld [vmem:[#allocation7 + $0x7a8] sm:$0xff]
    %v337 = vld [vmem:[#allocation7 + $0x7b0] sm:$0xff]
    %v338 = vld [vmem:[#allocation7 + $0x7b8] sm:$0xff]
    %v339 = vld [vmem:[#allocation7 + $0x7c0] sm:$0xff]
    %v340 = vld [vmem:[#allocation7 + $0x7c8] sm:$0xff]
    %v341 = vld [vmem:[#allocation7 + $0x7d0] sm:$0xff]
    %v342 = vld [vmem:[#allocation7 + $0x7d8] sm:$0xff]
    %v343 = vld [vmem:[#allocation7 + $0x7e0] sm:$0xff]
    %v344 = vld [vmem:[#allocation7 + $0x7e8] sm:$0xff]
    %v345 = vld [vmem:[#allocation7 + $0x7f0] sm:$0xff]
    %v346 = vld [vmem:[#allocation7 + $0x7f8] sm:$0xff]
    %v347 = vld [vmem:[#allocation7 + $0x800] sm:$0xff]
    %v348 = vld [vmem:[#allocation7 + $0x808] sm:$0xff]
    %v349 = vld [vmem:[#allocation7 + $0x810] sm:$0xff]
    %v350 = vld [vmem:[#allocation7 + $0x818] sm:$0xff]
    %v351 = vld [vmem:[#allocation7 + $0x820] sm:$0xff]
    %v352 = vld [vmem:[#allocation7 + $0x828] sm:$0xff]
    %v353 = vld [vmem:[#allocation7 + $0x830] sm:$0xff]
    %v354 = vld [vmem:[#allocation7 + $0x838] sm:$0xff]
    %v355 = vld [vmem:[#allocation7 + $0x840] sm:$0xff]
    %v356 = vld [vmem:[#allocation7 + $0x848] sm:$0xff]
    %v357 = vld [vmem:[#allocation7 + $0x850] sm:$0xff]
    %v358 = vld [vmem:[#allocation7 + $0x858] sm:$0xff]
    %v359 = vld [vmem:[#allocation7 + $0x860] sm:$0xff]
    %v360 = vld [vmem:[#allocation7 + $0x868] sm:$0xff]
    %v361 = vld [vmem:[#allocation7 + $0x870] sm:$0xff]
    %v362 = vld [vmem:[#allocation7 + $0x878] sm:$0xff]
    %v363 = vld [vmem:[#allocation7 + $0x880] sm:$0xff]
    %v364 = vld [vmem:[#allocation7 + $0x888] sm:$0xff]
    %v365 = vld [vmem:[#allocation7 + $0x890] sm:$0xff]
    %v366 = vld [vmem:[#allocation7 + $0x898] sm:$0xff]
    %v367 = vld [vmem:[#allocation7 + $0x8a0] sm:$0xff]
    %v368 = vld [vmem:[#allocation7 + $0x8a8] sm:$0xff]
    %v369 = vld [vmem:[#allocation7 + $0x8b0] sm:$0xff]
    %v370 = vld [vmem:[#allocation7 + $0x8b8] sm:$0xff]
    %v371 = vld [vmem:[#allocation7 + $0x8c0] sm:$0xff]
    %v372 = vld [vmem:[#allocation7 + $0x8c8] sm:$0xff]
    %v373 = vld [vmem:[#allocation7 + $0x8d0] sm:$0xff]
    %v374 = vld [vmem:[#allocation7 + $0x8d8] sm:$0xff]
    %v375 = vld [vmem:[#allocation7 + $0x8e0] sm:$0xff]
    %v376 = vld [vmem:[#allocation7 + $0x8e8] sm:$0xff]
    %v377 = vld [vmem:[#allocation7 + $0x8f0] sm:$0xff]
    %v378 = vld [vmem:[#allocation7 + $0x8f8] sm:$0xff]
    %v379 = vld [vmem:[#allocation7 + $0x900] sm:$0xff]
    %v380 = vld [vmem:[#allocation7 + $0x908] sm:$0xff]
    %v381 = vld [vmem:[#allocation7 + $0x910] sm:$0xff]
    %v382 = vld [vmem:[#allocation7 + $0x918] sm:$0xff]
    %v383 = vld [vmem:[#allocation7 + $0x920] sm:$0xff]
    %v384 = vld [vmem:[#allocation7 + $0x928] sm:$0xff]
    %v385 = vld [vmem:[#allocation7 + $0x930] sm:$0xff]
    %v386 = vld [vmem:[#allocation7 + $0x938] sm:$0xff]
    %v387 = vld [vmem:[#allocation7 + $0x940] sm:$0xff]
    %v388 = vld [vmem:[#allocation7 + $0x948] sm:$0xff]
    %v389 = vld [vmem:[#allocation7 + $0x950] sm:$0xff]
    %v390 = vld [vmem:[#allocation7 + $0x958] sm:$0xff]
    %v391 = vld [vmem:[#allocation7 + $0x960] sm:$0xff]
    %v392 = vld [vmem:[#allocation7 + $0x968] sm:$0xff]
    %v393 = vld [vmem:[#allocation7 + $0x970] sm:$0xff]
    %v394 = vld [vmem:[#allocation7 + $0x978] sm:$0xff]
    %v395 = vld [vmem:[#allocation7 + $0x980] sm:$0xff]
    %v396 = vld [vmem:[#allocation7 + $0x988] sm:$0xff]
    %v397 = vld [vmem:[#allocation7 + $0x990] sm:$0xff]
    %v398 = vld [vmem:[#allocation7 + $0x998] sm:$0xff]
    %v399 = vld [vmem:[#allocation7 + $0x9a0] sm:$0xff]
    %v400 = vld [vmem:[#allocation7 + $0x9a8] sm:$0xff]
    %v401 = vld [vmem:[#allocation7 + $0x9b0] sm:$0xff]
    %v402 = vld [vmem:[#allocation7 + $0x9b8] sm:$0xff]
    %v403 = vld [vmem:[#allocation7 + $0x9c0] sm:$0xff]
    %v404 = vld [vmem:[#allocation7 + $0x9c8] sm:$0xff]
    %v405 = vld [vmem:[#allocation7 + $0x9d0] sm:$0xff]
    %v406 = vld [vmem:[#allocation7 + $0x9d8] sm:$0xff]
    %v407 = vld [vmem:[#allocation7 + $0x9e0] sm:$0xff]
    %v408 = vld [vmem:[#allocation7 + $0x9e8] sm:$0xff]
    %v409 = vld [vmem:[#allocation7 + $0x9f0] sm:$0xff]
    %v410 = vld [vmem:[#allocation7 + $0x9f8] sm:$0xff]
    %v411 = vld [vmem:[#allocation7 + $0xa00] sm:$0xff]
    %v412 = vld [vmem:[#allocation7 + $0xa08] sm:$0xff]
    %v413 = vld [vmem:[#allocation7 + $0xa10] sm:$0xff]
    %v414 = vld [vmem:[#allocation7 + $0xa18] sm:$0xff]
    %v415 = vld [vmem:[#allocation7 + $0xa20] sm:$0xff]
    %v416 = vld [vmem:[#allocation7 + $0xa28] sm:$0xff]
    %v417 = vld [vmem:[#allocation7 + $0xa30] sm:$0xff]
    %v418 = vld [vmem:[#allocation7 + $0xa38] sm:$0xff]
    %v419 = vld [vmem:[#allocation7 + $0xa40] sm:$0xff]
    %v420 = vld [vmem:[#allocation7 + $0xa48] sm:$0xff]
    %v421 = vld [vmem:[#allocation7 + $0xa50] sm:$0xff]
    %v422 = vld [vmem:[#allocation7 + $0xa58] sm:$0xff]
    %v423 = vld [vmem:[#allocation7 + $0xa60] sm:$0xff]
    %v424 = vld [vmem:[#allocation7 + $0xa68] sm:$0xff]
    %v425 = vld [vmem:[#allocation7 + $0xa70] sm:$0xff]
    %v426 = vld [vmem:[#allocation7 + $0xa78] sm:$0xff]
    %v427 = vld [vmem:[#allocation7 + $0xa80] sm:$0xff]
    %v428 = vld [vmem:[#allocation7 + $0xa88] sm:$0xff]
    %v429 = vld [vmem:[#allocation7 + $0xa90] sm:$0xff]
    %v430 = vld [vmem:[#allocation7 + $0xa98] sm:$0xff]
    %v431 = vld [vmem:[#allocation7 + $0xaa0] sm:$0xff]
    %v432 = vld [vmem:[#allocation7 + $0xaa8] sm:$0xff]
    %v433 = vld [vmem:[#allocation7 + $0xab0] sm:$0xff]
    %v434 = vld [vmem:[#allocation7 + $0xab8] sm:$0xff]
    %v435 = vld [vmem:[#allocation7 + $0xac0] sm:$0xff]
    %v436 = vld [vmem:[#allocation7 + $0xac8] sm:$0xff]
    %v437 = vld [vmem:[#allocation7 + $0xad0] sm:$0xff]
    %v438 = vld [vmem:[#allocation7 + $0xad8] sm:$0xff]
    %v439 = vld [vmem:[#allocation7 + $0xae0] sm:$0xff]
    %v440 = vld [vmem:[#allocation7 + $0xae8] sm:$0xff]
    %v441 = vld [vmem:[#allocation7 + $0xaf0] sm:$0xff]
    %v442 = vld [vmem:[#allocation7 + $0xaf8] sm:$0xff]
    %v443 = vld [vmem:[#allocation7 + $0xb00] sm:$0xff]
    %v444 = vld [vmem:[#allocation7 + $0xb08] sm:$0xff]
    %v445 = vld [vmem:[#allocation7 + $0xb10] sm:$0xff]
    %v446 = vld [vmem:[#allocation7 + $0xb18] sm:$0xff]
    %v447 = vld [vmem:[#allocation7 + $0xb20] sm:$0xff]
    %v448 = vld [vmem:[#allocation7 + $0xb28] sm:$0xff]
    %v449 = vld [vmem:[#allocation7 + $0xb30] sm:$0xff]
    %v450 = vld [vmem:[#allocation7 + $0xb38] sm:$0xff]
    %v451 = vld [vmem:[#allocation7 + $0xb40] sm:$0xff]
    %v452 = vld [vmem:[#allocation7 + $0xb48] sm:$0xff]
    %v453 = vld [vmem:[#allocation7 + $0xb50] sm:$0xff]
    %v454 = vld [vmem:[#allocation7 + $0xb58] sm:$0xff]
    %v455 = vld [vmem:[#allocation7 + $0xb60] sm:$0xff]
    %v456 = vld [vmem:[#allocation7 + $0xb68] sm:$0xff]
    %v457 = vld [vmem:[#allocation7 + $0xb70] sm:$0xff]
    %v458 = vld [vmem:[#allocation7 + $0xb78] sm:$0xff]
    %v459 = vld [vmem:[#allocation7 + $0xb80] sm:$0xff]
    %v460 = vld [vmem:[#allocation7 + $0xb88] sm:$0xff]
    %v461 = vld [vmem:[#allocation7 + $0xb90] sm:$0xff]
    %v462 = vld [vmem:[#allocation7 + $0xb98] sm:$0xff]
    %v463 = vld [vmem:[#allocation7 + $0xba0] sm:$0xff]
    %v464 = vld [vmem:[#allocation7 + $0xba8] sm:$0xff]
    %v465 = vld [vmem:[#allocation7 + $0xbb0] sm:$0xff]
    %v466 = vld [vmem:[#allocation7 + $0xbb8] sm:$0xff]
    %v467 = vld [vmem:[#allocation7 + $0xbc0] sm:$0xff]
    %v468 = vld [vmem:[#allocation7 + $0xbc8] sm:$0xff]
    %v469 = vld [vmem:[#allocation7 + $0xbd0] sm:$0xff]
    %v470 = vld [vmem:[#allocation7 + $0xbd8] sm:$0xff]
    %v471 = vld [vmem:[#allocation7 + $0xbe0] sm:$0xff]
    %v472 = vld [vmem:[#allocation7 + $0xbe8] sm:$0xff]
    %v473 = vld [vmem:[#allocation7 + $0xbf0] sm:$0xff]
    %v474 = vld [vmem:[#allocation7 + $0xbf8] sm:$0xff]
    %v475 = vld [vmem:[#allocation7 + $0xc00] sm:$0xff]
    %v476 = vld [vmem:[#allocation7 + $0xc08] sm:$0xff]
    %v477 = vld [vmem:[#allocation7 + $0xc10] sm:$0xff]
    %v478 = vld [vmem:[#allocation7 + $0xc18] sm:$0xff]
    %v479 = vld [vmem:[#allocation7 + $0xc20] sm:$0xff]
    %v480 = vld [vmem:[#allocation7 + $0xc28] sm:$0xff]
    %v481 = vld [vmem:[#allocation7 + $0xc30] sm:$0xff]
    %v482 = vld [vmem:[#allocation7 + $0xc38] sm:$0xff]
    %v483 = vld [vmem:[#allocation7 + $0xc40] sm:$0xff]
    %v484 = vld [vmem:[#allocation7 + $0xc48] sm:$0xff]
    %v485 = vld [vmem:[#allocation7 + $0xc50] sm:$0xff]
    %v486 = vld [vmem:[#allocation7 + $0xc58] sm:$0xff]
    %v487 = vld [vmem:[#allocation7 + $0xc60] sm:$0xff]
    %v488 = vld [vmem:[#allocation7 + $0xc68] sm:$0xff]
    %v489 = vld [vmem:[#allocation7 + $0xc70] sm:$0xff]
    %v490 = vld [vmem:[#allocation7 + $0xc78] sm:$0xff]
    %v491 = vld [vmem:[#allocation7 + $0xc80] sm:$0xff]
    %v492 = vld [vmem:[#allocation7 + $0xc88] sm:$0xff]
    %v493 = vld [vmem:[#allocation7 + $0xc90] sm:$0xff]
    %v494 = vld [vmem:[#allocation7 + $0xc98] sm:$0xff]
    %v495 = vld [vmem:[#allocation7 + $0xca0] sm:$0xff]
    %v496 = vld [vmem:[#allocation7 + $0xca8] sm:$0xff]
    %v497 = vld [vmem:[#allocation7 + $0xcb0] sm:$0xff]
    %v498 = vld [vmem:[#allocation7 + $0xcb8] sm:$0xff]
    %v499 = vld [vmem:[#allocation7 + $0xcc0] sm:$0xff]
    %v500 = vld [vmem:[#allocation7 + $0xcc8] sm:$0xff]
    %v501 = vld [vmem:[#allocation7 + $0xcd0] sm:$0xff]
    %v502 = vld [vmem:[#allocation7 + $0xcd8] sm:$0xff]
    %v503 = vld [vmem:[#allocation7 + $0xce0] sm:$0xff]
    %v504 = vld [vmem:[#allocation7 + $0xce8] sm:$0xff]
    %v505 = vld [vmem:[#allocation7 + $0xcf0] sm:$0xff]
    %v506 = vld [vmem:[#allocation7 + $0xcf8] sm:$0xff]
    %v507 = vld [vmem:[#allocation7 + $0xd00] sm:$0xff]
    %v508 = vld [vmem:[#allocation7 + $0xd08] sm:$0xff]
    %v509 = vld [vmem:[#allocation7 + $0xd10] sm:$0xff]
    %v510 = vld [vmem:[#allocation7 + $0xd18] sm:$0xff]
    %v511 = vld [vmem:[#allocation7 + $0xd20] sm:$0xff]
    %v512 = vld [vmem:[#allocation7 + $0xd28] sm:$0xff]
    %v513 = vld [vmem:[#allocation7 + $0xd30] sm:$0xff]
    %v514 = vld [vmem:[#allocation7 + $0xd38] sm:$0xff]
    %v515 = vld [vmem:[#allocation7 + $0xd40] sm:$0xff]
    %v516 = vld [vmem:[#allocation7 + $0xd48] sm:$0xff]
    %v517 = vld [vmem:[#allocation7 + $0xd50] sm:$0xff]
    %v518 = vld [vmem:[#allocation7 + $0xd58] sm:$0xff]
    %v519 = vld [vmem:[#allocation7 + $0xd60] sm:$0xff]
    %v520 = vld [vmem:[#allocation7 + $0xd68] sm:$0xff]
    %v521 = vld [vmem:[#allocation7 + $0xd70] sm:$0xff]
    %v522 = vld [vmem:[#allocation7 + $0xd78] sm:$0xff]
    %v523 = vld [vmem:[#allocation7 + $0xd80] sm:$0xff]
    %v524 = vld [vmem:[#allocation7 + $0xd88] sm:$0xff]
    %v525 = vld [vmem:[#allocation7 + $0xd90] sm:$0xff]
    %v526 = vld [vmem:[#allocation7 + $0xd98] sm:$0xff]
    %v527 = vld [vmem:[#allocation7 + $0xda0] sm:$0xff]
    %v528 = vld [vmem:[#allocation7 + $0xda8] sm:$0xff]
    %v529 = vld [vmem:[#allocation7 + $0xdb0] sm:$0xff]
    %v530 = vld [vmem:[#allocation7 + $0xdb8] sm:$0xff]
    %v531 = vld [vmem:[#allocation7 + $0xdc0] sm:$0xff]
    %v532 = vld [vmem:[#allocation7 + $0xdc8] sm:$0xff]
    %v533 = vld [vmem:[#allocation7 + $0xdd0] sm:$0xff]
    %v534 = vld [vmem:[#allocation7 + $0xdd8] sm:$0xff]
    %v535 = vld [vmem:[#allocation7 + $0xde0] sm:$0xff]
    %v536 = vld [vmem:[#allocation7 + $0xde8] sm:$0xff]
    %v537 = vld [vmem:[#allocation7 + $0xdf0] sm:$0xff]
    %v538 = vld [vmem:[#allocation7 + $0xdf8] sm:$0xff]
    %v539 = vld [vmem:[#allocation7 + $0xe00] sm:$0xff]
    %v540 = vld [vmem:[#allocation7 + $0xe08] sm:$0xff]
    %v541 = vld [vmem:[#allocation7 + $0xe10] sm:$0xff]
    %v542 = vld [vmem:[#allocation7 + $0xe18] sm:$0xff]
    %v543 = vld [vmem:[#allocation7 + $0xe20] sm:$0xff]
    %v544 = vld [vmem:[#allocation7 + $0xe28] sm:$0xff]
    %v545 = vld [vmem:[#allocation7 + $0xe30] sm:$0xff]
    %v546 = vld [vmem:[#allocation7 + $0xe38] sm:$0xff]
    %v547 = vld [vmem:[#allocation7 + $0xe40] sm:$0xff]
    %v548 = vld [vmem:[#allocation7 + $0xe48] sm:$0xff]
    %v549 = vld [vmem:[#allocation7 + $0xe50] sm:$0xff]
    %v550 = vld [vmem:[#allocation7 + $0xe58] sm:$0xff]
    %v551 = vld [vmem:[#allocation7 + $0xe60] sm:$0xff]
    %v552 = vld [vmem:[#allocation7 + $0xe68] sm:$0xff]
    %v553 = vld [vmem:[#allocation7 + $0xe70] sm:$0xff]
    %v554 = vld [vmem:[#allocation7 + $0xe78] sm:$0xff]
    %v555 = vld [vmem:[#allocation7 + $0xe80] sm:$0xff]
    %v556 = vld [vmem:[#allocation7 + $0xe88] sm:$0xff]
    %v557 = vld [vmem:[#allocation7 + $0xe90] sm:$0xff]
    %v558 = vld [vmem:[#allocation7 + $0xe98] sm:$0xff]
    %v559 = vld [vmem:[#allocation7 + $0xea0] sm:$0xff]
    %v560 = vld [vmem:[#allocation7 + $0xea8] sm:$0xff]
    %v561 = vld [vmem:[#allocation7 + $0xeb0] sm:$0xff]
    %v562 = vld [vmem:[#allocation7 + $0xeb8] sm:$0xff]
    %v563 = vld [vmem:[#allocation7 + $0xec0] sm:$0xff]
    %v564 = vld [vmem:[#allocation7 + $0xec8] sm:$0xff]
    %v565 = vld [vmem:[#allocation7 + $0xed0] sm:$0xff]
    %v566 = vld [vmem:[#allocation7 + $0xed8] sm:$0xff]
    %v567 = vld [vmem:[#allocation7 + $0xee0] sm:$0xff]
    %v568 = vld [vmem:[#allocation7 + $0xee8] sm:$0xff]
    %v569 = vld [vmem:[#allocation7 + $0xef0] sm:$0xff]
    %v570 = vld [vmem:[#allocation7 + $0xef8] sm:$0xff]
    %v571 = vld [vmem:[#allocation7 + $0xf00] sm:$0xff]
    %v572 = vld [vmem:[#allocation7 + $0xf08] sm:$0xff]
    %v573 = vld [vmem:[#allocation7 + $0xf10] sm:$0xff]
    %v574 = vld [vmem:[#allocation7 + $0xf18] sm:$0xff]
    %v575 = vld [vmem:[#allocation7 + $0xf20] sm:$0xff]
    %v576 = vld [vmem:[#allocation7 + $0xf28] sm:$0xff]
    %v577 = vld [vmem:[#allocation7 + $0xf30] sm:$0xff]
    %v578 = vld [vmem:[#allocation7 + $0xf38] sm:$0xff]
    %v579 = vld [vmem:[#allocation7 + $0xf40] sm:$0xff]
    %v580 = vld [vmem:[#allocation7 + $0xf48] sm:$0xff]
    %v581 = vld [vmem:[#allocation7 + $0xf50] sm:$0xff]
    %v582 = vld [vmem:[#allocation7 + $0xf58] sm:$0xff]
    %v583 = vld [vmem:[#allocation7 + $0xf60] sm:$0xff]
    %v584 = vld [vmem:[#allocation7 + $0xf68] sm:$0xff]
    %v585 = vld [vmem:[#allocation7 + $0xf70] sm:$0xff]
    %v586 = vld [vmem:[#allocation7 + $0xf78] sm:$0xff]
    %v587 = vld [vmem:[#allocation7 + $0xf80] sm:$0xff]
    %v588 = vld [vmem:[#allocation7 + $0xf88] sm:$0xff]
    %v589 = vld [vmem:[#allocation7 + $0xf90] sm:$0xff]
    %v590 = vld [vmem:[#allocation7 + $0xf98] sm:$0xff]
    %v591 = vld [vmem:[#allocation7 + $0xfa0] sm:$0xff]
    %v592 = vld [vmem:[#allocation7 + $0xfa8] sm:$0xff]
    %v593 = vld [vmem:[#allocation7 + $0xfb0] sm:$0xff]
    %v594 = vld [vmem:[#allocation7 + $0xfb8] sm:$0xff]
    %v595 = vld [vmem:[#allocation7 + $0xfc0] sm:$0xff]
    %v596 = vld [vmem:[#allocation7 + $0xfc8] sm:$0xff]
    %v597 = vld [vmem:[#allocation7 + $0xfd0] sm:$0xff]
    %v598 = vld [vmem:[#allocation7 + $0xfd8] sm:$0xff]
    %v599 = vld [vmem:[#allocation7 + $0xfe0] sm:$0xff]
    %v600 = vld [vmem:[#allocation7 + $0xfe8] sm:$0xff]
    %v601 = vld [vmem:[#allocation7 + $0xff0] sm:$0xff]
    %v602 = vld [vmem:[#allocation7 + $0xff8] sm:$0xff]
    %v603 = vld [vmem:[#allocation5] sm:$0x1]
    %v604 = vld [vmem:[#allocation8] sm:$0xff]
    %v605 = vld [vmem:[#allocation8 + $0x8] sm:$0xff]
    %v606 = vld [vmem:[#allocation8 + $0x10] sm:$0xff]
    %v607 = vld [vmem:[#allocation8 + $0x18] sm:$0xff]
    %v608 = vld [vmem:[#allocation8 + $0x20] sm:$0xff]
    %v609 = vld [vmem:[#allocation8 + $0x28] sm:$0xff]
    %v610 = vld [vmem:[#allocation8 + $0x30] sm:$0xff]
    %v611 = vld [vmem:[#allocation8 + $0x38] sm:$0xff]
    %v612 = vld [vmem:[#allocation8 + $0x40] sm:$0xff]
    %v613 = vld [vmem:[#allocation8 + $0x48] sm:$0xff]
    %v614 = vld [vmem:[#allocation8 + $0x50] sm:$0xff]
    %v615 = vld [vmem:[#allocation8 + $0x58] sm:$0xff]
    %v616 = vld [vmem:[#allocation8 + $0x60] sm:$0xff]
    %v617 = vld [vmem:[#allocation8 + $0x68] sm:$0xff]
    %v618 = vld [vmem:[#allocation8 + $0x70] sm:$0xff]
    %v619 = vld [vmem:[#allocation8 + $0x78] sm:$0xff]
    %v620 = vld [vmem:[#allocation8 + $0x80] sm:$0xff]
    %v621 = vld [vmem:[#allocation8 + $0x88] sm:$0xff]
    %v622 = vld [vmem:[#allocation8 + $0x90] sm:$0xff]
    %v623 = vld [vmem:[#allocation8 + $0x98] sm:$0xff]
    %v624 = vld [vmem:[#allocation8 + $0xa0] sm:$0xff]
    %v625 = vld [vmem:[#allocation8 + $0xa8] sm:$0xff]
    %v626 = vld [vmem:[#allocation8 + $0xb0] sm:$0xff]
    %v627 = vld [vmem:[#allocation8 + $0xb8] sm:$0xff]
    %v628 = vld [vmem:[#allocation8 + $0xc0] sm:$0xff]
    %v629 = vld [vmem:[#allocation8 + $0xc8] sm:$0xff]
    %v630 = vld [vmem:[#allocation8 + $0xd0] sm:$0xff]
    %v631 = vld [vmem:[#allocation8 + $0xd8] sm:$0xff]
    %v632 = vld [vmem:[#allocation8 + $0xe0] sm:$0xff]
    %v633 = vld [vmem:[#allocation8 + $0xe8] sm:$0xff]
    %v634 = vld [vmem:[#allocation8 + $0xf0] sm:$0xff]
    %v635 = vld [vmem:[#allocation8 + $0xf8] sm:$0xff]
    %v636 = vld [vmem:[#allocation8 + $0x100] sm:$0xff]
    %v637 = vld [vmem:[#allocation8 + $0x108] sm:$0xff]
    %v638 = vld [vmem:[#allocation8 + $0x110] sm:$0xff]
    %v639 = vld [vmem:[#allocation8 + $0x118] sm:$0xff]
    %v640 = vld [vmem:[#allocation8 + $0x120] sm:$0xff]
    %v641 = vld [vmem:[#allocation8 + $0x128] sm:$0xff]
    %v642 = vld [vmem:[#allocation8 + $0x130] sm:$0xff]
    %v643 = vld [vmem:[#allocation8 + $0x138] sm:$0xff]
    %v644 = vld [vmem:[#allocation8 + $0x140] sm:$0xff]
    %v645 = vld [vmem:[#allocation8 + $0x148] sm:$0xff]
    %v646 = vld [vmem:[#allocation8 + $0x150] sm:$0xff]
    %v647 = vld [vmem:[#allocation8 + $0x158] sm:$0xff]
    %v648 = vld [vmem:[#allocation8 + $0x160] sm:$0xff]
    %v649 = vld [vmem:[#allocation8 + $0x168] sm:$0xff]
    %v650 = vld [vmem:[#allocation8 + $0x170] sm:$0xff]
    %v651 = vld [vmem:[#allocation8 + $0x178] sm:$0xff]
    %v652 = vld [vmem:[#allocation8 + $0x180] sm:$0xff]
    %v653 = vld [vmem:[#allocation8 + $0x188] sm:$0xff]
    %v654 = vld [vmem:[#allocation8 + $0x190] sm:$0xff]
    %v655 = vld [vmem:[#allocation8 + $0x198] sm:$0xff]
    %v656 = vld [vmem:[#allocation8 + $0x1a0] sm:$0xff]
    %v657 = vld [vmem:[#allocation8 + $0x1a8] sm:$0xff]
    %v658 = vld [vmem:[#allocation8 + $0x1b0] sm:$0xff]
    %v659 = vld [vmem:[#allocation8 + $0x1b8] sm:$0xff]
    %v660 = vld [vmem:[#allocation8 + $0x1c0] sm:$0xff]
    %v661 = vld [vmem:[#allocation8 + $0x1c8] sm:$0xff]
    %v662 = vld [vmem:[#allocation8 + $0x1d0] sm:$0xff]
    %v663 = vld [vmem:[#allocation8 + $0x1d8] sm:$0xff]
    %v664 = vld [vmem:[#allocation8 + $0x1e0] sm:$0xff]
    %v665 = vld [vmem:[#allocation8 + $0x1e8] sm:$0xff]
    %v666 = vld [vmem:[#allocation8 + $0x1f0] sm:$0xff]
    %v667 = vld [vmem:[#allocation8 + $0x1f8] sm:$0xff]
    %v732 = vunpack.c.l.b16 %v604
    %v733 = vunpack.c.h.b16 %v604
    %v734 = vunpack.c.l.b16 %v605
    %v735 = vunpack.c.h.b16 %v605
    %v736 = vunpack.c.l.b16 %v606
    %v737 = vunpack.c.h.b16 %v606
    %v738 = vunpack.c.l.b16 %v607
    %v739 = vunpack.c.h.b16 %v607
    %v740 = vunpack.c.l.b16 %v608
    %v741 = vunpack.c.h.b16 %v608
    %v742 = vunpack.c.l.b16 %v609
    %v743 = vunpack.c.h.b16 %v609
    %v744 = vunpack.c.l.b16 %v610
    %v745 = vunpack.c.h.b16 %v610
    %v746 = vunpack.c.l.b16 %v611
    %v747 = vunpack.c.h.b16 %v611
    %v748 = vunpack.c.l.b16 %v612
    %v749 = vunpack.c.h.b16 %v612
    %v750 = vunpack.c.l.b16 %v613
    %v751 = vunpack.c.h.b16 %v613
    %v752 = vunpack.c.l.b16 %v614
    %v753 = vunpack.c.h.b16 %v614
    %v754 = vunpack.c.l.b16 %v615
    %v755 = vunpack.c.h.b16 %v615
    %v756 = vunpack.c.l.b16 %v616
    %v757 = vunpack.c.h.b16 %v616
    %v758 = vunpack.c.l.b16 %v617
    %v759 = vunpack.c.h.b16 %v617
    %v760 = vunpack.c.l.b16 %v618
    %v761 = vunpack.c.h.b16 %v618
    %v762 = vunpack.c.l.b16 %v619
    %v763 = vunpack.c.h.b16 %v619
    %v764 = vunpack.c.l.b16 %v620
    %v765 = vunpack.c.h.b16 %v620
    %v766 = vunpack.c.l.b16 %v621
    %v767 = vunpack.c.h.b16 %v621
    %v768 = vunpack.c.l.b16 %v622
    %v769 = vunpack.c.h.b16 %v622
    %v770 = vunpack.c.l.b16 %v623
    %v771 = vunpack.c.h.b16 %v623
    %v772 = vunpack.c.l.b16 %v624
    %v773 = vunpack.c.h.b16 %v624
    %v774 = vunpack.c.l.b16 %v625
    %v775 = vunpack.c.h.b16 %v625
    %v776 = vunpack.c.l.b16 %v626
    %v777 = vunpack.c.h.b16 %v626
    %v778 = vunpack.c.l.b16 %v627
    %v779 = vunpack.c.h.b16 %v627
    %v780 = vunpack.c.l.b16 %v628
    %v781 = vunpack.c.h.b16 %v628
    %v782 = vunpack.c.l.b16 %v629
    %v783 = vunpack.c.h.b16 %v629
    %v784 = vunpack.c.l.b16 %v630
    %v785 = vunpack.c.h.b16 %v630
    %v786 = vunpack.c.l.b16 %v631
    %v787 = vunpack.c.h.b16 %v631
    %v788 = vunpack.c.l.b16 %v632
    %v789 = vunpack.c.h.b16 %v632
    %v790 = vunpack.c.l.b16 %v633
    %v791 = vunpack.c.h.b16 %v633
    %v792 = vunpack.c.l.b16 %v634
    %v793 = vunpack.c.h.b16 %v634
    %v794 = vunpack.c.l.b16 %v635
    %v795 = vunpack.c.h.b16 %v635
    %v796 = vunpack.c.l.b16 %v636
    %v797 = vunpack.c.h.b16 %v636
    %v798 = vunpack.c.l.b16 %v637
    %v799 = vunpack.c.h.b16 %v637
    %v800 = vunpack.c.l.b16 %v638
    %v801 = vunpack.c.h.b16 %v638
    %v802 = vunpack.c.l.b16 %v639
    %v803 = vunpack.c.h.b16 %v639
    %v804 = vunpack.c.l.b16 %v640
    %v805 = vunpack.c.h.b16 %v640
    %v806 = vunpack.c.l.b16 %v641
    %v807 = vunpack.c.h.b16 %v641
    %v808 = vunpack.c.l.b16 %v642
    %v809 = vunpack.c.h.b16 %v642
    %v810 = vunpack.c.l.b16 %v643
    %v811 = vunpack.c.h.b16 %v643
    %v812 = vunpack.c.l.b16 %v644
    %v813 = vunpack.c.h.b16 %v644
    %v814 = vunpack.c.l.b16 %v645
    %v815 = vunpack.c.h.b16 %v645
    %v816 = vunpack.c.l.b16 %v646
    %v817 = vunpack.c.h.b16 %v646
    %v818 = vunpack.c.l.b16 %v647
    %v819 = vunpack.c.h.b16 %v647
    %v820 = vunpack.c.l.b16 %v648
    %v821 = vunpack.c.h.b16 %v648
    %v822 = vunpack.c.l.b16 %v649
    %v823 = vunpack.c.h.b16 %v649
    %v824 = vunpack.c.l.b16 %v650
    %v825 = vunpack.c.h.b16 %v650
    %v826 = vunpack.c.l.b16 %v651
    %v827 = vunpack.c.h.b16 %v651
    %v828 = vunpack.c.l.b16 %v652
    %v829 = vunpack.c.h.b16 %v652
    %v830 = vunpack.c.l.b16 %v653
    %v831 = vunpack.c.h.b16 %v653
    %v832 = vunpack.c.l.b16 %v654
    %v833 = vunpack.c.h.b16 %v654
    %v834 = vunpack.c.l.b16 %v655
    %v835 = vunpack.c.h.b16 %v655
    %v836 = vunpack.c.l.b16 %v656
    %v837 = vunpack.c.h.b16 %v656
    %v838 = vunpack.c.l.b16 %v657
    %v839 = vunpack.c.h.b16 %v657
    %v840 = vunpack.c.l.b16 %v658
    %v841 = vunpack.c.h.b16 %v658
    %v842 = vunpack.c.l.b16 %v659
    %v843 = vunpack.c.h.b16 %v659
    %v844 = vunpack.c.l.b16 %v660
    %v845 = vunpack.c.h.b16 %v660
    %v846 = vunpack.c.l.b16 %v661
    %v847 = vunpack.c.h.b16 %v661
    %v848 = vunpack.c.l.b16 %v662
    %v849 = vunpack.c.h.b16 %v662
    %v850 = vunpack.c.l.b16 %v663
    %v851 = vunpack.c.h.b16 %v663
    %v852 = vunpack.c.l.b16 %v664
    %v853 = vunpack.c.h.b16 %v664
    %v854 = vunpack.c.l.b16 %v665
    %v855 = vunpack.c.h.b16 %v665
    %v856 = vunpack.c.l.b16 %v666
    %v857 = vunpack.c.h.b16 %v666
    %v858 = vunpack.c.l.b16 %v667
    %v859 = vunpack.c.h.b16 %v667
    %v860 = vpack.c.b16 %v740, %v732
    %v861 = vpack.c.b16 %v741, %v733
    %v862 = vpack.c.b16 %v742, %v734
    %v863 = vpack.c.b16 %v743, %v735
    %v864 = vpack.c.b16 %v744, %v736
    %v865 = vpack.c.b16 %v745, %v737
    %v866 = vpack.c.b16 %v746, %v738
    %v867 = vpack.c.b16 %v747, %v739
    %v868 = vpack.c.b16 %v756, %v748
    %v869 = vpack.c.b16 %v757, %v749
    %v870 = vpack.c.b16 %v758, %v750
    %v871 = vpack.c.b16 %v759, %v751
    %v872 = vpack.c.b16 %v760, %v752
    %v873 = vpack.c.b16 %v761, %v753
    %v874 = vpack.c.b16 %v762, %v754
    %v875 = vpack.c.b16 %v763, %v755
    %v876 = vpack.c.b16 %v772, %v764
    %v877 = vpack.c.b16 %v773, %v765
    %v878 = vpack.c.b16 %v774, %v766
    %v879 = vpack.c.b16 %v775, %v767
    %v880 = vpack.c.b16 %v776, %v768
    %v881 = vpack.c.b16 %v777, %v769
    %v882 = vpack.c.b16 %v778, %v770
    %v883 = vpack.c.b16 %v779, %v771
    %v884 = vpack.c.b16 %v788, %v780
    %v885 = vpack.c.b16 %v789, %v781
    %v886 = vpack.c.b16 %v790, %v782
    %v887 = vpack.c.b16 %v791, %v783
    %v888 = vpack.c.b16 %v792, %v784
    %v889 = vpack.c.b16 %v793, %v785
    %v890 = vpack.c.b16 %v794, %v786
    %v891 = vpack.c.b16 %v795, %v787
    %v892 = vpack.c.b16 %v804, %v796
    %v893 = vpack.c.b16 %v805, %v797
    %v894 = vpack.c.b16 %v806, %v798
    %v895 = vpack.c.b16 %v807, %v799
    %v896 = vpack.c.b16 %v808, %v800
    %v897 = vpack.c.b16 %v809, %v801
    %v898 = vpack.c.b16 %v810, %v802
    %v899 = vpack.c.b16 %v811, %v803
    %v900 = vpack.c.b16 %v820, %v812
    %v901 = vpack.c.b16 %v821, %v813
    %v902 = vpack.c.b16 %v822, %v814
    %v903 = vpack.c.b16 %v823, %v815
    %v904 = vpack.c.b16 %v824, %v816
    %v905 = vpack.c.b16 %v825, %v817
    %v906 = vpack.c.b16 %v826, %v818
    %v907 = vpack.c.b16 %v827, %v819
    %v908 = vpack.c.b16 %v836, %v828
    %v909 = vpack.c.b16 %v837, %v829
    %v910 = vpack.c.b16 %v838, %v830
    %v911 = vpack.c.b16 %v839, %v831
    %v912 = vpack.c.b16 %v840, %v832
    %v913 = vpack.c.b16 %v841, %v833
    %v914 = vpack.c.b16 %v842, %v834
    %v915 = vpack.c.b16 %v843, %v835
    %v916 = vpack.c.b16 %v852, %v844
    %v917 = vpack.c.b16 %v853, %v845
    %v918 = vpack.c.b16 %v854, %v846
    %v919 = vpack.c.b16 %v855, %v847
    %v920 = vpack.c.b16 %v856, %v848
    %v921 = vpack.c.b16 %v857, %v849
    %v922 = vpack.c.b16 %v858, %v850
    %v923 = vpack.c.b16 %v859, %v851
    %988 = vmatprep.subr.bf16.mxu0 %v861
    %989 = vmatpush1.bf16.msra.mxu0 %v860
    %990 = vmatprep.subr.bf16.mxu0 %v869
    %991 = vmatpush1.bf16.msra.mxu0 %v868
    %992 = vmatprep.subr.bf16.mxu0 %v877
    %993 = vmatpush1.bf16.msra.mxu0 %v876
    %994 = vmatprep.subr.bf16.mxu0 %v885
    %995 = vmatpush1.bf16.msra.mxu0 %v884
    %996 = vmatprep.subr.bf16.mxu0 %v893
    %997 = vmatpush1.bf16.msra.mxu0 %v892
    %998 = vmatprep.subr.bf16.mxu0 %v901
    %999 = vmatpush1.bf16.msra.mxu0 %v900
    %1000 = vmatprep.subr.bf16.mxu0 %v909
    %1001 = vmatpush1.bf16.msra.mxu0 %v908
    %1002 = vmatprep.subr.bf16.mxu0 %v917
    %1003 = vmatpush1.bf16.msra.mxu0 %v916
    %1004 = vmatprep.subr.bf16.mxu0 0
    %1005 = vmatpush1.bf16.msra.mxu0 0
    %1006 = vmatprep.subr.bf16.mxu0 0
    %1007 = vmatpush1.bf16.msra.mxu0 0
    %1008 = vmatprep.subr.bf16.mxu0 0
    %1009 = vmatpush1.bf16.msra.mxu0 0
    %1010 = vmatprep.subr.bf16.mxu0 0
    %1011 = vmatpush1.bf16.msra.mxu0 0
    %1012 = vmatprep.subr.bf16.mxu0 0
    %1013 = vmatpush1.bf16.msra.mxu0 0
    %1014 = vmatprep.subr.bf16.mxu0 0
    %1015 = vmatpush1.bf16.msra.mxu0 0
    %1016 = vmatprep.subr.bf16.mxu0 0
    %1017 = vmatpush1.bf16.msra.mxu0 0
    %1018 = vmatprep.subr.bf16.mxu0 0
    %1019 = vmatpush1.bf16.msra.mxu0 0
    %1020 = vmatprep.mubr.bf16.mxu0 0
    %1021 = vmatmul.mubr.bf16.gmra.mrb[0].mxu0 %v603
    %v1022 = vpop.f32.mrb[0].mxu0
    %v1023 = vadd.f32 0.0, %v1022
    %v1024 = vpop.f32.mrb[0].mxu0
    %v1025 = vadd.f32 0.0, %v1024
    %v1026 = vpop.f32.mrb[0].mxu0
    %v1027 = vpop.f32.mrb[0].mxu0
    %1028 = vdwg.mxu0
    %1029 = vmatprep.subr.bf16.mxu0 %v863
    %1030 = vmatpush1.bf16.msra.mxu0 %v862
    %1031 = vmatprep.subr.bf16.mxu0 %v871
    %1032 = vmatpush1.bf16.msra.mxu0 %v870
    %1033 = vmatprep.subr.bf16.mxu0 %v879
    %1034 = vmatpush1.bf16.msra.mxu0 %v878
    %1035 = vmatprep.subr.bf16.mxu0 %v887
    %1036 = vmatpush1.bf16.msra.mxu0 %v886
    %1037 = vmatprep.subr.bf16.mxu0 %v895
    %1038 = vmatpush1.bf16.msra.mxu0 %v894
    %1039 = vmatprep.subr.bf16.mxu0 %v903
    %1040 = vmatpush1.bf16.msra.mxu0 %v902
    %1041 = vmatprep.subr.bf16.mxu0 %v911
    %1042 = vmatpush1.bf16.msra.mxu0 %v910
    %1043 = vmatprep.subr.bf16.mxu0 %v919
    %1044 = vmatpush1.bf16.msra.mxu0 %v918
    %1045 = vmatprep.subr.bf16.mxu0 0
    %1046 = vmatpush1.bf16.msra.mxu0 0
    %1047 = vmatprep.subr.bf16.mxu0 0
    %1048 = vmatpush1.bf16.msra.mxu0 0
    %1049 = vmatprep.subr.bf16.mxu0 0
    %1050 = vmatpush1.bf16.msra.mxu0 0
    %1051 = vmatprep.subr.bf16.mxu0 0
    %1052 = vmatpush1.bf16.msra.mxu0 0
    %1053 = vmatprep.subr.bf16.mxu0 0
    %1054 = vmatpush1.bf16.msra.mxu0 0
    %1055 = vmatprep.subr.bf16.mxu0 0
    %1056 = vmatpush1.bf16.msra.mxu0 0
    %1057 = vmatprep.subr.bf16.mxu0 0
    %1058 = vmatpush1.bf16.msra.mxu0 0
    %1059 = vmatprep.subr.bf16.mxu0 0
    %1060 = vmatpush1.bf16.msra.mxu0 0
    %1061 = vmatprep.mubr.bf16.mxu0 0
    %1062 = vmatmul.mubr.bf16.gmra.mrb[0].mxu0 %v603
    %v1063 = vpop.f32.mrb[0].mxu0
    %v1064 = vadd.f32 0.0, %v1063
    %v1065 = vpop.f32.mrb[0].mxu0
    %v1066 = vadd.f32 0.0, %v1065
    %v1067 = vpop.f32.mrb[0].mxu0
    %v1068 = vpop.f32.mrb[0].mxu0
    %1069 = vdwg.mxu0
    %1070 = vmatprep.subr.bf16.mxu0 %v865
    %1071 = vmatpush1.bf16.msra.mxu0 %v864
    %1072 = vmatprep.subr.bf16.mxu0 %v873
    %1073 = vmatpush1.bf16.msra.mxu0 %v872
    %1074 = vmatprep.subr.bf16.mxu0 %v881
    %1075 = vmatpush1.bf16.msra.mxu0 %v880
    %1076 = vmatprep.subr.bf16.mxu0 %v889
    %1077 = vmatpush1.bf16.msra.mxu0 %v888
    %1078 = vmatprep.subr.bf16.mxu0 %v897
    %1079 = vmatpush1.bf16.msra.mxu0 %v896
    %1080 = vmatprep.subr.bf16.mxu0 %v905
    %1081 = vmatpush1.bf16.msra.mxu0 %v904
    %1082 = vmatprep.subr.bf16.mxu0 %v913
    %1083 = vmatpush1.bf16.msra.mxu0 %v912
    %1084 = vmatprep.subr.bf16.mxu0 %v921
    %1085 = vmatpush1.bf16.msra.mxu0 %v920
    %1086 = vmatprep.subr.bf16.mxu0 0
    %1087 = vmatpush1.bf16.msra.mxu0 0
    %1088 = vmatprep.subr.bf16.mxu0 0
    %1089 = vmatpush1.bf16.msra.mxu0 0
    %1090 = vmatprep.subr.bf16.mxu0 0
    %1091 = vmatpush1.bf16.msra.mxu0 0
    %1092 = vmatprep.subr.bf16.mxu0 0
    %1093 = vmatpush1.bf16.msra.mxu0 0
    %1094 = vmatprep.subr.bf16.mxu0 0
    %1095 = vmatpush1.bf16.msra.mxu0 0
    %1096 = vmatprep.subr.bf16.mxu0 0
    %1097 = vmatpush1.bf16.msra.mxu0 0
    %1098 = vmatprep.subr.bf16.mxu0 0
    %1099 = vmatpush1.bf16.msra.mxu0 0
    %1100 = vmatprep.subr.bf16.mxu0 0
    %1101 = vmatpush1.bf16.msra.mxu0 0
    %1102 = vmatprep.mubr.bf16.mxu0 0
    %1103 = vmatmul.mubr.bf16.gmra.mrb[0].mxu0 %v603
    %v1104 = vpop.f32.mrb[0].mxu0
    %v1105 = vadd.f32 0.0, %v1104
    %v1106 = vpop.f32.mrb[0].mxu0
    %v1107 = vadd.f32 0.0, %v1106
    %v1108 = vpop.f32.mrb[0].mxu0
    %v1109 = vpop.f32.mrb[0].mxu0
    %1110 = vdwg.mxu0
    %1111 = vmatprep.subr.bf16.mxu0 %v867
    %1112 = vmatpush1.bf16.msra.mxu0 %v866
    %1113 = vmatprep.subr.bf16.mxu0 %v875
    %1114 = vmatpush1.bf16.msra.mxu0 %v874
    %1115 = vmatprep.subr.bf16.mxu0 %v883
    %1116 = vmatpush1.bf16.msra.mxu0 %v882
    %1117 = vmatprep.subr.bf16.mxu0 %v891
    %1118 = vmatpush1.bf16.msra.mxu0 %v890
    %1119 = vmatprep.subr.bf16.mxu0 %v899
    %1120 = vmatpush1.bf16.msra.mxu0 %v898
    %1121 = vmatprep.subr.bf16.mxu0 %v907
    %1122 = vmatpush1.bf16.msra.mxu0 %v906
    %1123 = vmatprep.subr.bf16.mxu0 %v915
    %1124 = vmatpush1.bf16.msra.mxu0 %v914
    %1125 = vmatprep.subr.bf16.mxu0 %v923
    %1126 = vmatpush1.bf16.msra.mxu0 %v922
    %1127 = vmatprep.subr.bf16.mxu0 0
    %1128 = vmatpush1.bf16.msra.mxu0 0
    %1129 = vmatprep.subr.bf16.mxu0 0
    %1130 = vmatpush1.bf16.msra.mxu0 0
    %1131 = vmatprep.subr.bf16.mxu0 0
    %1132 = vmatpush1.bf16.msra.mxu0 0
    %1133 = vmatprep.subr.bf16.mxu0 0
    %1134 = vmatpush1.bf16.msra.mxu0 0
    %1135 = vmatprep.subr.bf16.mxu0 0
    %1136 = vmatpush1.bf16.msra.mxu0 0
    %1137 = vmatprep.subr.bf16.mxu0 0
    %1138 = vmatpush1.bf16.msra.mxu0 0
    %1139 = vmatprep.subr.bf16.mxu0 0
    %1140 = vmatpush1.bf16.msra.mxu0 0
    %1141 = vmatprep.subr.bf16.mxu0 0
    %1142 = vmatpush1.bf16.msra.mxu0 0
    %1143 = vmatprep.mubr.bf16.mxu0 0
    %1144 = vmatmul.mubr.bf16.gmra.mrb[0].mxu0 %v603
    %v1145 = vpop.f32.mrb[0].mxu0
    %v1146 = vadd.f32 0.0, %v1145
    %v1147 = vpop.f32.mrb[0].mxu0
    %v1148 = vadd.f32 0.0, %v1147
    %v1149 = vpop.f32.mrb[0].mxu0
    %v1150 = vpop.f32.mrb[0].mxu0
    %1151 = vdwg.mxu0
    %v1152 = vld [vmem:[#allocation10] ss:$2 sm:$0xff]
    %s1153 = scalar_lea.vmem [#allocation10], 1
    %v1154 = vld [vmem:[%s1153] ss:$2 sm:$0xff]
    %v1156 = vlaneseq
    %v1157 = vshrl.u32 %v1156, 7
    %v1158 = vsub.s32 0, %v1157
    %v1159 = vrot.slane %v1152, %v1158
    %v1160 = vlaneseq
    %v1161 = vshrl.u32 %v1160, 7
    %v1162 = vsub.s32 1, %v1161
    %v1163 = vrot.slane %v1152, %v1162
    %v1164 = vlaneseq
    %v1165 = vshrl.u32 %v1164, 7
    %v1166 = vsub.s32 2, %v1165
    %v1167 = vrot.slane %v1152, %v1166
    %v1168 = vlaneseq
    %v1169 = vshrl.u32 %v1168, 7
    %v1170 = vsub.s32 3, %v1169
    %v1171 = vrot.slane %v1152, %v1170
    %v1172 = vlaneseq
    %v1173 = vshrl.u32 %v1172, 7
    %v1174 = vsub.s32 4, %v1173
    %v1175 = vrot.slane %v1152, %v1174
    %v1176 = vlaneseq
    %v1177 = vshrl.u32 %v1176, 7
    %v1178 = vsub.s32 5, %v1177
    %v1179 = vrot.slane %v1152, %v1178
    %v1180 = vlaneseq
    %v1181 = vshrl.u32 %v1180, 7
    %v1182 = vsub.s32 6, %v1181
    %v1183 = vrot.slane %v1152, %v1182
    %v1184 = vlaneseq
    %v1185 = vshrl.u32 %v1184, 7
    %v1186 = vsub.s32 7, %v1185
    %v1187 = vrot.slane %v1152, %v1186
    %v1197 = vcombine.high %v90, %v90
    %v1199 = vunpack.c.l.s4 1966171168
    %v1200 = vunpack.c.0.s8 %v1199
    %v1201 = vlaneseq
    %v1202 = vshrl.u32 %v1201, 7
    %v1203 = vsub.s32 %v1200, %v1202
    %v1204 = vrot.slane %v90, %v1203
    %v1206 = vunpack.c.l.s4 1966171168
    %v1207 = vunpack.c.0.s8 %v1206
    %v1208 = vlaneseq
    %v1209 = vshrl.u32 %v1208, 7
    %v1210 = vsub.s32 %v1207, %v1209
    %v1211 = vrot.slane %v1197, %v1210
    %v1212 = vcombine.high %v1204, %v1204
    %v1213 = vcombine.high %v1211, %v1211
    %v1215 = vunpack.c.l.s4 1966171168
    %v1216 = vunpack.c.0.s8 %v1215
    %v1217 = vlaneseq
    %v1218 = vshrl.u32 %v1217, 7
    %v1219 = vsub.s32 %v1216, %v1218
    %v1220 = vrot.slane %v1204, %v1219
    %v1222 = vunpack.c.l.s4 1966171168
    %v1223 = vunpack.c.0.s8 %v1222
    %v1224 = vlaneseq
    %v1225 = vshrl.u32 %v1224, 7
    %v1226 = vsub.s32 %v1223, %v1225
    %v1227 = vrot.slane %v1211, %v1226
    %v1229 = vunpack.c.l.s4 1966171168
    %v1230 = vunpack.c.0.s8 %v1229
    %v1231 = vlaneseq
    %v1232 = vshrl.u32 %v1231, 7
    %v1233 = vsub.s32 %v1230, %v1232
    %v1234 = vrot.slane %v1212, %v1233
    %v1236 = vunpack.c.l.s4 1966171168
    %v1237 = vunpack.c.0.s8 %v1236
    %v1238 = vlaneseq
    %v1239 = vshrl.u32 %v1238, 7
    %v1240 = vsub.s32 %v1237, %v1239
    %v1241 = vrot.slane %v1213, %v1240
    %v1242 = vcombine.high %v1220, %v1220
    %v1243 = vcombine.high %v1227, %v1227
    %v1244 = vcombine.high %v1234, %v1234
    %v1245 = vcombine.high %v1241, %v1241
    %v1766 = vunpack.c.l.b16 %v91
    %v1767 = vunpack.c.h.b16 %v91
    %v1768 = vunpack.c.l.b16 %v92
    %v1769 = vunpack.c.h.b16 %v92
    %v1770 = vunpack.c.l.b16 %v93
    %v1771 = vunpack.c.h.b16 %v93
    %v1772 = vunpack.c.l.b16 %v94
    %v1773 = vunpack.c.h.b16 %v94
    %v1774 = vunpack.c.l.b16 %v95
    %v1775 = vunpack.c.h.b16 %v95
    %v1776 = vunpack.c.l.b16 %v96
    %v1777 = vunpack.c.h.b16 %v96
    %v1778 = vunpack.c.l.b16 %v97
    %v1779 = vunpack.c.h.b16 %v97
    %v1780 = vunpack.c.l.b16 %v98
    %v1781 = vunpack.c.h.b16 %v98
    %v1782 = vunpack.c.l.b16 %v99
    %v1783 = vunpack.c.h.b16 %v99
    %v1784 = vunpack.c.l.b16 %v100
    %v1785 = vunpack.c.h.b16 %v100
    %v1786 = vunpack.c.l.b16 %v101
    %v1787 = vunpack.c.h.b16 %v101
    %v1788 = vunpack.c.l.b16 %v102
    %v1789 = vunpack.c.h.b16 %v102
    %v1790 = vunpack.c.l.b16 %v103
    %v1791 = vunpack.c.h.b16 %v103
    %v1792 = vunpack.c.l.b16 %v104
    %v1793 = vunpack.c.h.b16 %v104
    %v1794 = vunpack.c.l.b16 %v105
    %v1795 = vunpack.c.h.b16 %v105
    %v1796 = vunpack.c.l.b16 %v106
    %v1797 = vunpack.c.h.b16 %v106
    %v1798 = vunpack.c.l.b16 %v107
    %v1799 = vunpack.c.h.b16 %v107
    %v1800 = vunpack.c.l.b16 %v108
    %v1801 = vunpack.c.h.b16 %v108
    %v1802 = vunpack.c.l.b16 %v109
    %v1803 = vunpack.c.h.b16 %v109
    %v1804 = vunpack.c.l.b16 %v110
    %v1805 = vunpack.c.h.b16 %v110
    %v1806 = vunpack.c.l.b16 %v111
    %v1807 = vunpack.c.h.b16 %v111
    %v1808 = vunpack.c.l.b16 %v112
    %v1809 = vunpack.c.h.b16 %v112
    %v1810 = vunpack.c.l.b16 %v113
    %v1811 = vunpack.c.h.b16 %v113
    %v1812 = vunpack.c.l.b16 %v114
    %v1813 = vunpack.c.h.b16 %v114
    %v1814 = vunpack.c.l.b16 %v115
    %v1815 = vunpack.c.h.b16 %v115
    %v1816 = vunpack.c.l.b16 %v116
    %v1817 = vunpack.c.h.b16 %v116
    %v1818 = vunpack.c.l.b16 %v117
    %v1819 = vunpack.c.h.b16 %v117
    %v1820 = vunpack.c.l.b16 %v118
    %v1821 = vunpack.c.h.b16 %v118
    %v1822 = vunpack.c.l.b16 %v119
    %v1823 = vunpack.c.h.b16 %v119
    %v1824 = vunpack.c.l.b16 %v120
    %v1825 = vunpack.c.h.b16 %v120
    %v1826 = vunpack.c.l.b16 %v121
    %v1827 = vunpack.c.h.b16 %v121
    %v1828 = vunpack.c.l.b16 %v122
    %v1829 = vunpack.c.h.b16 %v122
    %v1830 = vunpack.c.l.b16 %v123
    %v1831 = vunpack.c.h.b16 %v123
    %v1832 = vunpack.c.l.b16 %v124
    %v1833 = vunpack.c.h.b16 %v124
    %v1834 = vunpack.c.l.b16 %v125
    %v1835 = vunpack.c.h.b16 %v125
    %v1836 = vunpack.c.l.b16 %v126
    %v1837 = vunpack.c.h.b16 %v126
    %v1838 = vunpack.c.l.b16 %v127
    %v1839 = vunpack.c.h.b16 %v127
    %v1840 = vunpack.c.l.b16 %v128
    %v1841 = vunpack.c.h.b16 %v128
    %v1842 = vunpack.c.l.b16 %v129
    %v1843 = vunpack.c.h.b16 %v129
    %v1844 = vunpack.c.l.b16 %v130
    %v1845 = vunpack.c.h.b16 %v130
    %v1846 = vunpack.c.l.b16 %v131
    %v1847 = vunpack.c.h.b16 %v131
    %v1848 = vunpack.c.l.b16 %v132
    %v1849 = vunpack.c.h.b16 %v132
    %v1850 = vunpack.c.l.b16 %v133
    %v1851 = vunpack.c.h.b16 %v133
    %v1852 = vunpack.c.l.b16 %v134
    %v1853 = vunpack.c.h.b16 %v134
    %v1854 = vunpack.c.l.b16 %v135
    %v1855 = vunpack.c.h.b16 %v135
    %v1856 = vunpack.c.l.b16 %v136
    %v1857 = vunpack.c.h.b16 %v136
    %v1858 = vunpack.c.l.b16 %v137
    %v1859 = vunpack.c.h.b16 %v137
    %v1860 = vunpack.c.l.b16 %v138
    %v1861 = vunpack.c.h.b16 %v138
    %v1862 = vunpack.c.l.b16 %v139
    %v1863 = vunpack.c.h.b16 %v139
    %v1864 = vunpack.c.l.b16 %v140
    %v1865 = vunpack.c.h.b16 %v140
    %v1866 = vunpack.c.l.b16 %v141
    %v1867 = vunpack.c.h.b16 %v141
    %v1868 = vunpack.c.l.b16 %v142
    %v1869 = vunpack.c.h.b16 %v142
    %v1870 = vunpack.c.l.b16 %v143
    %v1871 = vunpack.c.h.b16 %v143
    %v1872 = vunpack.c.l.b16 %v144
    %v1873 = vunpack.c.h.b16 %v144
    %v1874 = vunpack.c.l.b16 %v145
    %v1875 = vunpack.c.h.b16 %v145
    %v1876 = vunpack.c.l.b16 %v146
    %v1877 = vunpack.c.h.b16 %v146
    %v1878 = vunpack.c.l.b16 %v147
    %v1879 = vunpack.c.h.b16 %v147
    %v1880 = vunpack.c.l.b16 %v148
    %v1881 = vunpack.c.h.b16 %v148
    %v1882 = vunpack.c.l.b16 %v149
    %v1883 = vunpack.c.h.b16 %v149
    %v1884 = vunpack.c.l.b16 %v150
    %v1885 = vunpack.c.h.b16 %v150
    %v1886 = vunpack.c.l.b16 %v151
    %v1887 = vunpack.c.h.b16 %v151
    %v1888 = vunpack.c.l.b16 %v152
    %v1889 = vunpack.c.h.b16 %v152
    %v1890 = vunpack.c.l.b16 %v153
    %v1891 = vunpack.c.h.b16 %v153
    %v1892 = vunpack.c.l.b16 %v154
    %v1893 = vunpack.c.h.b16 %v154
    %v1894 = vunpack.c.l.b16 %v155
    %v1895 = vunpack.c.h.b16 %v155
    %v1896 = vunpack.c.l.b16 %v156
    %v1897 = vunpack.c.h.b16 %v156
    %v1898 = vunpack.c.l.b16 %v157
    %v1899 = vunpack.c.h.b16 %v157
    %v1900 = vunpack.c.l.b16 %v158
    %v1901 = vunpack.c.h.b16 %v158
    %v1902 = vunpack.c.l.b16 %v159
    %v1903 = vunpack.c.h.b16 %v159
    %v1904 = vunpack.c.l.b16 %v160
    %v1905 = vunpack.c.h.b16 %v160
    %v1906 = vunpack.c.l.b16 %v161
    %v1907 = vunpack.c.h.b16 %v161
    %v1908 = vunpack.c.l.b16 %v162
    %v1909 = vunpack.c.h.b16 %v162
    %v1910 = vunpack.c.l.b16 %v163
    %v1911 = vunpack.c.h.b16 %v163
    %v1912 = vunpack.c.l.b16 %v164
    %v1913 = vunpack.c.h.b16 %v164
    %v1914 = vunpack.c.l.b16 %v165
    %v1915 = vunpack.c.h.b16 %v165
    %v1916 = vunpack.c.l.b16 %v166
    %v1917 = vunpack.c.h.b16 %v166
    %v1918 = vunpack.c.l.b16 %v167
    %v1919 = vunpack.c.h.b16 %v167
    %v1920 = vunpack.c.l.b16 %v168
    %v1921 = vunpack.c.h.b16 %v168
    %v1922 = vunpack.c.l.b16 %v169
    %v1923 = vunpack.c.h.b16 %v169
    %v1924 = vunpack.c.l.b16 %v170
    %v1925 = vunpack.c.h.b16 %v170
    %v1926 = vunpack.c.l.b16 %v171
    %v1927 = vunpack.c.h.b16 %v171
    %v1928 = vunpack.c.l.b16 %v172
    %v1929 = vunpack.c.h.b16 %v172
    %v1930 = vunpack.c.l.b16 %v173
    %v1931 = vunpack.c.h.b16 %v173
    %v1932 = vunpack.c.l.b16 %v174
    %v1933 = vunpack.c.h.b16 %v174
    %v1934 = vunpack.c.l.b16 %v175
    %v1935 = vunpack.c.h.b16 %v175
    %v1936 = vunpack.c.l.b16 %v176
    %v1937 = vunpack.c.h.b16 %v176
    %v1938 = vunpack.c.l.b16 %v177
    %v1939 = vunpack.c.h.b16 %v177
    %v1940 = vunpack.c.l.b16 %v178
    %v1941 = vunpack.c.h.b16 %v178
    %v1942 = vunpack.c.l.b16 %v179
    %v1943 = vunpack.c.h.b16 %v179
    %v1944 = vunpack.c.l.b16 %v180
    %v1945 = vunpack.c.h.b16 %v180
    %v1946 = vunpack.c.l.b16 %v181
    %v1947 = vunpack.c.h.b16 %v181
    %v1948 = vunpack.c.l.b16 %v182
    %v1949 = vunpack.c.h.b16 %v182
    %v1950 = vunpack.c.l.b16 %v183
    %v1951 = vunpack.c.h.b16 %v183
    %v1952 = vunpack.c.l.b16 %v184
    %v1953 = vunpack.c.h.b16 %v184
    %v1954 = vunpack.c.l.b16 %v185
    %v1955 = vunpack.c.h.b16 %v185
    %v1956 = vunpack.c.l.b16 %v186
    %v1957 = vunpack.c.h.b16 %v186
    %v1958 = vunpack.c.l.b16 %v187
    %v1959 = vunpack.c.h.b16 %v187
    %v1960 = vunpack.c.l.b16 %v188
    %v1961 = vunpack.c.h.b16 %v188
    %v1962 = vunpack.c.l.b16 %v189
    %v1963 = vunpack.c.h.b16 %v189
    %v1964 = vunpack.c.l.b16 %v190
    %v1965 = vunpack.c.h.b16 %v190
    %v1966 = vunpack.c.l.b16 %v191
    %v1967 = vunpack.c.h.b16 %v191
    %v1968 = vunpack.c.l.b16 %v192
    %v1969 = vunpack.c.h.b16 %v192
    %v1970 = vunpack.c.l.b16 %v193
    %v1971 = vunpack.c.h.b16 %v193
    %v1972 = vunpack.c.l.b16 %v194
    %v1973 = vunpack.c.h.b16 %v194
    %v1974 = vunpack.c.l.b16 %v195
    %v1975 = vunpack.c.h.b16 %v195
    %v1976 = vunpack.c.l.b16 %v196
    %v1977 = vunpack.c.h.b16 %v196
    %v1978 = vunpack.c.l.b16 %v197
    %v1979 = vunpack.c.h.b16 %v197
    %v1980 = vunpack.c.l.b16 %v198
    %v1981 = vunpack.c.h.b16 %v198
    %v1982 = vunpack.c.l.b16 %v199
    %v1983 = vunpack.c.h.b16 %v199
    %v1984 = vunpack.c.l.b16 %v200
    %v1985 = vunpack.c.h.b16 %v200
    %v1986 = vunpack.c.l.b16 %v201
    %v1987 = vunpack.c.h.b16 %v201
    %v1988 = vunpack.c.l.b16 %v202
    %v1989 = vunpack.c.h.b16 %v202
    %v1990 = vunpack.c.l.b16 %v203
    %v1991 = vunpack.c.h.b16 %v203
    %v1992 = vunpack.c.l.b16 %v204
    %v1993 = vunpack.c.h.b16 %v204
    %v1994 = vunpack.c.l.b16 %v205
    %v1995 = vunpack.c.h.b16 %v205
    %v1996 = vunpack.c.l.b16 %v206
    %v1997 = vunpack.c.h.b16 %v206
    %v1998 = vunpack.c.l.b16 %v207
    %v1999 = vunpack.c.h.b16 %v207
    %v2000 = vunpack.c.l.b16 %v208
    %v2001 = vunpack.c.h.b16 %v208
    %v2002 = vunpack.c.l.b16 %v209
    %v2003 = vunpack.c.h.b16 %v209
    %v2004 = vunpack.c.l.b16 %v210
    %v2005 = vunpack.c.h.b16 %v210
    %v2006 = vunpack.c.l.b16 %v211
    %v2007 = vunpack.c.h.b16 %v211
    %v2008 = vunpack.c.l.b16 %v212
    %v2009 = vunpack.c.h.b16 %v212
    %v2010 = vunpack.c.l.b16 %v213
    %v2011 = vunpack.c.h.b16 %v213
    %v2012 = vunpack.c.l.b16 %v214
    %v2013 = vunpack.c.h.b16 %v214
    %v2014 = vunpack.c.l.b16 %v215
    %v2015 = vunpack.c.h.b16 %v215
    %v2016 = vunpack.c.l.b16 %v216
    %v2017 = vunpack.c.h.b16 %v216
    %v2018 = vunpack.c.l.b16 %v217
    %v2019 = vunpack.c.h.b16 %v217
    %v2020 = vunpack.c.l.b16 %v218
    %v2021 = vunpack.c.h.b16 %v218
    %v2022 = vunpack.c.l.b16 %v219
    %v2023 = vunpack.c.h.b16 %v219
    %v2024 = vunpack.c.l.b16 %v220
    %v2025 = vunpack.c.h.b16 %v220
    %v2026 = vunpack.c.l.b16 %v221
    %v2027 = vunpack.c.h.b16 %v221
    %v2028 = vunpack.c.l.b16 %v222
    %v2029 = vunpack.c.h.b16 %v222
    %v2030 = vunpack.c.l.b16 %v223
    %v2031 = vunpack.c.h.b16 %v223
    %v2032 = vunpack.c.l.b16 %v224
    %v2033 = vunpack.c.h.b16 %v224
    %v2034 = vunpack.c.l.b16 %v225
    %v2035 = vunpack.c.h.b16 %v225
    %v2036 = vunpack.c.l.b16 %v226
    %v2037 = vunpack.c.h.b16 %v226
    %v2038 = vunpack.c.l.b16 %v227
    %v2039 = vunpack.c.h.b16 %v227
    %v2040 = vunpack.c.l.b16 %v228
    %v2041 = vunpack.c.h.b16 %v228
    %v2042 = vunpack.c.l.b16 %v229
    %v2043 = vunpack.c.h.b16 %v229
    %v2044 = vunpack.c.l.b16 %v230
    %v2045 = vunpack.c.h.b16 %v230
    %v2046 = vunpack.c.l.b16 %v231
    %v2047 = vunpack.c.h.b16 %v231
    %v2048 = vunpack.c.l.b16 %v232
    %v2049 = vunpack.c.h.b16 %v232
    %v2050 = vunpack.c.l.b16 %v233
    %v2051 = vunpack.c.h.b16 %v233
    %v2052 = vunpack.c.l.b16 %v234
    %v2053 = vunpack.c.h.b16 %v234
    %v2054 = vunpack.c.l.b16 %v235
    %v2055 = vunpack.c.h.b16 %v235
    %v2056 = vunpack.c.l.b16 %v236
    %v2057 = vunpack.c.h.b16 %v236
    %v2058 = vunpack.c.l.b16 %v237
    %v2059 = vunpack.c.h.b16 %v237
    %v2060 = vunpack.c.l.b16 %v238
    %v2061 = vunpack.c.h.b16 %v238
    %v2062 = vunpack.c.l.b16 %v239
    %v2063 = vunpack.c.h.b16 %v239
    %v2064 = vunpack.c.l.b16 %v240
    %v2065 = vunpack.c.h.b16 %v240
    %v2066 = vunpack.c.l.b16 %v241
    %v2067 = vunpack.c.h.b16 %v241
    %v2068 = vunpack.c.l.b16 %v242
    %v2069 = vunpack.c.h.b16 %v242
    %v2070 = vunpack.c.l.b16 %v243
    %v2071 = vunpack.c.h.b16 %v243
    %v2072 = vunpack.c.l.b16 %v244
    %v2073 = vunpack.c.h.b16 %v244
    %v2074 = vunpack.c.l.b16 %v245
    %v2075 = vunpack.c.h.b16 %v245
    %v2076 = vunpack.c.l.b16 %v246
    %v2077 = vunpack.c.h.b16 %v246
    %v2078 = vunpack.c.l.b16 %v247
    %v2079 = vunpack.c.h.b16 %v247
    %v2080 = vunpack.c.l.b16 %v248
    %v2081 = vunpack.c.h.b16 %v248
    %v2082 = vunpack.c.l.b16 %v249
    %v2083 = vunpack.c.h.b16 %v249
    %v2084 = vunpack.c.l.b16 %v250
    %v2085 = vunpack.c.h.b16 %v250
    %v2086 = vunpack.c.l.b16 %v251
    %v2087 = vunpack.c.h.b16 %v251
    %v2088 = vunpack.c.l.b16 %v252
    %v2089 = vunpack.c.h.b16 %v252
    %v2090 = vunpack.c.l.b16 %v253
    %v2091 = vunpack.c.h.b16 %v253
    %v2092 = vunpack.c.l.b16 %v254
    %v2093 = vunpack.c.h.b16 %v254
    %v2094 = vunpack.c.l.b16 %v255
    %v2095 = vunpack.c.h.b16 %v255
    %v2096 = vunpack.c.l.b16 %v256
    %v2097 = vunpack.c.h.b16 %v256
    %v2098 = vunpack.c.l.b16 %v257
    %v2099 = vunpack.c.h.b16 %v257
    %v2100 = vunpack.c.l.b16 %v258
    %v2101 = vunpack.c.h.b16 %v258
    %v2102 = vunpack.c.l.b16 %v259
    %v2103 = vunpack.c.h.b16 %v259
    %v2104 = vunpack.c.l.b16 %v260
    %v2105 = vunpack.c.h.b16 %v260
    %v2106 = vunpack.c.l.b16 %v261
    %v2107 = vunpack.c.h.b16 %v261
    %v2108 = vunpack.c.l.b16 %v262
    %v2109 = vunpack.c.h.b16 %v262
    %v2110 = vunpack.c.l.b16 %v263
    %v2111 = vunpack.c.h.b16 %v263
    %v2112 = vunpack.c.l.b16 %v264
    %v2113 = vunpack.c.h.b16 %v264
    %v2114 = vunpack.c.l.b16 %v265
    %v2115 = vunpack.c.h.b16 %v265
    %v2116 = vunpack.c.l.b16 %v266
    %v2117 = vunpack.c.h.b16 %v266
    %v2118 = vunpack.c.l.b16 %v267
    %v2119 = vunpack.c.h.b16 %v267
    %v2120 = vunpack.c.l.b16 %v268
    %v2121 = vunpack.c.h.b16 %v268
    %v2122 = vunpack.c.l.b16 %v269
    %v2123 = vunpack.c.h.b16 %v269
    %v2124 = vunpack.c.l.b16 %v270
    %v2125 = vunpack.c.h.b16 %v270
    %v2126 = vunpack.c.l.b16 %v271
    %v2127 = vunpack.c.h.b16 %v271
    %v2128 = vunpack.c.l.b16 %v272
    %v2129 = vunpack.c.h.b16 %v272
    %v2130 = vunpack.c.l.b16 %v273
    %v2131 = vunpack.c.h.b16 %v273
    %v2132 = vunpack.c.l.b16 %v274
    %v2133 = vunpack.c.h.b16 %v274
    %v2134 = vunpack.c.l.b16 %v275
    %v2135 = vunpack.c.h.b16 %v275
    %v2136 = vunpack.c.l.b16 %v276
    %v2137 = vunpack.c.h.b16 %v276
    %v2138 = vunpack.c.l.b16 %v277
    %v2139 = vunpack.c.h.b16 %v277
    %v2140 = vunpack.c.l.b16 %v278
    %v2141 = vunpack.c.h.b16 %v278
    %v2142 = vunpack.c.l.b16 %v279
    %v2143 = vunpack.c.h.b16 %v279
    %v2144 = vunpack.c.l.b16 %v280
    %v2145 = vunpack.c.h.b16 %v280
    %v2146 = vunpack.c.l.b16 %v281
    %v2147 = vunpack.c.h.b16 %v281
    %v2148 = vunpack.c.l.b16 %v282
    %v2149 = vunpack.c.h.b16 %v282
    %v2150 = vunpack.c.l.b16 %v283
    %v2151 = vunpack.c.h.b16 %v283
    %v2152 = vunpack.c.l.b16 %v284
    %v2153 = vunpack.c.h.b16 %v284
    %v2154 = vunpack.c.l.b16 %v285
    %v2155 = vunpack.c.h.b16 %v285
    %v2156 = vunpack.c.l.b16 %v286
    %v2157 = vunpack.c.h.b16 %v286
    %v2158 = vunpack.c.l.b16 %v287
    %v2159 = vunpack.c.h.b16 %v287
    %v2160 = vunpack.c.l.b16 %v288
    %v2161 = vunpack.c.h.b16 %v288
    %v2162 = vunpack.c.l.b16 %v289
    %v2163 = vunpack.c.h.b16 %v289
    %v2164 = vunpack.c.l.b16 %v290
    %v2165 = vunpack.c.h.b16 %v290
    %v2166 = vunpack.c.l.b16 %v291
    %v2167 = vunpack.c.h.b16 %v291
    %v2168 = vunpack.c.l.b16 %v292
    %v2169 = vunpack.c.h.b16 %v292
    %v2170 = vunpack.c.l.b16 %v293
    %v2171 = vunpack.c.h.b16 %v293
    %v2172 = vunpack.c.l.b16 %v294
    %v2173 = vunpack.c.h.b16 %v294
    %v2174 = vunpack.c.l.b16 %v295
    %v2175 = vunpack.c.h.b16 %v295
    %v2176 = vunpack.c.l.b16 %v296
    %v2177 = vunpack.c.h.b16 %v296
    %v2178 = vunpack.c.l.b16 %v297
    %v2179 = vunpack.c.h.b16 %v297
    %v2180 = vunpack.c.l.b16 %v298
    %v2181 = vunpack.c.h.b16 %v298
    %v2182 = vunpack.c.l.b16 %v299
    %v2183 = vunpack.c.h.b16 %v299
    %v2184 = vunpack.c.l.b16 %v300
    %v2185 = vunpack.c.h.b16 %v300
    %v2186 = vunpack.c.l.b16 %v301
    %v2187 = vunpack.c.h.b16 %v301
    %v2188 = vunpack.c.l.b16 %v302
    %v2189 = vunpack.c.h.b16 %v302
    %v2190 = vunpack.c.l.b16 %v303
    %v2191 = vunpack.c.h.b16 %v303
    %v2192 = vunpack.c.l.b16 %v304
    %v2193 = vunpack.c.h.b16 %v304
    %v2194 = vunpack.c.l.b16 %v305
    %v2195 = vunpack.c.h.b16 %v305
    %v2196 = vunpack.c.l.b16 %v306
    %v2197 = vunpack.c.h.b16 %v306
    %v2198 = vunpack.c.l.b16 %v307
    %v2199 = vunpack.c.h.b16 %v307
    %v2200 = vunpack.c.l.b16 %v308
    %v2201 = vunpack.c.h.b16 %v308
    %v2202 = vunpack.c.l.b16 %v309
    %v2203 = vunpack.c.h.b16 %v309
    %v2204 = vunpack.c.l.b16 %v310
    %v2205 = vunpack.c.h.b16 %v310
    %v2206 = vunpack.c.l.b16 %v311
    %v2207 = vunpack.c.h.b16 %v311
    %v2208 = vunpack.c.l.b16 %v312
    %v2209 = vunpack.c.h.b16 %v312
    %v2210 = vunpack.c.l.b16 %v313
    %v2211 = vunpack.c.h.b16 %v313
    %v2212 = vunpack.c.l.b16 %v314
    %v2213 = vunpack.c.h.b16 %v314
    %v2214 = vunpack.c.l.b16 %v315
    %v2215 = vunpack.c.h.b16 %v315
    %v2216 = vunpack.c.l.b16 %v316
    %v2217 = vunpack.c.h.b16 %v316
    %v2218 = vunpack.c.l.b16 %v317
    %v2219 = vunpack.c.h.b16 %v317
    %v2220 = vunpack.c.l.b16 %v318
    %v2221 = vunpack.c.h.b16 %v318
    %v2222 = vunpack.c.l.b16 %v319
    %v2223 = vunpack.c.h.b16 %v319
    %v2224 = vunpack.c.l.b16 %v320
    %v2225 = vunpack.c.h.b16 %v320
    %v2226 = vunpack.c.l.b16 %v321
    %v2227 = vunpack.c.h.b16 %v321
    %v2228 = vunpack.c.l.b16 %v322
    %v2229 = vunpack.c.h.b16 %v322
    %v2230 = vunpack.c.l.b16 %v323
    %v2231 = vunpack.c.h.b16 %v323
    %v2232 = vunpack.c.l.b16 %v324
    %v2233 = vunpack.c.h.b16 %v324
    %v2234 = vunpack.c.l.b16 %v325
    %v2235 = vunpack.c.h.b16 %v325
    %v2236 = vunpack.c.l.b16 %v326
    %v2237 = vunpack.c.h.b16 %v326
    %v2238 = vunpack.c.l.b16 %v327
    %v2239 = vunpack.c.h.b16 %v327
    %v2240 = vunpack.c.l.b16 %v328
    %v2241 = vunpack.c.h.b16 %v328
    %v2242 = vunpack.c.l.b16 %v329
    %v2243 = vunpack.c.h.b16 %v329
    %v2244 = vunpack.c.l.b16 %v330
    %v2245 = vunpack.c.h.b16 %v330
    %v2246 = vunpack.c.l.b16 %v331
    %v2247 = vunpack.c.h.b16 %v331
    %v2248 = vunpack.c.l.b16 %v332
    %v2249 = vunpack.c.h.b16 %v332
    %v2250 = vunpack.c.l.b16 %v333
    %v2251 = vunpack.c.h.b16 %v333
    %v2252 = vunpack.c.l.b16 %v334
    %v2253 = vunpack.c.h.b16 %v334
    %v2254 = vunpack.c.l.b16 %v335
    %v2255 = vunpack.c.h.b16 %v335
    %v2256 = vunpack.c.l.b16 %v336
    %v2257 = vunpack.c.h.b16 %v336
    %v2258 = vunpack.c.l.b16 %v337
    %v2259 = vunpack.c.h.b16 %v337
    %v2260 = vunpack.c.l.b16 %v338
    %v2261 = vunpack.c.h.b16 %v338
    %v2262 = vunpack.c.l.b16 %v339
    %v2263 = vunpack.c.h.b16 %v339
    %v2264 = vunpack.c.l.b16 %v340
    %v2265 = vunpack.c.h.b16 %v340
    %v2266 = vunpack.c.l.b16 %v341
    %v2267 = vunpack.c.h.b16 %v341
    %v2268 = vunpack.c.l.b16 %v342
    %v2269 = vunpack.c.h.b16 %v342
    %v2270 = vunpack.c.l.b16 %v343
    %v2271 = vunpack.c.h.b16 %v343
    %v2272 = vunpack.c.l.b16 %v344
    %v2273 = vunpack.c.h.b16 %v344
    %v2274 = vunpack.c.l.b16 %v345
    %v2275 = vunpack.c.h.b16 %v345
    %v2276 = vunpack.c.l.b16 %v346
    %v2277 = vunpack.c.h.b16 %v346
    %v2278 = vunpack.c.l.b16 %v347
    %v2279 = vunpack.c.h.b16 %v347
    %v2280 = vunpack.c.l.b16 %v348
    %v2281 = vunpack.c.h.b16 %v348
    %v2282 = vunpack.c.l.b16 %v349
    %v2283 = vunpack.c.h.b16 %v349
    %v2284 = vunpack.c.l.b16 %v350
    %v2285 = vunpack.c.h.b16 %v350
    %v2286 = vunpack.c.l.b16 %v351
    %v2287 = vunpack.c.h.b16 %v351
    %v2288 = vunpack.c.l.b16 %v352
    %v2289 = vunpack.c.h.b16 %v352
    %v2290 = vunpack.c.l.b16 %v353
    %v2291 = vunpack.c.h.b16 %v353
    %v2292 = vunpack.c.l.b16 %v354
    %v2293 = vunpack.c.h.b16 %v354
    %v2294 = vunpack.c.l.b16 %v355
    %v2295 = vunpack.c.h.b16 %v355
    %v2296 = vunpack.c.l.b16 %v356
    %v2297 = vunpack.c.h.b16 %v356
    %v2298 = vunpack.c.l.b16 %v357
    %v2299 = vunpack.c.h.b16 %v357
    %v2300 = vunpack.c.l.b16 %v358
    %v2301 = vunpack.c.h.b16 %v358
    %v2302 = vunpack.c.l.b16 %v359
    %v2303 = vunpack.c.h.b16 %v359
    %v2304 = vunpack.c.l.b16 %v360
    %v2305 = vunpack.c.h.b16 %v360
    %v2306 = vunpack.c.l.b16 %v361
    %v2307 = vunpack.c.h.b16 %v361
    %v2308 = vunpack.c.l.b16 %v362
    %v2309 = vunpack.c.h.b16 %v362
    %v2310 = vunpack.c.l.b16 %v363
    %v2311 = vunpack.c.h.b16 %v363
    %v2312 = vunpack.c.l.b16 %v364
    %v2313 = vunpack.c.h.b16 %v364
    %v2314 = vunpack.c.l.b16 %v365
    %v2315 = vunpack.c.h.b16 %v365
    %v2316 = vunpack.c.l.b16 %v366
    %v2317 = vunpack.c.h.b16 %v366
    %v2318 = vunpack.c.l.b16 %v367
    %v2319 = vunpack.c.h.b16 %v367
    %v2320 = vunpack.c.l.b16 %v368
    %v2321 = vunpack.c.h.b16 %v368
    %v2322 = vunpack.c.l.b16 %v369
    %v2323 = vunpack.c.h.b16 %v369
    %v2324 = vunpack.c.l.b16 %v370
    %v2325 = vunpack.c.h.b16 %v370
    %v2326 = vunpack.c.l.b16 %v371
    %v2327 = vunpack.c.h.b16 %v371
    %v2328 = vunpack.c.l.b16 %v372
    %v2329 = vunpack.c.h.b16 %v372
    %v2330 = vunpack.c.l.b16 %v373
    %v2331 = vunpack.c.h.b16 %v373
    %v2332 = vunpack.c.l.b16 %v374
    %v2333 = vunpack.c.h.b16 %v374
    %v2334 = vunpack.c.l.b16 %v375
    %v2335 = vunpack.c.h.b16 %v375
    %v2336 = vunpack.c.l.b16 %v376
    %v2337 = vunpack.c.h.b16 %v376
    %v2338 = vunpack.c.l.b16 %v377
    %v2339 = vunpack.c.h.b16 %v377
    %v2340 = vunpack.c.l.b16 %v378
    %v2341 = vunpack.c.h.b16 %v378
    %v2342 = vunpack.c.l.b16 %v379
    %v2343 = vunpack.c.h.b16 %v379
    %v2344 = vunpack.c.l.b16 %v380
    %v2345 = vunpack.c.h.b16 %v380
    %v2346 = vunpack.c.l.b16 %v381
    %v2347 = vunpack.c.h.b16 %v381
    %v2348 = vunpack.c.l.b16 %v382
    %v2349 = vunpack.c.h.b16 %v382
    %v2350 = vunpack.c.l.b16 %v383
    %v2351 = vunpack.c.h.b16 %v383
    %v2352 = vunpack.c.l.b16 %v384
    %v2353 = vunpack.c.h.b16 %v384
    %v2354 = vunpack.c.l.b16 %v385
    %v2355 = vunpack.c.h.b16 %v385
    %v2356 = vunpack.c.l.b16 %v386
    %v2357 = vunpack.c.h.b16 %v386
    %v2358 = vunpack.c.l.b16 %v387
    %v2359 = vunpack.c.h.b16 %v387
    %v2360 = vunpack.c.l.b16 %v388
    %v2361 = vunpack.c.h.b16 %v388
    %v2362 = vunpack.c.l.b16 %v389
    %v2363 = vunpack.c.h.b16 %v389
    %v2364 = vunpack.c.l.b16 %v390
    %v2365 = vunpack.c.h.b16 %v390
    %v2366 = vunpack.c.l.b16 %v391
    %v2367 = vunpack.c.h.b16 %v391
    %v2368 = vunpack.c.l.b16 %v392
    %v2369 = vunpack.c.h.b16 %v392
    %v2370 = vunpack.c.l.b16 %v393
    %v2371 = vunpack.c.h.b16 %v393
    %v2372 = vunpack.c.l.b16 %v394
    %v2373 = vunpack.c.h.b16 %v394
    %v2374 = vunpack.c.l.b16 %v395
    %v2375 = vunpack.c.h.b16 %v395
    %v2376 = vunpack.c.l.b16 %v396
    %v2377 = vunpack.c.h.b16 %v396
    %v2378 = vunpack.c.l.b16 %v397
    %v2379 = vunpack.c.h.b16 %v397
    %v2380 = vunpack.c.l.b16 %v398
    %v2381 = vunpack.c.h.b16 %v398
    %v2382 = vunpack.c.l.b16 %v399
    %v2383 = vunpack.c.h.b16 %v399
    %v2384 = vunpack.c.l.b16 %v400
    %v2385 = vunpack.c.h.b16 %v400
    %v2386 = vunpack.c.l.b16 %v401
    %v2387 = vunpack.c.h.b16 %v401
    %v2388 = vunpack.c.l.b16 %v402
    %v2389 = vunpack.c.h.b16 %v402
    %v2390 = vunpack.c.l.b16 %v403
    %v2391 = vunpack.c.h.b16 %v403
    %v2392 = vunpack.c.l.b16 %v404
    %v2393 = vunpack.c.h.b16 %v404
    %v2394 = vunpack.c.l.b16 %v405
    %v2395 = vunpack.c.h.b16 %v405
    %v2396 = vunpack.c.l.b16 %v406
    %v2397 = vunpack.c.h.b16 %v406
    %v2398 = vunpack.c.l.b16 %v407
    %v2399 = vunpack.c.h.b16 %v407
    %v2400 = vunpack.c.l.b16 %v408
    %v2401 = vunpack.c.h.b16 %v408
    %v2402 = vunpack.c.l.b16 %v409
    %v2403 = vunpack.c.h.b16 %v409
    %v2404 = vunpack.c.l.b16 %v410
    %v2405 = vunpack.c.h.b16 %v410
    %v2406 = vunpack.c.l.b16 %v411
    %v2407 = vunpack.c.h.b16 %v411
    %v2408 = vunpack.c.l.b16 %v412
    %v2409 = vunpack.c.h.b16 %v412
    %v2410 = vunpack.c.l.b16 %v413
    %v2411 = vunpack.c.h.b16 %v413
    %v2412 = vunpack.c.l.b16 %v414
    %v2413 = vunpack.c.h.b16 %v414
    %v2414 = vunpack.c.l.b16 %v415
    %v2415 = vunpack.c.h.b16 %v415
    %v2416 = vunpack.c.l.b16 %v416
    %v2417 = vunpack.c.h.b16 %v416
    %v2418 = vunpack.c.l.b16 %v417
    %v2419 = vunpack.c.h.b16 %v417
    %v2420 = vunpack.c.l.b16 %v418
    %v2421 = vunpack.c.h.b16 %v418
    %v2422 = vunpack.c.l.b16 %v419
    %v2423 = vunpack.c.h.b16 %v419
    %v2424 = vunpack.c.l.b16 %v420
    %v2425 = vunpack.c.h.b16 %v420
    %v2426 = vunpack.c.l.b16 %v421
    %v2427 = vunpack.c.h.b16 %v421
    %v2428 = vunpack.c.l.b16 %v422
    %v2429 = vunpack.c.h.b16 %v422
    %v2430 = vunpack.c.l.b16 %v423
    %v2431 = vunpack.c.h.b16 %v423
    %v2432 = vunpack.c.l.b16 %v424
    %v2433 = vunpack.c.h.b16 %v424
    %v2434 = vunpack.c.l.b16 %v425
    %v2435 = vunpack.c.h.b16 %v425
    %v2436 = vunpack.c.l.b16 %v426
    %v2437 = vunpack.c.h.b16 %v426
    %v2438 = vunpack.c.l.b16 %v427
    %v2439 = vunpack.c.h.b16 %v427
    %v2440 = vunpack.c.l.b16 %v428
    %v2441 = vunpack.c.h.b16 %v428
    %v2442 = vunpack.c.l.b16 %v429
    %v2443 = vunpack.c.h.b16 %v429
    %v2444 = vunpack.c.l.b16 %v430
    %v2445 = vunpack.c.h.b16 %v430
    %v2446 = vunpack.c.l.b16 %v431
    %v2447 = vunpack.c.h.b16 %v431
    %v2448 = vunpack.c.l.b16 %v432
    %v2449 = vunpack.c.h.b16 %v432
    %v2450 = vunpack.c.l.b16 %v433
    %v2451 = vunpack.c.h.b16 %v433
    %v2452 = vunpack.c.l.b16 %v434
    %v2453 = vunpack.c.h.b16 %v434
    %v2454 = vunpack.c.l.b16 %v435
    %v2455 = vunpack.c.h.b16 %v435
    %v2456 = vunpack.c.l.b16 %v436
    %v2457 = vunpack.c.h.b16 %v436
    %v2458 = vunpack.c.l.b16 %v437
    %v2459 = vunpack.c.h.b16 %v437
    %v2460 = vunpack.c.l.b16 %v438
    %v2461 = vunpack.c.h.b16 %v438
    %v2462 = vunpack.c.l.b16 %v439
    %v2463 = vunpack.c.h.b16 %v439
    %v2464 = vunpack.c.l.b16 %v440
    %v2465 = vunpack.c.h.b16 %v440
    %v2466 = vunpack.c.l.b16 %v441
    %v2467 = vunpack.c.h.b16 %v441
    %v2468 = vunpack.c.l.b16 %v442
    %v2469 = vunpack.c.h.b16 %v442
    %v2470 = vunpack.c.l.b16 %v443
    %v2471 = vunpack.c.h.b16 %v443
    %v2472 = vunpack.c.l.b16 %v444
    %v2473 = vunpack.c.h.b16 %v444
    %v2474 = vunpack.c.l.b16 %v445
    %v2475 = vunpack.c.h.b16 %v445
    %v2476 = vunpack.c.l.b16 %v446
    %v2477 = vunpack.c.h.b16 %v446
    %v2478 = vunpack.c.l.b16 %v447
    %v2479 = vunpack.c.h.b16 %v447
    %v2480 = vunpack.c.l.b16 %v448
    %v2481 = vunpack.c.h.b16 %v448
    %v2482 = vunpack.c.l.b16 %v449
    %v2483 = vunpack.c.h.b16 %v449
    %v2484 = vunpack.c.l.b16 %v450
    %v2485 = vunpack.c.h.b16 %v450
    %v2486 = vunpack.c.l.b16 %v451
    %v2487 = vunpack.c.h.b16 %v451
    %v2488 = vunpack.c.l.b16 %v452
    %v2489 = vunpack.c.h.b16 %v452
    %v2490 = vunpack.c.l.b16 %v453
    %v2491 = vunpack.c.h.b16 %v453
    %v2492 = vunpack.c.l.b16 %v454
    %v2493 = vunpack.c.h.b16 %v454
    %v2494 = vunpack.c.l.b16 %v455
    %v2495 = vunpack.c.h.b16 %v455
    %v2496 = vunpack.c.l.b16 %v456
    %v2497 = vunpack.c.h.b16 %v456
    %v2498 = vunpack.c.l.b16 %v457
    %v2499 = vunpack.c.h.b16 %v457
    %v2500 = vunpack.c.l.b16 %v458
    %v2501 = vunpack.c.h.b16 %v458
    %v2502 = vunpack.c.l.b16 %v459
    %v2503 = vunpack.c.h.b16 %v459
    %v2504 = vunpack.c.l.b16 %v460
    %v2505 = vunpack.c.h.b16 %v460
    %v2506 = vunpack.c.l.b16 %v461
    %v2507 = vunpack.c.h.b16 %v461
    %v2508 = vunpack.c.l.b16 %v462
    %v2509 = vunpack.c.h.b16 %v462
    %v2510 = vunpack.c.l.b16 %v463
    %v2511 = vunpack.c.h.b16 %v463
    %v2512 = vunpack.c.l.b16 %v464
    %v2513 = vunpack.c.h.b16 %v464
    %v2514 = vunpack.c.l.b16 %v465
    %v2515 = vunpack.c.h.b16 %v465
    %v2516 = vunpack.c.l.b16 %v466
    %v2517 = vunpack.c.h.b16 %v466
    %v2518 = vunpack.c.l.b16 %v467
    %v2519 = vunpack.c.h.b16 %v467
    %v2520 = vunpack.c.l.b16 %v468
    %v2521 = vunpack.c.h.b16 %v468
    %v2522 = vunpack.c.l.b16 %v469
    %v2523 = vunpack.c.h.b16 %v469
    %v2524 = vunpack.c.l.b16 %v470
    %v2525 = vunpack.c.h.b16 %v470
    %v2526 = vunpack.c.l.b16 %v471
    %v2527 = vunpack.c.h.b16 %v471
    %v2528 = vunpack.c.l.b16 %v472
    %v2529 = vunpack.c.h.b16 %v472
    %v2530 = vunpack.c.l.b16 %v473
    %v2531 = vunpack.c.h.b16 %v473
    %v2532 = vunpack.c.l.b16 %v474
    %v2533 = vunpack.c.h.b16 %v474
    %v2534 = vunpack.c.l.b16 %v475
    %v2535 = vunpack.c.h.b16 %v475
    %v2536 = vunpack.c.l.b16 %v476
    %v2537 = vunpack.c.h.b16 %v476
    %v2538 = vunpack.c.l.b16 %v477
    %v2539 = vunpack.c.h.b16 %v477
    %v2540 = vunpack.c.l.b16 %v478
    %v2541 = vunpack.c.h.b16 %v478
    %v2542 = vunpack.c.l.b16 %v479
    %v2543 = vunpack.c.h.b16 %v479
    %v2544 = vunpack.c.l.b16 %v480
    %v2545 = vunpack.c.h.b16 %v480
    %v2546 = vunpack.c.l.b16 %v481
    %v2547 = vunpack.c.h.b16 %v481
    %v2548 = vunpack.c.l.b16 %v482
    %v2549 = vunpack.c.h.b16 %v482
    %v2550 = vunpack.c.l.b16 %v483
    %v2551 = vunpack.c.h.b16 %v483
    %v2552 = vunpack.c.l.b16 %v484
    %v2553 = vunpack.c.h.b16 %v484
    %v2554 = vunpack.c.l.b16 %v485
    %v2555 = vunpack.c.h.b16 %v485
    %v2556 = vunpack.c.l.b16 %v486
    %v2557 = vunpack.c.h.b16 %v486
    %v2558 = vunpack.c.l.b16 %v487
    %v2559 = vunpack.c.h.b16 %v487
    %v2560 = vunpack.c.l.b16 %v488
    %v2561 = vunpack.c.h.b16 %v488
    %v2562 = vunpack.c.l.b16 %v489
    %v2563 = vunpack.c.h.b16 %v489
    %v2564 = vunpack.c.l.b16 %v490
    %v2565 = vunpack.c.h.b16 %v490
    %v2566 = vunpack.c.l.b16 %v491
    %v2567 = vunpack.c.h.b16 %v491
    %v2568 = vunpack.c.l.b16 %v492
    %v2569 = vunpack.c.h.b16 %v492
    %v2570 = vunpack.c.l.b16 %v493
    %v2571 = vunpack.c.h.b16 %v493
    %v2572 = vunpack.c.l.b16 %v494
    %v2573 = vunpack.c.h.b16 %v494
    %v2574 = vunpack.c.l.b16 %v495
    %v2575 = vunpack.c.h.b16 %v495
    %v2576 = vunpack.c.l.b16 %v496
    %v2577 = vunpack.c.h.b16 %v496
    %v2578 = vunpack.c.l.b16 %v497
    %v2579 = vunpack.c.h.b16 %v497
    %v2580 = vunpack.c.l.b16 %v498
    %v2581 = vunpack.c.h.b16 %v498
    %v2582 = vunpack.c.l.b16 %v499
    %v2583 = vunpack.c.h.b16 %v499
    %v2584 = vunpack.c.l.b16 %v500
    %v2585 = vunpack.c.h.b16 %v500
    %v2586 = vunpack.c.l.b16 %v501
    %v2587 = vunpack.c.h.b16 %v501
    %v2588 = vunpack.c.l.b16 %v502
    %v2589 = vunpack.c.h.b16 %v502
    %v2590 = vunpack.c.l.b16 %v503
    %v2591 = vunpack.c.h.b16 %v503
    %v2592 = vunpack.c.l.b16 %v504
    %v2593 = vunpack.c.h.b16 %v504
    %v2594 = vunpack.c.l.b16 %v505
    %v2595 = vunpack.c.h.b16 %v505
    %v2596 = vunpack.c.l.b16 %v506
    %v2597 = vunpack.c.h.b16 %v506
    %v2598 = vunpack.c.l.b16 %v507
    %v2599 = vunpack.c.h.b16 %v507
    %v2600 = vunpack.c.l.b16 %v508
    %v2601 = vunpack.c.h.b16 %v508
    %v2602 = vunpack.c.l.b16 %v509
    %v2603 = vunpack.c.h.b16 %v509
    %v2604 = vunpack.c.l.b16 %v510
    %v2605 = vunpack.c.h.b16 %v510
    %v2606 = vunpack.c.l.b16 %v511
    %v2607 = vunpack.c.h.b16 %v511
    %v2608 = vunpack.c.l.b16 %v512
    %v2609 = vunpack.c.h.b16 %v512
    %v2610 = vunpack.c.l.b16 %v513
    %v2611 = vunpack.c.h.b16 %v513
    %v2612 = vunpack.c.l.b16 %v514
    %v2613 = vunpack.c.h.b16 %v514
    %v2614 = vunpack.c.l.b16 %v515
    %v2615 = vunpack.c.h.b16 %v515
    %v2616 = vunpack.c.l.b16 %v516
    %v2617 = vunpack.c.h.b16 %v516
    %v2618 = vunpack.c.l.b16 %v517
    %v2619 = vunpack.c.h.b16 %v517
    %v2620 = vunpack.c.l.b16 %v518
    %v2621 = vunpack.c.h.b16 %v518
    %v2622 = vunpack.c.l.b16 %v519
    %v2623 = vunpack.c.h.b16 %v519
    %v2624 = vunpack.c.l.b16 %v520
    %v2625 = vunpack.c.h.b16 %v520
    %v2626 = vunpack.c.l.b16 %v521
    %v2627 = vunpack.c.h.b16 %v521
    %v2628 = vunpack.c.l.b16 %v522
    %v2629 = vunpack.c.h.b16 %v522
    %v2630 = vunpack.c.l.b16 %v523
    %v2631 = vunpack.c.h.b16 %v523
    %v2632 = vunpack.c.l.b16 %v524
    %v2633 = vunpack.c.h.b16 %v524
    %v2634 = vunpack.c.l.b16 %v525
    %v2635 = vunpack.c.h.b16 %v525
    %v2636 = vunpack.c.l.b16 %v526
    %v2637 = vunpack.c.h.b16 %v526
    %v2638 = vunpack.c.l.b16 %v527
    %v2639 = vunpack.c.h.b16 %v527
    %v2640 = vunpack.c.l.b16 %v528
    %v2641 = vunpack.c.h.b16 %v528
    %v2642 = vunpack.c.l.b16 %v529
    %v2643 = vunpack.c.h.b16 %v529
    %v2644 = vunpack.c.l.b16 %v530
    %v2645 = vunpack.c.h.b16 %v530
    %v2646 = vunpack.c.l.b16 %v531
    %v2647 = vunpack.c.h.b16 %v531
    %v2648 = vunpack.c.l.b16 %v532
    %v2649 = vunpack.c.h.b16 %v532
    %v2650 = vunpack.c.l.b16 %v533
    %v2651 = vunpack.c.h.b16 %v533
    %v2652 = vunpack.c.l.b16 %v534
    %v2653 = vunpack.c.h.b16 %v534
    %v2654 = vunpack.c.l.b16 %v535
    %v2655 = vunpack.c.h.b16 %v535
    %v2656 = vunpack.c.l.b16 %v536
    %v2657 = vunpack.c.h.b16 %v536
    %v2658 = vunpack.c.l.b16 %v537
    %v2659 = vunpack.c.h.b16 %v537
    %v2660 = vunpack.c.l.b16 %v538
    %v2661 = vunpack.c.h.b16 %v538
    %v2662 = vunpack.c.l.b16 %v539
    %v2663 = vunpack.c.h.b16 %v539
    %v2664 = vunpack.c.l.b16 %v540
    %v2665 = vunpack.c.h.b16 %v540
    %v2666 = vunpack.c.l.b16 %v541
    %v2667 = vunpack.c.h.b16 %v541
    %v2668 = vunpack.c.l.b16 %v542
    %v2669 = vunpack.c.h.b16 %v542
    %v2670 = vunpack.c.l.b16 %v543
    %v2671 = vunpack.c.h.b16 %v543
    %v2672 = vunpack.c.l.b16 %v544
    %v2673 = vunpack.c.h.b16 %v544
    %v2674 = vunpack.c.l.b16 %v545
    %v2675 = vunpack.c.h.b16 %v545
    %v2676 = vunpack.c.l.b16 %v546
    %v2677 = vunpack.c.h.b16 %v546
    %v2678 = vunpack.c.l.b16 %v547
    %v2679 = vunpack.c.h.b16 %v547
    %v2680 = vunpack.c.l.b16 %v548
    %v2681 = vunpack.c.h.b16 %v548
    %v2682 = vunpack.c.l.b16 %v549
    %v2683 = vunpack.c.h.b16 %v549
    %v2684 = vunpack.c.l.b16 %v550
    %v2685 = vunpack.c.h.b16 %v550
    %v2686 = vunpack.c.l.b16 %v551
    %v2687 = vunpack.c.h.b16 %v551
    %v2688 = vunpack.c.l.b16 %v552
    %v2689 = vunpack.c.h.b16 %v552
    %v2690 = vunpack.c.l.b16 %v553
    %v2691 = vunpack.c.h.b16 %v553
    %v2692 = vunpack.c.l.b16 %v554
    %v2693 = vunpack.c.h.b16 %v554
    %v2694 = vunpack.c.l.b16 %v555
    %v2695 = vunpack.c.h.b16 %v555
    %v2696 = vunpack.c.l.b16 %v556
    %v2697 = vunpack.c.h.b16 %v556
    %v2698 = vunpack.c.l.b16 %v557
    %v2699 = vunpack.c.h.b16 %v557
    %v2700 = vunpack.c.l.b16 %v558
    %v2701 = vunpack.c.h.b16 %v558
    %v2702 = vunpack.c.l.b16 %v559
    %v2703 = vunpack.c.h.b16 %v559
    %v2704 = vunpack.c.l.b16 %v560
    %v2705 = vunpack.c.h.b16 %v560
    %v2706 = vunpack.c.l.b16 %v561
    %v2707 = vunpack.c.h.b16 %v561
    %v2708 = vunpack.c.l.b16 %v562
    %v2709 = vunpack.c.h.b16 %v562
    %v2710 = vunpack.c.l.b16 %v563
    %v2711 = vunpack.c.h.b16 %v563
    %v2712 = vunpack.c.l.b16 %v564
    %v2713 = vunpack.c.h.b16 %v564
    %v2714 = vunpack.c.l.b16 %v565
    %v2715 = vunpack.c.h.b16 %v565
    %v2716 = vunpack.c.l.b16 %v566
    %v2717 = vunpack.c.h.b16 %v566
    %v2718 = vunpack.c.l.b16 %v567
    %v2719 = vunpack.c.h.b16 %v567
    %v2720 = vunpack.c.l.b16 %v568
    %v2721 = vunpack.c.h.b16 %v568
    %v2722 = vunpack.c.l.b16 %v569
    %v2723 = vunpack.c.h.b16 %v569
    %v2724 = vunpack.c.l.b16 %v570
    %v2725 = vunpack.c.h.b16 %v570
    %v2726 = vunpack.c.l.b16 %v571
    %v2727 = vunpack.c.h.b16 %v571
    %v2728 = vunpack.c.l.b16 %v572
    %v2729 = vunpack.c.h.b16 %v572
    %v2730 = vunpack.c.l.b16 %v573
    %v2731 = vunpack.c.h.b16 %v573
    %v2732 = vunpack.c.l.b16 %v574
    %v2733 = vunpack.c.h.b16 %v574
    %v2734 = vunpack.c.l.b16 %v575
    %v2735 = vunpack.c.h.b16 %v575
    %v2736 = vunpack.c.l.b16 %v576
    %v2737 = vunpack.c.h.b16 %v576
    %v2738 = vunpack.c.l.b16 %v577
    %v2739 = vunpack.c.h.b16 %v577
    %v2740 = vunpack.c.l.b16 %v578
    %v2741 = vunpack.c.h.b16 %v578
    %v2742 = vunpack.c.l.b16 %v579
    %v2743 = vunpack.c.h.b16 %v579
    %v2744 = vunpack.c.l.b16 %v580
    %v2745 = vunpack.c.h.b16 %v580
    %v2746 = vunpack.c.l.b16 %v581
    %v2747 = vunpack.c.h.b16 %v581
    %v2748 = vunpack.c.l.b16 %v582
    %v2749 = vunpack.c.h.b16 %v582
    %v2750 = vunpack.c.l.b16 %v583
    %v2751 = vunpack.c.h.b16 %v583
    %v2752 = vunpack.c.l.b16 %v584
    %v2753 = vunpack.c.h.b16 %v584
    %v2754 = vunpack.c.l.b16 %v585
    %v2755 = vunpack.c.h.b16 %v585
    %v2756 = vunpack.c.l.b16 %v586
    %v2757 = vunpack.c.h.b16 %v586
    %v2758 = vunpack.c.l.b16 %v587
    %v2759 = vunpack.c.h.b16 %v587
    %v2760 = vunpack.c.l.b16 %v588
    %v2761 = vunpack.c.h.b16 %v588
    %v2762 = vunpack.c.l.b16 %v589
    %v2763 = vunpack.c.h.b16 %v589
    %v2764 = vunpack.c.l.b16 %v590
    %v2765 = vunpack.c.h.b16 %v590
    %v2766 = vunpack.c.l.b16 %v591
    %v2767 = vunpack.c.h.b16 %v591
    %v2768 = vunpack.c.l.b16 %v592
    %v2769 = vunpack.c.h.b16 %v592
    %v2770 = vunpack.c.l.b16 %v593
    %v2771 = vunpack.c.h.b16 %v593
    %v2772 = vunpack.c.l.b16 %v594
    %v2773 = vunpack.c.h.b16 %v594
    %v2774 = vunpack.c.l.b16 %v595
    %v2775 = vunpack.c.h.b16 %v595
    %v2776 = vunpack.c.l.b16 %v596
    %v2777 = vunpack.c.h.b16 %v596
    %v2778 = vunpack.c.l.b16 %v597
    %v2779 = vunpack.c.h.b16 %v597
    %v2780 = vunpack.c.l.b16 %v598
    %v2781 = vunpack.c.h.b16 %v598
    %v2782 = vunpack.c.l.b16 %v599
    %v2783 = vunpack.c.h.b16 %v599
    %v2784 = vunpack.c.l.b16 %v600
    %v2785 = vunpack.c.h.b16 %v600
    %v2786 = vunpack.c.l.b16 %v601
    %v2787 = vunpack.c.h.b16 %v601
    %v2788 = vunpack.c.l.b16 %v602
    %v2789 = vunpack.c.h.b16 %v602
    %v2790 = vpack.c.b16 %v1774, %v1766
    %v2791 = vpack.c.b16 %v1775, %v1767
    %v2792 = vpack.c.b16 %v1776, %v1768
    %v2793 = vpack.c.b16 %v1777, %v1769
    %v2794 = vpack.c.b16 %v1778, %v1770
    %v2795 = vpack.c.b16 %v1779, %v1771
    %v2796 = vpack.c.b16 %v1780, %v1772
    %v2797 = vpack.c.b16 %v1781, %v1773
    %v2798 = vpack.c.b16 %v1790, %v1782
    %v2799 = vpack.c.b16 %v1791, %v1783
    %v2800 = vpack.c.b16 %v1792, %v1784
    %v2801 = vpack.c.b16 %v1793, %v1785
    %v2802 = vpack.c.b16 %v1794, %v1786
    %v2803 = vpack.c.b16 %v1795, %v1787
    %v2804 = vpack.c.b16 %v1796, %v1788
    %v2805 = vpack.c.b16 %v1797, %v1789
    %v2806 = vpack.c.b16 %v1806, %v1798
    %v2807 = vpack.c.b16 %v1807, %v1799
    %v2808 = vpack.c.b16 %v1808, %v1800
    %v2809 = vpack.c.b16 %v1809, %v1801
    %v2810 = vpack.c.b16 %v1810, %v1802
    %v2811 = vpack.c.b16 %v1811, %v1803
    %v2812 = vpack.c.b16 %v1812, %v1804
    %v2813 = vpack.c.b16 %v1813, %v1805
    %v2814 = vpack.c.b16 %v1822, %v1814
    %v2815 = vpack.c.b16 %v1823, %v1815
    %v2816 = vpack.c.b16 %v1824, %v1816
    %v2817 = vpack.c.b16 %v1825, %v1817
    %v2818 = vpack.c.b16 %v1826, %v1818
    %v2819 = vpack.c.b16 %v1827, %v1819
    %v2820 = vpack.c.b16 %v1828, %v1820
    %v2821 = vpack.c.b16 %v1829, %v1821
    %v2822 = vpack.c.b16 %v1838, %v1830
    %v2823 = vpack.c.b16 %v1839, %v1831
    %v2824 = vpack.c.b16 %v1840, %v1832
    %v2825 = vpack.c.b16 %v1841, %v1833
    %v2826 = vpack.c.b16 %v1842, %v1834
    %v2827 = vpack.c.b16 %v1843, %v1835
    %v2828 = vpack.c.b16 %v1844, %v1836
    %v2829 = vpack.c.b16 %v1845, %v1837
    %v2830 = vpack.c.b16 %v1854, %v1846
    %v2831 = vpack.c.b16 %v1855, %v1847
    %v2832 = vpack.c.b16 %v1856, %v1848
    %v2833 = vpack.c.b16 %v1857, %v1849
    %v2834 = vpack.c.b16 %v1858, %v1850
    %v2835 = vpack.c.b16 %v1859, %v1851
    %v2836 = vpack.c.b16 %v1860, %v1852
    %v2837 = vpack.c.b16 %v1861, %v1853
    %v2838 = vpack.c.b16 %v1870, %v1862
    %v2839 = vpack.c.b16 %v1871, %v1863
    %v2840 = vpack.c.b16 %v1872, %v1864
    %v2841 = vpack.c.b16 %v1873, %v1865
    %v2842 = vpack.c.b16 %v1874, %v1866
    %v2843 = vpack.c.b16 %v1875, %v1867
    %v2844 = vpack.c.b16 %v1876, %v1868
    %v2845 = vpack.c.b16 %v1877, %v1869
    %v2846 = vpack.c.b16 %v1886, %v1878
    %v2847 = vpack.c.b16 %v1887, %v1879
    %v2848 = vpack.c.b16 %v1888, %v1880
    %v2849 = vpack.c.b16 %v1889, %v1881
    %v2850 = vpack.c.b16 %v1890, %v1882
    %v2851 = vpack.c.b16 %v1891, %v1883
    %v2852 = vpack.c.b16 %v1892, %v1884
    %v2853 = vpack.c.b16 %v1893, %v1885
    %v2854 = vpack.c.b16 %v1902, %v1894
    %v2855 = vpack.c.b16 %v1903, %v1895
    %v2856 = vpack.c.b16 %v1904, %v1896
    %v2857 = vpack.c.b16 %v1905, %v1897
    %v2858 = vpack.c.b16 %v1906, %v1898
    %v2859 = vpack.c.b16 %v1907, %v1899
    %v2860 = vpack.c.b16 %v1908, %v1900
    %v2861 = vpack.c.b16 %v1909, %v1901
    %v2862 = vpack.c.b16 %v1918, %v1910
    %v2863 = vpack.c.b16 %v1919, %v1911
    %v2864 = vpack.c.b16 %v1920, %v1912
    %v2865 = vpack.c.b16 %v1921, %v1913
    %v2866 = vpack.c.b16 %v1922, %v1914
    %v2867 = vpack.c.b16 %v1923, %v1915
    %v2868 = vpack.c.b16 %v1924, %v1916
    %v2869 = vpack.c.b16 %v1925, %v1917
    %v2870 = vpack.c.b16 %v1934, %v1926
    %v2871 = vpack.c.b16 %v1935, %v1927
    %v2872 = vpack.c.b16 %v1936, %v1928
    %v2873 = vpack.c.b16 %v1937, %v1929
    %v2874 = vpack.c.b16 %v1938, %v1930
    %v2875 = vpack.c.b16 %v1939, %v1931
    %v2876 = vpack.c.b16 %v1940, %v1932
    %v2877 = vpack.c.b16 %v1941, %v1933
    %v2878 = vpack.c.b16 %v1950, %v1942
    %v2879 = vpack.c.b16 %v1951, %v1943
    %v2880 = vpack.c.b16 %v1952, %v1944
    %v2881 = vpack.c.b16 %v1953, %v1945
    %v2882 = vpack.c.b16 %v1954, %v1946
    %v2883 = vpack.c.b16 %v1955, %v1947
    %v2884 = vpack.c.b16 %v1956, %v1948
    %v2885 = vpack.c.b16 %v1957, %v1949
    %v2886 = vpack.c.b16 %v1966, %v1958
    %v2887 = vpack.c.b16 %v1967, %v1959
    %v2888 = vpack.c.b16 %v1968, %v1960
    %v2889 = vpack.c.b16 %v1969, %v1961
    %v2890 = vpack.c.b16 %v1970, %v1962
    %v2891 = vpack.c.b16 %v1971, %v1963
    %v2892 = vpack.c.b16 %v1972, %v1964
    %v2893 = vpack.c.b16 %v1973, %v1965
    %v2894 = vpack.c.b16 %v1982, %v1974
    %v2895 = vpack.c.b16 %v1983, %v1975
    %v2896 = vpack.c.b16 %v1984, %v1976
    %v2897 = vpack.c.b16 %v1985, %v1977
    %v2898 = vpack.c.b16 %v1986, %v1978
    %v2899 = vpack.c.b16 %v1987, %v1979
    %v2900 = vpack.c.b16 %v1988, %v1980
    %v2901 = vpack.c.b16 %v1989, %v1981
    %v2902 = vpack.c.b16 %v1998, %v1990
    %v2903 = vpack.c.b16 %v1999, %v1991
    %v2904 = vpack.c.b16 %v2000, %v1992
    %v2905 = vpack.c.b16 %v2001, %v1993
    %v2906 = vpack.c.b16 %v2002, %v1994
    %v2907 = vpack.c.b16 %v2003, %v1995
    %v2908 = vpack.c.b16 %v2004, %v1996
    %v2909 = vpack.c.b16 %v2005, %v1997
    %v2910 = vpack.c.b16 %v2014, %v2006
    %v2911 = vpack.c.b16 %v2015, %v2007
    %v2912 = vpack.c.b16 %v2016, %v2008
    %v2913 = vpack.c.b16 %v2017, %v2009
    %v2914 = vpack.c.b16 %v2018, %v2010
    %v2915 = vpack.c.b16 %v2019, %v2011
    %v2916 = vpack.c.b16 %v2020, %v2012
    %v2917 = vpack.c.b16 %v2021, %v2013
    %v2918 = vpack.c.b16 %v2030, %v2022
    %v2919 = vpack.c.b16 %v2031, %v2023
    %v2920 = vpack.c.b16 %v2032, %v2024
    %v2921 = vpack.c.b16 %v2033, %v2025
    %v2922 = vpack.c.b16 %v2034, %v2026
    %v2923 = vpack.c.b16 %v2035, %v2027
    %v2924 = vpack.c.b16 %v2036, %v2028
    %v2925 = vpack.c.b16 %v2037, %v2029
    %v2926 = vpack.c.b16 %v2046, %v2038
    %v2927 = vpack.c.b16 %v2047, %v2039
    %v2928 = vpack.c.b16 %v2048, %v2040
    %v2929 = vpack.c.b16 %v2049, %v2041
    %v2930 = vpack.c.b16 %v2050, %v2042
    %v2931 = vpack.c.b16 %v2051, %v2043
    %v2932 = vpack.c.b16 %v2052, %v2044
    %v2933 = vpack.c.b16 %v2053, %v2045
    %v2934 = vpack.c.b16 %v2062, %v2054
    %v2935 = vpack.c.b16 %v2063, %v2055
    %v2936 = vpack.c.b16 %v2064, %v2056
    %v2937 = vpack.c.b16 %v2065, %v2057
    %v2938 = vpack.c.b16 %v2066, %v2058
    %v2939 = vpack.c.b16 %v2067, %v2059
    %v2940 = vpack.c.b16 %v2068, %v2060
    %v2941 = vpack.c.b16 %v2069, %v2061
    %v2942 = vpack.c.b16 %v2078, %v2070
    %v2943 = vpack.c.b16 %v2079, %v2071
    %v2944 = vpack.c.b16 %v2080, %v2072
    %v2945 = vpack.c.b16 %v2081, %v2073
    %v2946 = vpack.c.b16 %v2082, %v2074
    %v2947 = vpack.c.b16 %v2083, %v2075
    %v2948 = vpack.c.b16 %v2084, %v2076
    %v2949 = vpack.c.b16 %v2085, %v2077
    %v2950 = vpack.c.b16 %v2094, %v2086
    %v2951 = vpack.c.b16 %v2095, %v2087
    %v2952 = vpack.c.b16 %v2096, %v2088
    %v2953 = vpack.c.b16 %v2097, %v2089
    %v2954 = vpack.c.b16 %v2098, %v2090
    %v2955 = vpack.c.b16 %v2099, %v2091
    %v2956 = vpack.c.b16 %v2100, %v2092
    %v2957 = vpack.c.b16 %v2101, %v2093
    %v2958 = vpack.c.b16 %v2110, %v2102
    %v2959 = vpack.c.b16 %v2111, %v2103
    %v2960 = vpack.c.b16 %v2112, %v2104
    %v2961 = vpack.c.b16 %v2113, %v2105
    %v2962 = vpack.c.b16 %v2114, %v2106
    %v2963 = vpack.c.b16 %v2115, %v2107
    %v2964 = vpack.c.b16 %v2116, %v2108
    %v2965 = vpack.c.b16 %v2117, %v2109
    %v2966 = vpack.c.b16 %v2126, %v2118
    %v2967 = vpack.c.b16 %v2127, %v2119
    %v2968 = vpack.c.b16 %v2128, %v2120
    %v2969 = vpack.c.b16 %v2129, %v2121
    %v2970 = vpack.c.b16 %v2130, %v2122
    %v2971 = vpack.c.b16 %v2131, %v2123
    %v2972 = vpack.c.b16 %v2132, %v2124
    %v2973 = vpack.c.b16 %v2133, %v2125
    %v2974 = vpack.c.b16 %v2142, %v2134
    %v2975 = vpack.c.b16 %v2143, %v2135
    %v2976 = vpack.c.b16 %v2144, %v2136
    %v2977 = vpack.c.b16 %v2145, %v2137
    %v2978 = vpack.c.b16 %v2146, %v2138
    %v2979 = vpack.c.b16 %v2147, %v2139
    %v2980 = vpack.c.b16 %v2148, %v2140
    %v2981 = vpack.c.b16 %v2149, %v2141
    %v2982 = vpack.c.b16 %v2158, %v2150
    %v2983 = vpack.c.b16 %v2159, %v2151
    %v2984 = vpack.c.b16 %v2160, %v2152
    %v2985 = vpack.c.b16 %v2161, %v2153
    %v2986 = vpack.c.b16 %v2162, %v2154
    %v2987 = vpack.c.b16 %v2163, %v2155
    %v2988 = vpack.c.b16 %v2164, %v2156
    %v2989 = vpack.c.b16 %v2165, %v2157
    %v2990 = vpack.c.b16 %v2174, %v2166
    %v2991 = vpack.c.b16 %v2175, %v2167
    %v2992 = vpack.c.b16 %v2176, %v2168
    %v2993 = vpack.c.b16 %v2177, %v2169
    %v2994 = vpack.c.b16 %v2178, %v2170
    %v2995 = vpack.c.b16 %v2179, %v2171
    %v2996 = vpack.c.b16 %v2180, %v2172
    %v2997 = vpack.c.b16 %v2181, %v2173
    %v2998 = vpack.c.b16 %v2190, %v2182
    %v2999 = vpack.c.b16 %v2191, %v2183
    %v3000 = vpack.c.b16 %v2192, %v2184
    %v3001 = vpack.c.b16 %v2193, %v2185
    %v3002 = vpack.c.b16 %v2194, %v2186
    %v3003 = vpack.c.b16 %v2195, %v2187
    %v3004 = vpack.c.b16 %v2196, %v2188
    %v3005 = vpack.c.b16 %v2197, %v2189
    %v3006 = vpack.c.b16 %v2206, %v2198
    %v3007 = vpack.c.b16 %v2207, %v2199
    %v3008 = vpack.c.b16 %v2208, %v2200
    %v3009 = vpack.c.b16 %v2209, %v2201
    %v3010 = vpack.c.b16 %v2210, %v2202
    %v3011 = vpack.c.b16 %v2211, %v2203
    %v3012 = vpack.c.b16 %v2212, %v2204
    %v3013 = vpack.c.b16 %v2213, %v2205
    %v3014 = vpack.c.b16 %v2222, %v2214
    %v3015 = vpack.c.b16 %v2223, %v2215
    %v3016 = vpack.c.b16 %v2224, %v2216
    %v3017 = vpack.c.b16 %v2225, %v2217
    %v3018 = vpack.c.b16 %v2226, %v2218
    %v3019 = vpack.c.b16 %v2227, %v2219
    %v3020 = vpack.c.b16 %v2228, %v2220
    %v3021 = vpack.c.b16 %v2229, %v2221
    %v3022 = vpack.c.b16 %v2238, %v2230
    %v3023 = vpack.c.b16 %v2239, %v2231
    %v3024 = vpack.c.b16 %v2240, %v2232
    %v3025 = vpack.c.b16 %v2241, %v2233
    %v3026 = vpack.c.b16 %v2242, %v2234
    %v3027 = vpack.c.b16 %v2243, %v2235
    %v3028 = vpack.c.b16 %v2244, %v2236
    %v3029 = vpack.c.b16 %v2245, %v2237
    %v3030 = vpack.c.b16 %v2254, %v2246
    %v3031 = vpack.c.b16 %v2255, %v2247
    %v3032 = vpack.c.b16 %v2256, %v2248
    %v3033 = vpack.c.b16 %v2257, %v2249
    %v3034 = vpack.c.b16 %v2258, %v2250
    %v3035 = vpack.c.b16 %v2259, %v2251
    %v3036 = vpack.c.b16 %v2260, %v2252
    %v3037 = vpack.c.b16 %v2261, %v2253
    %v3038 = vpack.c.b16 %v2270, %v2262
    %v3039 = vpack.c.b16 %v2271, %v2263
    %v3040 = vpack.c.b16 %v2272, %v2264
    %v3041 = vpack.c.b16 %v2273, %v2265
    %v3042 = vpack.c.b16 %v2274, %v2266
    %v3043 = vpack.c.b16 %v2275, %v2267
    %v3044 = vpack.c.b16 %v2276, %v2268
    %v3045 = vpack.c.b16 %v2277, %v2269
    %v3046 = vpack.c.b16 %v2286, %v2278
    %v3047 = vpack.c.b16 %v2287, %v2279
    %v3048 = vpack.c.b16 %v2288, %v2280
    %v3049 = vpack.c.b16 %v2289, %v2281
    %v3050 = vpack.c.b16 %v2290, %v2282
    %v3051 = vpack.c.b16 %v2291, %v2283
    %v3052 = vpack.c.b16 %v2292, %v2284
    %v3053 = vpack.c.b16 %v2293, %v2285
    %v3054 = vpack.c.b16 %v2302, %v2294
    %v3055 = vpack.c.b16 %v2303, %v2295
    %v3056 = vpack.c.b16 %v2304, %v2296
    %v3057 = vpack.c.b16 %v2305, %v2297
    %v3058 = vpack.c.b16 %v2306, %v2298
    %v3059 = vpack.c.b16 %v2307, %v2299
    %v3060 = vpack.c.b16 %v2308, %v2300
    %v3061 = vpack.c.b16 %v2309, %v2301
    %v3062 = vpack.c.b16 %v2318, %v2310
    %v3063 = vpack.c.b16 %v2319, %v2311
    %v3064 = vpack.c.b16 %v2320, %v2312
    %v3065 = vpack.c.b16 %v2321, %v2313
    %v3066 = vpack.c.b16 %v2322, %v2314
    %v3067 = vpack.c.b16 %v2323, %v2315
    %v3068 = vpack.c.b16 %v2324, %v2316
    %v3069 = vpack.c.b16 %v2325, %v2317
    %v3070 = vpack.c.b16 %v2334, %v2326
    %v3071 = vpack.c.b16 %v2335, %v2327
    %v3072 = vpack.c.b16 %v2336, %v2328
    %v3073 = vpack.c.b16 %v2337, %v2329
    %v3074 = vpack.c.b16 %v2338, %v2330
    %v3075 = vpack.c.b16 %v2339, %v2331
    %v3076 = vpack.c.b16 %v2340, %v2332
    %v3077 = vpack.c.b16 %v2341, %v2333
    %v3078 = vpack.c.b16 %v2350, %v2342
    %v3079 = vpack.c.b16 %v2351, %v2343
    %v3080 = vpack.c.b16 %v2352, %v2344
    %v3081 = vpack.c.b16 %v2353, %v2345
    %v3082 = vpack.c.b16 %v2354, %v2346
    %v3083 = vpack.c.b16 %v2355, %v2347
    %v3084 = vpack.c.b16 %v2356, %v2348
    %v3085 = vpack.c.b16 %v2357, %v2349
    %v3086 = vpack.c.b16 %v2366, %v2358
    %v3087 = vpack.c.b16 %v2367, %v2359
    %v3088 = vpack.c.b16 %v2368, %v2360
    %v3089 = vpack.c.b16 %v2369, %v2361
    %v3090 = vpack.c.b16 %v2370, %v2362
    %v3091 = vpack.c.b16 %v2371, %v2363
    %v3092 = vpack.c.b16 %v2372, %v2364
    %v3093 = vpack.c.b16 %v2373, %v2365
    %v3094 = vpack.c.b16 %v2382, %v2374
    %v3095 = vpack.c.b16 %v2383, %v2375
    %v3096 = vpack.c.b16 %v2384, %v2376
    %v3097 = vpack.c.b16 %v2385, %v2377
    %v3098 = vpack.c.b16 %v2386, %v2378
    %v3099 = vpack.c.b16 %v2387, %v2379
    %v3100 = vpack.c.b16 %v2388, %v2380
    %v3101 = vpack.c.b16 %v2389, %v2381
    %v3102 = vpack.c.b16 %v2398, %v2390
    %v3103 = vpack.c.b16 %v2399, %v2391
    %v3104 = vpack.c.b16 %v2400, %v2392
    %v3105 = vpack.c.b16 %v2401, %v2393
    %v3106 = vpack.c.b16 %v2402, %v2394
    %v3107 = vpack.c.b16 %v2403, %v2395
    %v3108 = vpack.c.b16 %v2404, %v2396
    %v3109 = vpack.c.b16 %v2405, %v2397
    %v3110 = vpack.c.b16 %v2414, %v2406
    %v3111 = vpack.c.b16 %v2415, %v2407
    %v3112 = vpack.c.b16 %v2416, %v2408
    %v3113 = vpack.c.b16 %v2417, %v2409
    %v3114 = vpack.c.b16 %v2418, %v2410
    %v3115 = vpack.c.b16 %v2419, %v2411
    %v3116 = vpack.c.b16 %v2420, %v2412
    %v3117 = vpack.c.b16 %v2421, %v2413
    %v3118 = vpack.c.b16 %v2430, %v2422
    %v3119 = vpack.c.b16 %v2431, %v2423
    %v3120 = vpack.c.b16 %v2432, %v2424
    %v3121 = vpack.c.b16 %v2433, %v2425
    %v3122 = vpack.c.b16 %v2434, %v2426
    %v3123 = vpack.c.b16 %v2435, %v2427
    %v3124 = vpack.c.b16 %v2436, %v2428
    %v3125 = vpack.c.b16 %v2437, %v2429
    %v3126 = vpack.c.b16 %v2446, %v2438
    %v3127 = vpack.c.b16 %v2447, %v2439
    %v3128 = vpack.c.b16 %v2448, %v2440
    %v3129 = vpack.c.b16 %v2449, %v2441
    %v3130 = vpack.c.b16 %v2450, %v2442
    %v3131 = vpack.c.b16 %v2451, %v2443
    %v3132 = vpack.c.b16 %v2452, %v2444
    %v3133 = vpack.c.b16 %v2453, %v2445
    %v3134 = vpack.c.b16 %v2462, %v2454
    %v3135 = vpack.c.b16 %v2463, %v2455
    %v3136 = vpack.c.b16 %v2464, %v2456
    %v3137 = vpack.c.b16 %v2465, %v2457
    %v3138 = vpack.c.b16 %v2466, %v2458
    %v3139 = vpack.c.b16 %v2467, %v2459
    %v3140 = vpack.c.b16 %v2468, %v2460
    %v3141 = vpack.c.b16 %v2469, %v2461
    %v3142 = vpack.c.b16 %v2478, %v2470
    %v3143 = vpack.c.b16 %v2479, %v2471
    %v3144 = vpack.c.b16 %v2480, %v2472
    %v3145 = vpack.c.b16 %v2481, %v2473
    %v3146 = vpack.c.b16 %v2482, %v2474
    %v3147 = vpack.c.b16 %v2483, %v2475
    %v3148 = vpack.c.b16 %v2484, %v2476
    %v3149 = vpack.c.b16 %v2485, %v2477
    %v3150 = vpack.c.b16 %v2494, %v2486
    %v3151 = vpack.c.b16 %v2495, %v2487
    %v3152 = vpack.c.b16 %v2496, %v2488
    %v3153 = vpack.c.b16 %v2497, %v2489
    %v3154 = vpack.c.b16 %v2498, %v2490
    %v3155 = vpack.c.b16 %v2499, %v2491
    %v3156 = vpack.c.b16 %v2500, %v2492
    %v3157 = vpack.c.b16 %v2501, %v2493
    %v3158 = vpack.c.b16 %v2510, %v2502
    %v3159 = vpack.c.b16 %v2511, %v2503
    %v3160 = vpack.c.b16 %v2512, %v2504
    %v3161 = vpack.c.b16 %v2513, %v2505
    %v3162 = vpack.c.b16 %v2514, %v2506
    %v3163 = vpack.c.b16 %v2515, %v2507
    %v3164 = vpack.c.b16 %v2516, %v2508
    %v3165 = vpack.c.b16 %v2517, %v2509
    %v3166 = vpack.c.b16 %v2526, %v2518
    %v3167 = vpack.c.b16 %v2527, %v2519
    %v3168 = vpack.c.b16 %v2528, %v2520
    %v3169 = vpack.c.b16 %v2529, %v2521
    %v3170 = vpack.c.b16 %v2530, %v2522
    %v3171 = vpack.c.b16 %v2531, %v2523
    %v3172 = vpack.c.b16 %v2532, %v2524
    %v3173 = vpack.c.b16 %v2533, %v2525
    %v3174 = vpack.c.b16 %v2542, %v2534
    %v3175 = vpack.c.b16 %v2543, %v2535
    %v3176 = vpack.c.b16 %v2544, %v2536
    %v3177 = vpack.c.b16 %v2545, %v2537
    %v3178 = vpack.c.b16 %v2546, %v2538
    %v3179 = vpack.c.b16 %v2547, %v2539
    %v3180 = vpack.c.b16 %v2548, %v2540
    %v3181 = vpack.c.b16 %v2549, %v2541
    %v3182 = vpack.c.b16 %v2558, %v2550
    %v3183 = vpack.c.b16 %v2559, %v2551
    %v3184 = vpack.c.b16 %v2560, %v2552
    %v3185 = vpack.c.b16 %v2561, %v2553
    %v3186 = vpack.c.b16 %v2562, %v2554
    %v3187 = vpack.c.b16 %v2563, %v2555
    %v3188 = vpack.c.b16 %v2564, %v2556
    %v3189 = vpack.c.b16 %v2565, %v2557
    %v3190 = vpack.c.b16 %v2574, %v2566
    %v3191 = vpack.c.b16 %v2575, %v2567
    %v3192 = vpack.c.b16 %v2576, %v2568
    %v3193 = vpack.c.b16 %v2577, %v2569
    %v3194 = vpack.c.b16 %v2578, %v2570
    %v3195 = vpack.c.b16 %v2579, %v2571
    %v3196 = vpack.c.b16 %v2580, %v2572
    %v3197 = vpack.c.b16 %v2581, %v2573
    %v3198 = vpack.c.b16 %v2590, %v2582
    %v3199 = vpack.c.b16 %v2591, %v2583
    %v3200 = vpack.c.b16 %v2592, %v2584
    %v3201 = vpack.c.b16 %v2593, %v2585
    %v3202 = vpack.c.b16 %v2594, %v2586
    %v3203 = vpack.c.b16 %v2595, %v2587
    %v3204 = vpack.c.b16 %v2596, %v2588
    %v3205 = vpack.c.b16 %v2597, %v2589
    %v3206 = vpack.c.b16 %v2606, %v2598
    %v3207 = vpack.c.b16 %v2607, %v2599
    %v3208 = vpack.c.b16 %v2608, %v2600
    %v3209 = vpack.c.b16 %v2609, %v2601
    %v3210 = vpack.c.b16 %v2610, %v2602
    %v3211 = vpack.c.b16 %v2611, %v2603
    %v3212 = vpack.c.b16 %v2612, %v2604
    %v3213 = vpack.c.b16 %v2613, %v2605
    %v3214 = vpack.c.b16 %v2622, %v2614
    %v3215 = vpack.c.b16 %v2623, %v2615
    %v3216 = vpack.c.b16 %v2624, %v2616
    %v3217 = vpack.c.b16 %v2625, %v2617
    %v3218 = vpack.c.b16 %v2626, %v2618
    %v3219 = vpack.c.b16 %v2627, %v2619
    %v3220 = vpack.c.b16 %v2628, %v2620
    %v3221 = vpack.c.b16 %v2629, %v2621
    %v3222 = vpack.c.b16 %v2638, %v2630
    %v3223 = vpack.c.b16 %v2639, %v2631
    %v3224 = vpack.c.b16 %v2640, %v2632
    %v3225 = vpack.c.b16 %v2641, %v2633
    %v3226 = vpack.c.b16 %v2642, %v2634
    %v3227 = vpack.c.b16 %v2643, %v2635
    %v3228 = vpack.c.b16 %v2644, %v2636
    %v3229 = vpack.c.b16 %v2645, %v2637
    %v3230 = vpack.c.b16 %v2654, %v2646
    %v3231 = vpack.c.b16 %v2655, %v2647
    %v3232 = vpack.c.b16 %v2656, %v2648
    %v3233 = vpack.c.b16 %v2657, %v2649
    %v3234 = vpack.c.b16 %v2658, %v2650
    %v3235 = vpack.c.b16 %v2659, %v2651
    %v3236 = vpack.c.b16 %v2660, %v2652
    %v3237 = vpack.c.b16 %v2661, %v2653
    %v3238 = vpack.c.b16 %v2670, %v2662
    %v3239 = vpack.c.b16 %v2671, %v2663
    %v3240 = vpack.c.b16 %v2672, %v2664
    %v3241 = vpack.c.b16 %v2673, %v2665
    %v3242 = vpack.c.b16 %v2674, %v2666
    %v3243 = vpack.c.b16 %v2675, %v2667
    %v3244 = vpack.c.b16 %v2676, %v2668
    %v3245 = vpack.c.b16 %v2677, %v2669
    %v3246 = vpack.c.b16 %v2686, %v2678
    %v3247 = vpack.c.b16 %v2687, %v2679
    %v3248 = vpack.c.b16 %v2688, %v2680
    %v3249 = vpack.c.b16 %v2689, %v2681
    %v3250 = vpack.c.b16 %v2690, %v2682
    %v3251 = vpack.c.b16 %v2691, %v2683
    %v3252 = vpack.c.b16 %v2692, %v2684
    %v3253 = vpack.c.b16 %v2693, %v2685
    %v3254 = vpack.c.b16 %v2702, %v2694
    %v3255 = vpack.c.b16 %v2703, %v2695
    %v3256 = vpack.c.b16 %v2704, %v2696
    %v3257 = vpack.c.b16 %v2705, %v2697
    %v3258 = vpack.c.b16 %v2706, %v2698
    %v3259 = vpack.c.b16 %v2707, %v2699
    %v3260 = vpack.c.b16 %v2708, %v2700
    %v3261 = vpack.c.b16 %v2709, %v2701
    %v3262 = vpack.c.b16 %v2718, %v2710
    %v3263 = vpack.c.b16 %v2719, %v2711
    %v3264 = vpack.c.b16 %v2720, %v2712
    %v3265 = vpack.c.b16 %v2721, %v2713
    %v3266 = vpack.c.b16 %v2722, %v2714
    %v3267 = vpack.c.b16 %v2723, %v2715
    %v3268 = vpack.c.b16 %v2724, %v2716
    %v3269 = vpack.c.b16 %v2725, %v2717
    %v3270 = vpack.c.b16 %v2734, %v2726
    %v3271 = vpack.c.b16 %v2735, %v2727
    %v3272 = vpack.c.b16 %v2736, %v2728
    %v3273 = vpack.c.b16 %v2737, %v2729
    %v3274 = vpack.c.b16 %v2738, %v2730
    %v3275 = vpack.c.b16 %v2739, %v2731
    %v3276 = vpack.c.b16 %v2740, %v2732
    %v3277 = vpack.c.b16 %v2741, %v2733
    %v3278 = vpack.c.b16 %v2750, %v2742
    %v3279 = vpack.c.b16 %v2751, %v2743
    %v3280 = vpack.c.b16 %v2752, %v2744
    %v3281 = vpack.c.b16 %v2753, %v2745
    %v3282 = vpack.c.b16 %v2754, %v2746
    %v3283 = vpack.c.b16 %v2755, %v2747
    %v3284 = vpack.c.b16 %v2756, %v2748
    %v3285 = vpack.c.b16 %v2757, %v2749
    %v3286 = vpack.c.b16 %v2766, %v2758
    %v3287 = vpack.c.b16 %v2767, %v2759
    %v3288 = vpack.c.b16 %v2768, %v2760
    %v3289 = vpack.c.b16 %v2769, %v2761
    %v3290 = vpack.c.b16 %v2770, %v2762
    %v3291 = vpack.c.b16 %v2771, %v2763
    %v3292 = vpack.c.b16 %v2772, %v2764
    %v3293 = vpack.c.b16 %v2773, %v2765
    %v3294 = vpack.c.b16 %v2782, %v2774
    %v3295 = vpack.c.b16 %v2783, %v2775
    %v3296 = vpack.c.b16 %v2784, %v2776
    %v3297 = vpack.c.b16 %v2785, %v2777
    %v3298 = vpack.c.b16 %v2786, %v2778
    %v3299 = vpack.c.b16 %v2787, %v2779
    %v3300 = vpack.c.b16 %v2788, %v2780
    %v3301 = vpack.c.b16 %v2789, %v2781
    %3814 = vmatprep.subr.bf16.mxu0 %v2791
    %3815 = vmatpush1.bf16.msra.mxu0 %v2790
    %3816 = vmatprep.subr.bf16.mxu0 %v2799
    %3817 = vmatpush1.bf16.msra.mxu0 %v2798
    %3818 = vmatprep.subr.bf16.mxu0 %v2807
    %3819 = vmatpush1.bf16.msra.mxu0 %v2806
    %3820 = vmatprep.subr.bf16.mxu0 %v2815
    %3821 = vmatpush1.bf16.msra.mxu0 %v2814
    %3822 = vmatprep.subr.bf16.mxu0 %v2823
    %3823 = vmatpush1.bf16.msra.mxu0 %v2822
    %3824 = vmatprep.subr.bf16.mxu0 %v2831
    %3825 = vmatpush1.bf16.msra.mxu0 %v2830
    %3826 = vmatprep.subr.bf16.mxu0 %v2839
    %3827 = vmatpush1.bf16.msra.mxu0 %v2838
    %3828 = vmatprep.subr.bf16.mxu0 %v2847
    %3829 = vmatpush1.bf16.msra.mxu0 %v2846
    %3830 = vmatprep.subr.bf16.mxu0 %v2855
    %3831 = vmatpush1.bf16.msra.mxu0 %v2854
    %3832 = vmatprep.subr.bf16.mxu0 %v2863
    %3833 = vmatpush1.bf16.msra.mxu0 %v2862
    %3834 = vmatprep.subr.bf16.mxu0 %v2871
    %3835 = vmatpush1.bf16.msra.mxu0 %v2870
    %3836 = vmatprep.subr.bf16.mxu0 %v2879
    %3837 = vmatpush1.bf16.msra.mxu0 %v2878
    %3838 = vmatprep.subr.bf16.mxu0 %v2887
    %3839 = vmatpush1.bf16.msra.mxu0 %v2886
    %3840 = vmatprep.subr.bf16.mxu0 %v2895
    %3841 = vmatpush1.bf16.msra.mxu0 %v2894
    %3842 = vmatprep.subr.bf16.mxu0 %v2903
    %3843 = vmatpush1.bf16.msra.mxu0 %v2902
    %3844 = vmatprep.subr.bf16.mxu0 %v2911
    %3845 = vmatpush1.bf16.msra.mxu0 %v2910
    %3846 = vmatprep.mubr.bf16.mxu0 %v1234
    %3847 = vmatmul.mubr.bf16.gmra.mrb[0].mxu0 %v1220
    %v3848 = vpop.f32.mrb[0].mxu0
    %v3849 = vadd.f32 %v1159, %v3848
    %v3850 = vpop.f32.mrb[0].mxu0
    %v3851 = vadd.f32 %v1163, %v3850
    %v3852 = vpop.f32.mrb[0].mxu0
    %v3853 = vpop.f32.mrb[0].mxu0
    %3854 = vdwg.mxu0
    %3855 = vmatprep.subr.bf16.mxu0 %v2919
    %3856 = vmatpush1.bf16.msra.mxu0 %v2918
    %3857 = vmatprep.subr.bf16.mxu0 %v2927
    %3858 = vmatpush1.bf16.msra.mxu0 %v2926
    %3859 = vmatprep.subr.bf16.mxu0 %v2935
    %3860 = vmatpush1.bf16.msra.mxu0 %v2934
    %3861 = vmatprep.subr.bf16.mxu0 %v2943
    %3862 = vmatpush1.bf16.msra.mxu0 %v2942
    %3863 = vmatprep.subr.bf16.mxu0 %v2951
    %3864 = vmatpush1.bf16.msra.mxu0 %v2950
    %3865 = vmatprep.subr.bf16.mxu0 %v2959
    %3866 = vmatpush1.bf16.msra.mxu0 %v2958
    %3867 = vmatprep.subr.bf16.mxu0 %v2967
    %3868 = vmatpush1.bf16.msra.mxu0 %v2966
    %3869 = vmatprep.subr.bf16.mxu0 %v2975
    %3870 = vmatpush1.bf16.msra.mxu0 %v2974
    %3871 = vmatprep.subr.bf16.mxu0 %v2983
    %3872 = vmatpush1.bf16.msra.mxu0 %v2982
    %3873 = vmatprep.subr.bf16.mxu0 %v2991
    %3874 = vmatpush1.bf16.msra.mxu0 %v2990
    %3875 = vmatprep.subr.bf16.mxu0 %v2999
    %3876 = vmatpush1.bf16.msra.mxu0 %v2998
    %3877 = vmatprep.subr.bf16.mxu0 %v3007
    %3878 = vmatpush1.bf16.msra.mxu0 %v3006
    %3879 = vmatprep.subr.bf16.mxu0 %v3015
    %3880 = vmatpush1.bf16.msra.mxu0 %v3014
    %3881 = vmatprep.subr.bf16.mxu0 %v3023
    %3882 = vmatpush1.bf16.msra.mxu0 %v3022
    %3883 = vmatprep.subr.bf16.mxu0 %v3031
    %3884 = vmatpush1.bf16.msra.mxu0 %v3030
    %3885 = vmatprep.subr.bf16.mxu0 %v3039
    %3886 = vmatpush1.bf16.msra.mxu0 %v3038
    %3887 = vmatprep.mubr.bf16.mxu0 %v1244
    %3888 = vmatmul.mubr.bf16.gmra.mrb[0].mxu0 %v1242
    %v3889 = vpop.f32.mrb[0].mxu0
    %v3890 = vadd.f32 %v3849, %v3889
    %v3891 = vpop.f32.mrb[0].mxu0
    %v3892 = vadd.f32 %v3851, %v3891
    %v3893 = vpop.f32.mrb[0].mxu0
    %v3894 = vpop.f32.mrb[0].mxu0
    %3895 = vdwg.mxu0
    %3896 = vmatprep.subr.bf16.mxu0 %v3047
    %3897 = vmatpush1.bf16.msra.mxu0 %v3046
    %3898 = vmatprep.subr.bf16.mxu0 %v3055
    %3899 = vmatpush1.bf16.msra.mxu0 %v3054
    %3900 = vmatprep.subr.bf16.mxu0 %v3063
    %3901 = vmatpush1.bf16.msra.mxu0 %v3062
    %3902 = vmatprep.subr.bf16.mxu0 %v3071
    %3903 = vmatpush1.bf16.msra.mxu0 %v3070
    %3904 = vmatprep.subr.bf16.mxu0 %v3079
    %3905 = vmatpush1.bf16.msra.mxu0 %v3078
    %3906 = vmatprep.subr.bf16.mxu0 %v3087
    %3907 = vmatpush1.bf16.msra.mxu0 %v3086
    %3908 = vmatprep.subr.bf16.mxu0 %v3095
    %3909 = vmatpush1.bf16.msra.mxu0 %v3094
    %3910 = vmatprep.subr.bf16.mxu0 %v3103
    %3911 = vmatpush1.bf16.msra.mxu0 %v3102
    %3912 = vmatprep.subr.bf16.mxu0 %v3111
    %3913 = vmatpush1.bf16.msra.mxu0 %v3110
    %3914 = vmatprep.subr.bf16.mxu0 %v3119
    %3915 = vmatpush1.bf16.msra.mxu0 %v3118
    %3916 = vmatprep.subr.bf16.mxu0 %v3127
    %3917 = vmatpush1.bf16.msra.mxu0 %v3126
    %3918 = vmatprep.subr.bf16.mxu0 %v3135
    %3919 = vmatpush1.bf16.msra.mxu0 %v3134
    %3920 = vmatprep.subr.bf16.mxu0 %v3143
    %3921 = vmatpush1.bf16.msra.mxu0 %v3142
    %3922 = vmatprep.subr.bf16.mxu0 %v3151
    %3923 = vmatpush1.bf16.msra.mxu0 %v3150
    %3924 = vmatprep.subr.bf16.mxu0 %v3159
    %3925 = vmatpush1.bf16.msra.mxu0 %v3158
    %3926 = vmatprep.subr.bf16.mxu0 %v3167
    %3927 = vmatpush1.bf16.msra.mxu0 %v3166
    %3928 = vmatprep.mubr.bf16.mxu0 %v1241
    %3929 = vmatmul.mubr.bf16.gmra.mrb[0].mxu0 %v1227
    %v3930 = vpop.f32.mrb[0].mxu0
    %v3931 = vadd.f32 %v3890, %v3930
    %v3932 = vpop.f32.mrb[0].mxu0
    %v3933 = vadd.f32 %v3892, %v3932
    %v3934 = vpop.f32.mrb[0].mxu0
    %v3935 = vpop.f32.mrb[0].mxu0
    %3936 = vdwg.mxu0
    %3937 = vmatprep.subr.bf16.mxu0 %v3175
    %3938 = vmatpush1.bf16.msra.mxu0 %v3174
    %3939 = vmatprep.subr.bf16.mxu0 %v3183
    %3940 = vmatpush1.bf16.msra.mxu0 %v3182
    %3941 = vmatprep.subr.bf16.mxu0 %v3191
    %3942 = vmatpush1.bf16.msra.mxu0 %v3190
    %3943 = vmatprep.subr.bf16.mxu0 %v3199
    %3944 = vmatpush1.bf16.msra.mxu0 %v3198
    %3945 = vmatprep.subr.bf16.mxu0 %v3207
    %3946 = vmatpush1.bf16.msra.mxu0 %v3206
    %3947 = vmatprep.subr.bf16.mxu0 %v3215
    %3948 = vmatpush1.bf16.msra.mxu0 %v3214
    %3949 = vmatprep.subr.bf16.mxu0 %v3223
    %3950 = vmatpush1.bf16.msra.mxu0 %v3222
    %3951 = vmatprep.subr.bf16.mxu0 %v3231
    %3952 = vmatpush1.bf16.msra.mxu0 %v3230
    %3953 = vmatprep.subr.bf16.mxu0 %v3239
    %3954 = vmatpush1.bf16.msra.mxu0 %v3238
    %3955 = vmatprep.subr.bf16.mxu0 %v3247
    %3956 = vmatpush1.bf16.msra.mxu0 %v3246
    %3957 = vmatprep.subr.bf16.mxu0 %v3255
    %3958 = vmatpush1.bf16.msra.mxu0 %v3254
    %3959 = vmatprep.subr.bf16.mxu0 %v3263
    %3960 = vmatpush1.bf16.msra.mxu0 %v3262
    %3961 = vmatprep.subr.bf16.mxu0 %v3271
    %3962 = vmatpush1.bf16.msra.mxu0 %v3270
    %3963 = vmatprep.subr.bf16.mxu0 %v3279
    %3964 = vmatpush1.bf16.msra.mxu0 %v3278
    %3965 = vmatprep.subr.bf16.mxu0 %v3287
    %3966 = vmatpush1.bf16.msra.mxu0 %v3286
    %3967 = vmatprep.subr.bf16.mxu0 %v3295
    %3968 = vmatpush1.bf16.msra.mxu0 %v3294
    %3969 = vmatprep.mubr.bf16.mxu0 %v1245
    %3970 = vmatmul.mubr.bf16.gmra.mrb[0].mxu0 %v1243
    %v3971 = vpop.f32.mrb[0].mxu0
    %v3972 = vadd.f32 %v3931, %v3971
    %v3973 = vpop.f32.mrb[0].mxu0
    %v3974 = vadd.f32 %v3933, %v3973
    %v3975 = vpop.f32.mrb[0].mxu0
    %v3976 = vpop.f32.mrb[0].mxu0
    %3977 = vdwg.mxu0
    %3978 = vmatprep.subr.bf16.mxu0 %v2793
    %3979 = vmatpush1.bf16.msra.mxu0 %v2792
    %3980 = vmatprep.subr.bf16.mxu0 %v2801
    %3981 = vmatpush1.bf16.msra.mxu0 %v2800
    %3982 = vmatprep.subr.bf16.mxu0 %v2809
    %3983 = vmatpush1.bf16.msra.mxu0 %v2808
    %3984 = vmatprep.subr.bf16.mxu0 %v2817
    %3985 = vmatpush1.bf16.msra.mxu0 %v2816
    %3986 = vmatprep.subr.bf16.mxu0 %v2825
    %3987 = vmatpush1.bf16.msra.mxu0 %v2824
    %3988 = vmatprep.subr.bf16.mxu0 %v2833
    %3989 = vmatpush1.bf16.msra.mxu0 %v2832
    %3990 = vmatprep.subr.bf16.mxu0 %v2841
    %3991 = vmatpush1.bf16.msra.mxu0 %v2840
    %3992 = vmatprep.subr.bf16.mxu0 %v2849
    %3993 = vmatpush1.bf16.msra.mxu0 %v2848
    %3994 = vmatprep.subr.bf16.mxu0 %v2857
    %3995 = vmatpush1.bf16.msra.mxu0 %v2856
    %3996 = vmatprep.subr.bf16.mxu0 %v2865
    %3997 = vmatpush1.bf16.msra.mxu0 %v2864
    %3998 = vmatprep.subr.bf16.mxu0 %v2873
    %3999 = vmatpush1.bf16.msra.mxu0 %v2872
    %4000 = vmatprep.subr.bf16.mxu0 %v2881
    %4001 = vmatpush1.bf16.msra.mxu0 %v2880
    %4002 = vmatprep.subr.bf16.mxu0 %v2889
    %4003 = vmatpush1.bf16.msra.mxu0 %v2888
    %4004 = vmatprep.subr.bf16.mxu0 %v2897
    %4005 = vmatpush1.bf16.msra.mxu0 %v2896
    %4006 = vmatprep.subr.bf16.mxu0 %v2905
    %4007 = vmatpush1.bf16.msra.mxu0 %v2904
    %4008 = vmatprep.subr.bf16.mxu0 %v2913
    %4009 = vmatpush1.bf16.msra.mxu0 %v2912
    %4010 = vmatprep.mubr.bf16.mxu0 %v1234
    %4011 = vmatmul.mubr.bf16.gmra.mrb[0].mxu0 %v1220
    %v4012 = vpop.f32.mrb[0].mxu0
    %v4013 = vadd.f32 %v1167, %v4012
    %v4014 = vpop.f32.mrb[0].mxu0
    %v4015 = vadd.f32 %v1171, %v4014
    %v4016 = vpop.f32.mrb[0].mxu0
    %v4017 = vpop.f32.mrb[0].mxu0
    %4018 = vdwg.mxu0
    %4019 = vmatprep.subr.bf16.mxu0 %v2921
    %4020 = vmatpush1.bf16.msra.mxu0 %v2920
    %4021 = vmatprep.subr.bf16.mxu0 %v2929
    %4022 = vmatpush1.bf16.msra.mxu0 %v2928
    %4023 = vmatprep.subr.bf16.mxu0 %v2937
    %4024 = vmatpush1.bf16.msra.mxu0 %v2936
    %4025 = vmatprep.subr.bf16.mxu0 %v2945
    %4026 = vmatpush1.bf16.msra.mxu0 %v2944
    %4027 = vmatprep.subr.bf16.mxu0 %v2953
    %4028 = vmatpush1.bf16.msra.mxu0 %v2952
    %4029 = vmatprep.subr.bf16.mxu0 %v2961
    %4030 = vmatpush1.bf16.msra.mxu0 %v2960
    %4031 = vmatprep.subr.bf16.mxu0 %v2969
    %4032 = vmatpush1.bf16.msra.mxu0 %v2968
    %4033 = vmatprep.subr.bf16.mxu0 %v2977
    %4034 = vmatpush1.bf16.msra.mxu0 %v2976
    %4035 = vmatprep.subr.bf16.mxu0 %v2985
    %4036 = vmatpush1.bf16.msra.mxu0 %v2984
    %4037 = vmatprep.subr.bf16.mxu0 %v2993
    %4038 = vmatpush1.bf16.msra.mxu0 %v2992
    %4039 = vmatprep.subr.bf16.mxu0 %v3001
    %4040 = vmatpush1.bf16.msra.mxu0 %v3000
    %4041 = vmatprep.subr.bf16.mxu0 %v3009
    %4042 = vmatpush1.bf16.msra.mxu0 %v3008
    %4043 = vmatprep.subr.bf16.mxu0 %v3017
    %4044 = vmatpush1.bf16.msra.mxu0 %v3016
    %4045 = vmatprep.subr.bf16.mxu0 %v3025
    %4046 = vmatpush1.bf16.msra.mxu0 %v3024
    %4047 = vmatprep.subr.bf16.mxu0 %v3033
    %4048 = vmatpush1.bf16.msra.mxu0 %v3032
    %4049 = vmatprep.subr.bf16.mxu0 %v3041
    %4050 = vmatpush1.bf16.msra.mxu0 %v3040
    %4051 = vmatprep.mubr.bf16.mxu0 %v1244
    %4052 = vmatmul.mubr.bf16.gmra.mrb[0].mxu0 %v1242
    %v4053 = vpop.f32.mrb[0].mxu0
    %v4054 = vadd.f32 %v4013, %v4053
    %v4055 = vpop.f32.mrb[0].mxu0
    %v4056 = vadd.f32 %v4015, %v4055
    %v4057 = vpop.f32.mrb[0].mxu0
    %v4058 = vpop.f32.mrb[0].mxu0
    %4059 = vdwg.mxu0
    %4060 = vmatprep.subr.bf16.mxu0 %v3049
    %4061 = vmatpush1.bf16.msra.mxu0 %v3048
    %4062 = vmatprep.subr.bf16.mxu0 %v3057
    %4063 = vmatpush1.bf16.msra.mxu0 %v3056
    %4064 = vmatprep.subr.bf16.mxu0 %v3065
    %4065 = vmatpush1.bf16.msra.mxu0 %v3064
    %4066 = vmatprep.subr.bf16.mxu0 %v3073
    %4067 = vmatpush1.bf16.msra.mxu0 %v3072
    %4068 = vmatprep.subr.bf16.mxu0 %v3081
    %4069 = vmatpush1.bf16.msra.mxu0 %v3080
    %4070 = vmatprep.subr.bf16.mxu0 %v3089
    %4071 = vmatpush1.bf16.msra.mxu0 %v3088
    %4072 = vmatprep.subr.bf16.mxu0 %v3097
    %4073 = vmatpush1.bf16.msra.mxu0 %v3096
    %4074 = vmatprep.subr.bf16.mxu0 %v3105
    %4075 = vmatpush1.bf16.msra.mxu0 %v3104
    %4076 = vmatprep.subr.bf16.mxu0 %v3113
    %4077 = vmatpush1.bf16.msra.mxu0 %v3112
    %4078 = vmatprep.subr.bf16.mxu0 %v3121
    %4079 = vmatpush1.bf16.msra.mxu0 %v3120
    %4080 = vmatprep.subr.bf16.mxu0 %v3129
    %4081 = vmatpush1.bf16.msra.mxu0 %v3128
    %4082 = vmatprep.subr.bf16.mxu0 %v3137
    %4083 = vmatpush1.bf16.msra.mxu0 %v3136
    %4084 = vmatprep.subr.bf16.mxu0 %v3145
    %4085 = vmatpush1.bf16.msra.mxu0 %v3144
    %4086 = vmatprep.subr.bf16.mxu0 %v3153
    %4087 = vmatpush1.bf16.msra.mxu0 %v3152
    %4088 = vmatprep.subr.bf16.mxu0 %v3161
    %4089 = vmatpush1.bf16.msra.mxu0 %v3160
    %4090 = vmatprep.subr.bf16.mxu0 %v3169
    %4091 = vmatpush1.bf16.msra.mxu0 %v3168
    %4092 = vmatprep.mubr.bf16.mxu0 %v1241
    %4093 = vmatmul.mubr.bf16.gmra.mrb[0].mxu0 %v1227
    %v4094 = vpop.f32.mrb[0].mxu0
    %v4095 = vadd.f32 %v4054, %v4094
    %v4096 = vpop.f32.mrb[0].mxu0
    %v4097 = vadd.f32 %v4056, %v4096
    %v4098 = vpop.f32.mrb[0].mxu0
    %v4099 = vpop.f32.mrb[0].mxu0
    %4100 = vdwg.mxu0
    %4101 = vmatprep.subr.bf16.mxu0 %v3177
    %4102 = vmatpush1.bf16.msra.mxu0 %v3176
    %4103 = vmatprep.subr.bf16.mxu0 %v3185
    %4104 = vmatpush1.bf16.msra.mxu0 %v3184
    %4105 = vmatprep.subr.bf16.mxu0 %v3193
    %4106 = vmatpush1.bf16.msra.mxu0 %v3192
    %4107 = vmatprep.subr.bf16.mxu0 %v3201
    %4108 = vmatpush1.bf16.msra.mxu0 %v3200
    %4109 = vmatprep.subr.bf16.mxu0 %v3209
    %4110 = vmatpush1.bf16.msra.mxu0 %v3208
    %4111 = vmatprep.subr.bf16.mxu0 %v3217
    %4112 = vmatpush1.bf16.msra.mxu0 %v3216
    %4113 = vmatprep.subr.bf16.mxu0 %v3225
    %4114 = vmatpush1.bf16.msra.mxu0 %v3224
    %4115 = vmatprep.subr.bf16.mxu0 %v3233
    %4116 = vmatpush1.bf16.msra.mxu0 %v3232
    %4117 = vmatprep.subr.bf16.mxu0 %v3241
    %4118 = vmatpush1.bf16.msra.mxu0 %v3240
    %4119 = vmatprep.subr.bf16.mxu0 %v3249
    %4120 = vmatpush1.bf16.msra.mxu0 %v3248
    %4121 = vmatprep.subr.bf16.mxu0 %v3257
    %4122 = vmatpush1.bf16.msra.mxu0 %v3256
    %4123 = vmatprep.subr.bf16.mxu0 %v3265
    %4124 = vmatpush1.bf16.msra.mxu0 %v3264
    %4125 = vmatprep.subr.bf16.mxu0 %v3273
    %4126 = vmatpush1.bf16.msra.mxu0 %v3272
    %4127 = vmatprep.subr.bf16.mxu0 %v3281
    %4128 = vmatpush1.bf16.msra.mxu0 %v3280
    %4129 = vmatprep.subr.bf16.mxu0 %v3289
    %4130 = vmatpush1.bf16.msra.mxu0 %v3288
    %4131 = vmatprep.subr.bf16.mxu0 %v3297
    %4132 = vmatpush1.bf16.msra.mxu0 %v3296
    %4133 = vmatprep.mubr.bf16.mxu0 %v1245
    %4134 = vmatmul.mubr.bf16.gmra.mrb[0].mxu0 %v1243
    %v4135 = vpop.f32.mrb[0].mxu0
    %v4136 = vadd.f32 %v4095, %v4135
    %v4137 = vpop.f32.mrb[0].mxu0
    %v4138 = vadd.f32 %v4097, %v4137
    %v4139 = vpop.f32.mrb[0].mxu0
    %v4140 = vpop.f32.mrb[0].mxu0
    %4141 = vdwg.mxu0
    %4142 = vmatprep.subr.bf16.mxu0 %v2795
    %4143 = vmatpush1.bf16.msra.mxu0 %v2794
    %4144 = vmatprep.subr.bf16.mxu0 %v2803
    %4145 = vmatpush1.bf16.msra.mxu0 %v2802
    %4146 = vmatprep.subr.bf16.mxu0 %v2811
    %4147 = vmatpush1.bf16.msra.mxu0 %v2810
    %4148 = vmatprep.subr.bf16.mxu0 %v2819
    %4149 = vmatpush1.bf16.msra.mxu0 %v2818
    %4150 = vmatprep.subr.bf16.mxu0 %v2827
    %4151 = vmatpush1.bf16.msra.mxu0 %v2826
    %4152 = vmatprep.subr.bf16.mxu0 %v2835
    %4153 = vmatpush1.bf16.msra.mxu0 %v2834
    %4154 = vmatprep.subr.bf16.mxu0 %v2843
    %4155 = vmatpush1.bf16.msra.mxu0 %v2842
    %4156 = vmatprep.subr.bf16.mxu0 %v2851
    %4157 = vmatpush1.bf16.msra.mxu0 %v2850
    %4158 = vmatprep.subr.bf16.mxu0 %v2859
    %4159 = vmatpush1.bf16.msra.mxu0 %v2858
    %4160 = vmatprep.subr.bf16.mxu0 %v2867
    %4161 = vmatpush1.bf16.msra.mxu0 %v2866
    %4162 = vmatprep.subr.bf16.mxu0 %v2875
    %4163 = vmatpush1.bf16.msra.mxu0 %v2874
    %4164 = vmatprep.subr.bf16.mxu0 %v2883
    %4165 = vmatpush1.bf16.msra.mxu0 %v2882
    %4166 = vmatprep.subr.bf16.mxu0 %v2891
    %4167 = vmatpush1.bf16.msra.mxu0 %v2890
    %4168 = vmatprep.subr.bf16.mxu0 %v2899
    %4169 = vmatpush1.bf16.msra.mxu0 %v2898
    %4170 = vmatprep.subr.bf16.mxu0 %v2907
    %4171 = vmatpush1.bf16.msra.mxu0 %v2906
    %4172 = vmatprep.subr.bf16.mxu0 %v2915
    %4173 = vmatpush1.bf16.msra.mxu0 %v2914
    %4174 = vmatprep.mubr.bf16.mxu0 %v1234
    %4175 = vmatmul.mubr.bf16.gmra.mrb[0].mxu0 %v1220
    %v4176 = vpop.f32.mrb[0].mxu0
    %v4177 = vadd.f32 %v1175, %v4176
    %v4178 = vpop.f32.mrb[0].mxu0
    %v4179 = vadd.f32 %v1179, %v4178
    %v4180 = vpop.f32.mrb[0].mxu0
    %v4181 = vpop.f32.mrb[0].mxu0
    %4182 = vdwg.mxu0
    %4183 = vmatprep.subr.bf16.mxu0 %v2923
    %4184 = vmatpush1.bf16.msra.mxu0 %v2922
    %4185 = vmatprep.subr.bf16.mxu0 %v2931
    %4186 = vmatpush1.bf16.msra.mxu0 %v2930
    %4187 = vmatprep.subr.bf16.mxu0 %v2939
    %4188 = vmatpush1.bf16.msra.mxu0 %v2938
    %4189 = vmatprep.subr.bf16.mxu0 %v2947
    %4190 = vmatpush1.bf16.msra.mxu0 %v2946
    %4191 = vmatprep.subr.bf16.mxu0 %v2955
    %4192 = vmatpush1.bf16.msra.mxu0 %v2954
    %4193 = vmatprep.subr.bf16.mxu0 %v2963
    %4194 = vmatpush1.bf16.msra.mxu0 %v2962
    %4195 = vmatprep.subr.bf16.mxu0 %v2971
    %4196 = vmatpush1.bf16.msra.mxu0 %v2970
    %4197 = vmatprep.subr.bf16.mxu0 %v2979
    %4198 = vmatpush1.bf16.msra.mxu0 %v2978
    %4199 = vmatprep.subr.bf16.mxu0 %v2987
    %4200 = vmatpush1.bf16.msra.mxu0 %v2986
    %4201 = vmatprep.subr.bf16.mxu0 %v2995
    %4202 = vmatpush1.bf16.msra.mxu0 %v2994
    %4203 = vmatprep.subr.bf16.mxu0 %v3003
    %4204 = vmatpush1.bf16.msra.mxu0 %v3002
    %4205 = vmatprep.subr.bf16.mxu0 %v3011
    %4206 = vmatpush1.bf16.msra.mxu0 %v3010
    %4207 = vmatprep.subr.bf16.mxu0 %v3019
    %4208 = vmatpush1.bf16.msra.mxu0 %v3018
    %4209 = vmatprep.subr.bf16.mxu0 %v3027
    %4210 = vmatpush1.bf16.msra.mxu0 %v3026
    %4211 = vmatprep.subr.bf16.mxu0 %v3035
    %4212 = vmatpush1.bf16.msra.mxu0 %v3034
    %4213 = vmatprep.subr.bf16.mxu0 %v3043
    %4214 = vmatpush1.bf16.msra.mxu0 %v3042
    %4215 = vmatprep.mubr.bf16.mxu0 %v1244
    %4216 = vmatmul.mubr.bf16.gmra.mrb[0].mxu0 %v1242
    %v4217 = vpop.f32.mrb[0].mxu0
    %v4218 = vadd.f32 %v4177, %v4217
    %v4219 = vpop.f32.mrb[0].mxu0
    %v4220 = vadd.f32 %v4179, %v4219
    %v4221 = vpop.f32.mrb[0].mxu0
    %v4222 = vpop.f32.mrb[0].mxu0
    %4223 = vdwg.mxu0
    %4224 = vmatprep.subr.bf16.mxu0 %v3051
    %4225 = vmatpush1.bf16.msra.mxu0 %v3050
    %4226 = vmatprep.subr.bf16.mxu0 %v3059
    %4227 = vmatpush1.bf16.msra.mxu0 %v3058
    %4228 = vmatprep.subr.bf16.mxu0 %v3067
    %4229 = vmatpush1.bf16.msra.mxu0 %v3066
    %4230 = vmatprep.subr.bf16.mxu0 %v3075
    %4231 = vmatpush1.bf16.msra.mxu0 %v3074
    %4232 = vmatprep.subr.bf16.mxu0 %v3083
    %4233 = vmatpush1.bf16.msra.mxu0 %v3082
    %4234 = vmatprep.subr.bf16.mxu0 %v3091
    %4235 = vmatpush1.bf16.msra.mxu0 %v3090
    %4236 = vmatprep.subr.bf16.mxu0 %v3099
    %4237 = vmatpush1.bf16.msra.mxu0 %v3098
    %4238 = vmatprep.subr.bf16.mxu0 %v3107
    %4239 = vmatpush1.bf16.msra.mxu0 %v3106
    %4240 = vmatprep.subr.bf16.mxu0 %v3115
    %4241 = vmatpush1.bf16.msra.mxu0 %v3114
    %4242 = vmatprep.subr.bf16.mxu0 %v3123
    %4243 = vmatpush1.bf16.msra.mxu0 %v3122
    %4244 = vmatprep.subr.bf16.mxu0 %v3131
    %4245 = vmatpush1.bf16.msra.mxu0 %v3130
    %4246 = vmatprep.subr.bf16.mxu0 %v3139
    %4247 = vmatpush1.bf16.msra.mxu0 %v3138
    %4248 = vmatprep.subr.bf16.mxu0 %v3147
    %4249 = vmatpush1.bf16.msra.mxu0 %v3146
    %4250 = vmatprep.subr.bf16.mxu0 %v3155
    %4251 = vmatpush1.bf16.msra.mxu0 %v3154
    %4252 = vmatprep.subr.bf16.mxu0 %v3163
    %4253 = vmatpush1.bf16.msra.mxu0 %v3162
    %4254 = vmatprep.subr.bf16.mxu0 %v3171
    %4255 = vmatpush1.bf16.msra.mxu0 %v3170
    %4256 = vmatprep.mubr.bf16.mxu0 %v1241
    %4257 = vmatmul.mubr.bf16.gmra.mrb[0].mxu0 %v1227
    %v4258 = vpop.f32.mrb[0].mxu0
    %v4259 = vadd.f32 %v4218, %v4258
    %v4260 = vpop.f32.mrb[0].mxu0
    %v4261 = vadd.f32 %v4220, %v4260
    %v4262 = vpop.f32.mrb[0].mxu0
    %v4263 = vpop.f32.mrb[0].mxu0
    %4264 = vdwg.mxu0
    %4265 = vmatprep.subr.bf16.mxu0 %v3179
    %4266 = vmatpush1.bf16.msra.mxu0 %v3178
    %4267 = vmatprep.subr.bf16.mxu0 %v3187
    %4268 = vmatpush1.bf16.msra.mxu0 %v3186
    %4269 = vmatprep.subr.bf16.mxu0 %v3195
    %4270 = vmatpush1.bf16.msra.mxu0 %v3194
    %4271 = vmatprep.subr.bf16.mxu0 %v3203
    %4272 = vmatpush1.bf16.msra.mxu0 %v3202
    %4273 = vmatprep.subr.bf16.mxu0 %v3211
    %4274 = vmatpush1.bf16.msra.mxu0 %v3210
    %4275 = vmatprep.subr.bf16.mxu0 %v3219
    %4276 = vmatpush1.bf16.msra.mxu0 %v3218
    %4277 = vmatprep.subr.bf16.mxu0 %v3227
    %4278 = vmatpush1.bf16.msra.mxu0 %v3226
    %4279 = vmatprep.subr.bf16.mxu0 %v3235
    %4280 = vmatpush1.bf16.msra.mxu0 %v3234
    %4281 = vmatprep.subr.bf16.mxu0 %v3243
    %4282 = vmatpush1.bf16.msra.mxu0 %v3242
    %4283 = vmatprep.subr.bf16.mxu0 %v3251
    %4284 = vmatpush1.bf16.msra.mxu0 %v3250
    %4285 = vmatprep.subr.bf16.mxu0 %v3259
    %4286 = vmatpush1.bf16.msra.mxu0 %v3258
    %4287 = vmatprep.subr.bf16.mxu0 %v3267
    %4288 = vmatpush1.bf16.msra.mxu0 %v3266
    %4289 = vmatprep.subr.bf16.mxu0 %v3275
    %4290 = vmatpush1.bf16.msra.mxu0 %v3274
    %4291 = vmatprep.subr.bf16.mxu0 %v3283
    %4292 = vmatpush1.bf16.msra.mxu0 %v3282
    %4293 = vmatprep.subr.bf16.mxu0 %v3291
    %4294 = vmatpush1.bf16.msra.mxu0 %v3290
    %4295 = vmatprep.subr.bf16.mxu0 %v3299
    %4296 = vmatpush1.bf16.msra.mxu0 %v3298
    %4297 = vmatprep.mubr.bf16.mxu0 %v1245
    %4298 = vmatmul.mubr.bf16.gmra.mrb[0].mxu0 %v1243
    %v4299 = vpop.f32.mrb[0].mxu0
    %v4300 = vadd.f32 %v4259, %v4299
    %v4301 = vpop.f32.mrb[0].mxu0
    %v4302 = vadd.f32 %v4261, %v4301
    %v4303 = vpop.f32.mrb[0].mxu0
    %v4304 = vpop.f32.mrb[0].mxu0
    %4305 = vdwg.mxu0
    %4306 = vmatprep.subr.bf16.mxu0 %v2797
    %4307 = vmatpush1.bf16.msra.mxu0 %v2796
    %4308 = vmatprep.subr.bf16.mxu0 %v2805
    %4309 = vmatpush1.bf16.msra.mxu0 %v2804
    %4310 = vmatprep.subr.bf16.mxu0 %v2813
    %4311 = vmatpush1.bf16.msra.mxu0 %v2812
    %4312 = vmatprep.subr.bf16.mxu0 %v2821
    %4313 = vmatpush1.bf16.msra.mxu0 %v2820
    %4314 = vmatprep.subr.bf16.mxu0 %v2829
    %4315 = vmatpush1.bf16.msra.mxu0 %v2828
    %4316 = vmatprep.subr.bf16.mxu0 %v2837
    %4317 = vmatpush1.bf16.msra.mxu0 %v2836
    %4318 = vmatprep.subr.bf16.mxu0 %v2845
    %4319 = vmatpush1.bf16.msra.mxu0 %v2844
    %4320 = vmatprep.subr.bf16.mxu0 %v2853
    %4321 = vmatpush1.bf16.msra.mxu0 %v2852
    %4322 = vmatprep.subr.bf16.mxu0 %v2861
    %4323 = vmatpush1.bf16.msra.mxu0 %v2860
    %4324 = vmatprep.subr.bf16.mxu0 %v2869
    %4325 = vmatpush1.bf16.msra.mxu0 %v2868
    %4326 = vmatprep.subr.bf16.mxu0 %v2877
    %4327 = vmatpush1.bf16.msra.mxu0 %v2876
    %4328 = vmatprep.subr.bf16.mxu0 %v2885
    %4329 = vmatpush1.bf16.msra.mxu0 %v2884
    %4330 = vmatprep.subr.bf16.mxu0 %v2893
    %4331 = vmatpush1.bf16.msra.mxu0 %v2892
    %4332 = vmatprep.subr.bf16.mxu0 %v2901
    %4333 = vmatpush1.bf16.msra.mxu0 %v2900
    %4334 = vmatprep.subr.bf16.mxu0 %v2909
    %4335 = vmatpush1.bf16.msra.mxu0 %v2908
    %4336 = vmatprep.subr.bf16.mxu0 %v2917
    %4337 = vmatpush1.bf16.msra.mxu0 %v2916
    %4338 = vmatprep.mubr.bf16.mxu0 %v1234
    %4339 = vmatmul.mubr.bf16.gmra.mrb[0].mxu0 %v1220
    %v4340 = vpop.f32.mrb[0].mxu0
    %v4341 = vadd.f32 %v1183, %v4340
    %v4342 = vpop.f32.mrb[0].mxu0
    %v4343 = vadd.f32 %v1187, %v4342
    %v4344 = vpop.f32.mrb[0].mxu0
    %v4345 = vpop.f32.mrb[0].mxu0
    %4346 = vdwg.mxu0
    %4347 = vmatprep.subr.bf16.mxu0 %v2925
    %4348 = vmatpush1.bf16.msra.mxu0 %v2924
    %4349 = vmatprep.subr.bf16.mxu0 %v2933
    %4350 = vmatpush1.bf16.msra.mxu0 %v2932
    %4351 = vmatprep.subr.bf16.mxu0 %v2941
    %4352 = vmatpush1.bf16.msra.mxu0 %v2940
    %4353 = vmatprep.subr.bf16.mxu0 %v2949
    %4354 = vmatpush1.bf16.msra.mxu0 %v2948
    %4355 = vmatprep.subr.bf16.mxu0 %v2957
    %4356 = vmatpush1.bf16.msra.mxu0 %v2956
    %4357 = vmatprep.subr.bf16.mxu0 %v2965
    %4358 = vmatpush1.bf16.msra.mxu0 %v2964
    %4359 = vmatprep.subr.bf16.mxu0 %v2973
    %4360 = vmatpush1.bf16.msra.mxu0 %v2972
    %4361 = vmatprep.subr.bf16.mxu0 %v2981
    %4362 = vmatpush1.bf16.msra.mxu0 %v2980
    %4363 = vmatprep.subr.bf16.mxu0 %v2989
    %4364 = vmatpush1.bf16.msra.mxu0 %v2988
    %4365 = vmatprep.subr.bf16.mxu0 %v2997
    %4366 = vmatpush1.bf16.msra.mxu0 %v2996
    %4367 = vmatprep.subr.bf16.mxu0 %v3005
    %4368 = vmatpush1.bf16.msra.mxu0 %v3004
    %4369 = vmatprep.subr.bf16.mxu0 %v3013
    %4370 = vmatpush1.bf16.msra.mxu0 %v3012
    %4371 = vmatprep.subr.bf16.mxu0 %v3021
    %4372 = vmatpush1.bf16.msra.mxu0 %v3020
    %4373 = vmatprep.subr.bf16.mxu0 %v3029
    %4374 = vmatpush1.bf16.msra.mxu0 %v3028
    %4375 = vmatprep.subr.bf16.mxu0 %v3037
    %4376 = vmatpush1.bf16.msra.mxu0 %v3036
    %4377 = vmatprep.subr.bf16.mxu0 %v3045
    %4378 = vmatpush1.bf16.msra.mxu0 %v3044
    %4379 = vmatprep.mubr.bf16.mxu0 %v1244
    %4380 = vmatmul.mubr.bf16.gmra.mrb[0].mxu0 %v1242
    %v4381 = vpop.f32.mrb[0].mxu0
    %v4382 = vadd.f32 %v4341, %v4381
    %v4383 = vpop.f32.mrb[0].mxu0
    %v4384 = vadd.f32 %v4343, %v4383
    %v4385 = vpop.f32.mrb[0].mxu0
    %v4386 = vpop.f32.mrb[0].mxu0
    %4387 = vdwg.mxu0
    %4388 = vmatprep.subr.bf16.mxu0 %v3053
    %4389 = vmatpush1.bf16.msra.mxu0 %v3052
    %4390 = vmatprep.subr.bf16.mxu0 %v3061
    %4391 = vmatpush1.bf16.msra.mxu0 %v3060
    %4392 = vmatprep.subr.bf16.mxu0 %v3069
    %4393 = vmatpush1.bf16.msra.mxu0 %v3068
    %4394 = vmatprep.subr.bf16.mxu0 %v3077
    %4395 = vmatpush1.bf16.msra.mxu0 %v3076
    %4396 = vmatprep.subr.bf16.mxu0 %v3085
    %4397 = vmatpush1.bf16.msra.mxu0 %v3084
    %4398 = vmatprep.subr.bf16.mxu0 %v3093
    %4399 = vmatpush1.bf16.msra.mxu0 %v3092
    %4400 = vmatprep.subr.bf16.mxu0 %v3101
    %4401 = vmatpush1.bf16.msra.mxu0 %v3100
    %4402 = vmatprep.subr.bf16.mxu0 %v3109
    %4403 = vmatpush1.bf16.msra.mxu0 %v3108
    %4404 = vmatprep.subr.bf16.mxu0 %v3117
    %4405 = vmatpush1.bf16.msra.mxu0 %v3116
    %4406 = vmatprep.subr.bf16.mxu0 %v3125
    %4407 = vmatpush1.bf16.msra.mxu0 %v3124
    %4408 = vmatprep.subr.bf16.mxu0 %v3133
    %4409 = vmatpush1.bf16.msra.mxu0 %v3132
    %4410 = vmatprep.subr.bf16.mxu0 %v3141
    %4411 = vmatpush1.bf16.msra.mxu0 %v3140
    %4412 = vmatprep.subr.bf16.mxu0 %v3149
    %4413 = vmatpush1.bf16.msra.mxu0 %v3148
    %4414 = vmatprep.subr.bf16.mxu0 %v3157
    %4415 = vmatpush1.bf16.msra.mxu0 %v3156
    %4416 = vmatprep.subr.bf16.mxu0 %v3165
    %4417 = vmatpush1.bf16.msra.mxu0 %v3164
    %4418 = vmatprep.subr.bf16.mxu0 %v3173
    %4419 = vmatpush1.bf16.msra.mxu0 %v3172
    %4420 = vmatprep.mubr.bf16.mxu0 %v1241
    %4421 = vmatmul.mubr.bf16.gmra.mrb[0].mxu0 %v1227
    %v4422 = vpop.f32.mrb[0].mxu0
    %v4423 = vadd.f32 %v4382, %v4422
    %v4424 = vpop.f32.mrb[0].mxu0
    %v4425 = vadd.f32 %v4384, %v4424
    %v4426 = vpop.f32.mrb[0].mxu0
    %v4427 = vpop.f32.mrb[0].mxu0
    %4428 = vdwg.mxu0
    %4429 = vmatprep.subr.bf16.mxu0 %v3181
    %4430 = vmatpush1.bf16.msra.mxu0 %v3180
    %4431 = vmatprep.subr.bf16.mxu0 %v3189
    %4432 = vmatpush1.bf16.msra.mxu0 %v3188
    %4433 = vmatprep.subr.bf16.mxu0 %v3197
    %4434 = vmatpush1.bf16.msra.mxu0 %v3196
    %4435 = vmatprep.subr.bf16.mxu0 %v3205
    %4436 = vmatpush1.bf16.msra.mxu0 %v3204
    %4437 = vmatprep.subr.bf16.mxu0 %v3213
    %4438 = vmatpush1.bf16.msra.mxu0 %v3212
    %4439 = vmatprep.subr.bf16.mxu0 %v3221
    %4440 = vmatpush1.bf16.msra.mxu0 %v3220
    %4441 = vmatprep.subr.bf16.mxu0 %v3229
    %4442 = vmatpush1.bf16.msra.mxu0 %v3228
    %4443 = vmatprep.subr.bf16.mxu0 %v3237
    %4444 = vmatpush1.bf16.msra.mxu0 %v3236
    %4445 = vmatprep.subr.bf16.mxu0 %v3245
    %4446 = vmatpush1.bf16.msra.mxu0 %v3244
    %4447 = vmatprep.subr.bf16.mxu0 %v3253
    %4448 = vmatpush1.bf16.msra.mxu0 %v3252
    %4449 = vmatprep.subr.bf16.mxu0 %v3261
    %4450 = vmatpush1.bf16.msra.mxu0 %v3260
    %4451 = vmatprep.subr.bf16.mxu0 %v3269
    %4452 = vmatpush1.bf16.msra.mxu0 %v3268
    %4453 = vmatprep.subr.bf16.mxu0 %v3277
    %4454 = vmatpush1.bf16.msra.mxu0 %v3276
    %4455 = vmatprep.subr.bf16.mxu0 %v3285
    %4456 = vmatpush1.bf16.msra.mxu0 %v3284
    %4457 = vmatprep.subr.bf16.mxu0 %v3293
    %4458 = vmatpush1.bf16.msra.mxu0 %v3292
    %4459 = vmatprep.subr.bf16.mxu0 %v3301
    %4460 = vmatpush1.bf16.msra.mxu0 %v3300
    %4461 = vmatprep.mubr.bf16.mxu0 %v1245
    %4462 = vmatmul.mubr.bf16.gmra.mrb[0].mxu0 %v1243
    %v4463 = vpop.f32.mrb[0].mxu0
    %v4464 = vadd.f32 %v4423, %v4463
    %v4465 = vpop.f32.mrb[0].mxu0
    %v4466 = vadd.f32 %v4425, %v4465
    %v4467 = vpop.f32.mrb[0].mxu0
    %v4468 = vpop.f32.mrb[0].mxu0
    %4469 = vdwg.mxu0
    %v4470 = vld [vmem:[%s2] sm:$0x3]
    %4472 = vset.pattern.permute.xlu0 0
    %4473 = vperm.xlu0 %4472, %v4470
    %v4474 = vpop.permute.xlu0 %4473
    %v4477 = vlaneseq
    %v4478 = vshrl.u32 %v4477, 7
    %v4479 = vsub.s32 0, %v4478
    %v4480 = vrot.slane %v1154, %v4479
    %v4481 = vlaneseq
    %v4482 = vshrl.u32 %v4481, 7
    %v4483 = vsub.s32 1, %v4482
    %v4484 = vrot.slane %v1154, %v4483
    %v4485 = vlaneseq
    %v4486 = vshrl.u32 %v4485, 7
    %v4487 = vsub.s32 2, %v4486
    %v4488 = vrot.slane %v1154, %v4487
    %v4489 = vlaneseq
    %v4490 = vshrl.u32 %v4489, 7
    %v4491 = vsub.s32 3, %v4490
    %v4492 = vrot.slane %v1154, %v4491
    %v4493 = vlaneseq
    %v4494 = vshrl.u32 %v4493, 7
    %v4495 = vsub.s32 4, %v4494
    %v4496 = vrot.slane %v1154, %v4495
    %v4497 = vlaneseq
    %v4498 = vshrl.u32 %v4497, 7
    %v4499 = vsub.s32 5, %v4498
    %v4500 = vrot.slane %v1154, %v4499
    %v4501 = vlaneseq
    %v4502 = vshrl.u32 %v4501, 7
    %v4503 = vsub.s32 6, %v4502
    %v4504 = vrot.slane %v1154, %v4503
    %v4505 = vlaneseq
    %v4506 = vshrl.u32 %v4505, 7
    %v4507 = vsub.s32 7, %v4506
    %v4508 = vrot.slane %v1154, %v4507
    %v4517 = vmul.f32 %v4474, %v4480
    %v4518 = vmul.f32 %v4474, %v4484
    %v4519 = vmul.f32 %v4474, %v4488
    %v4520 = vmul.f32 %v4474, %v4492
    %v4521 = vmul.f32 %v4474, %v4496
    %v4522 = vmul.f32 %v4474, %v4500
    %v4523 = vmul.f32 %v4474, %v4504
    %v4524 = vmul.f32 %v4474, %v4508
    %v4525 = vadd.f32 %v3972, %v4517
    %v4526 = vadd.f32 %v3974, %v4518
    %v4527 = vadd.f32 %v4136, %v4519
    %v4528 = vadd.f32 %v4138, %v4520
    %v4529 = vadd.f32 %v4300, %v4521
    %v4530 = vadd.f32 %v4302, %v4522
    %v4531 = vadd.f32 %v4464, %v4523
    %v4532 = vadd.f32 %v4466, %v4524
    %v4533 = vld [vmem:[%s3] sm:$0x3]
    %4535 = vset.pattern.permute.xlu0 0
    %4536 = vperm.xlu0 %4535, %v4533
    %v4537 = vpop.permute.xlu0 %4536
    %v4539 = vmul.f32 %v4537, %v1023
    %v4540 = vmul.f32 %v4537, %v1025
    %v4541 = vmul.f32 %v4537, %v1064
    %v4542 = vmul.f32 %v4537, %v1066
    %v4543 = vmul.f32 %v4537, %v1105
    %v4544 = vmul.f32 %v4537, %v1107
    %v4545 = vmul.f32 %v4537, %v1146
    %v4546 = vmul.f32 %v4537, %v1148
    %v4547 = vadd.f32 %v4525, %v4539
    %v4548 = vadd.f32 %v4526, %v4540
    %v4549 = vadd.f32 %v4527, %v4541
    %v4550 = vadd.f32 %v4528, %v4542
    %v4551 = vadd.f32 %v4529, %v4543
    %v4552 = vadd.f32 %v4530, %v4544
    %v4553 = vadd.f32 %v4531, %v4545
    %v4554 = vadd.f32 %v4532, %v4546
    %v4563 = vcombine.low %v4547, %v4548
    %v4564 = vcombine.low %v4549, %v4550
    %v4566 = vunpack.c.l.s4 1983009808
    %v4567 = vunpack.c.0.s8 %v4566
    %v4568 = vlaneseq
    %v4569 = vshrl.u32 %v4568, 7
    %v4570 = vsub.s32 %v4567, %v4569
    %v4571 = vrot.slane %v4563, %v4570
    %v4573 = vunpack.c.l.s4 1983009808
    %v4574 = vunpack.c.0.s8 %v4573
    %v4575 = vlaneseq
    %v4576 = vshrl.u32 %v4575, 7
    %v4577 = vsub.s32 %v4574, %v4576
    %v4578 = vrot.slane %v4564, %v4577
    %v4579 = vcombine.low %v4571, %v4578
    %v4580 = vcombine.low %v4551, %v4552
    %v4581 = vcombine.low %v4553, %v4554
    %v4583 = vunpack.c.l.s4 1983009808
    %v4584 = vunpack.c.0.s8 %v4583
    %v4585 = vlaneseq
    %v4586 = vshrl.u32 %v4585, 7
    %v4587 = vsub.s32 %v4584, %v4586
    %v4588 = vrot.slane %v4580, %v4587
    %v4590 = vunpack.c.l.s4 1983009808
    %v4591 = vunpack.c.0.s8 %v4590
    %v4592 = vlaneseq
    %v4593 = vshrl.u32 %v4592, 7
    %v4594 = vsub.s32 %v4591, %v4593
    %v4595 = vrot.slane %v4581, %v4594
    %v4596 = vcombine.low %v4588, %v4595
    %4599 = vst [vmem:[#allocation11] sm:$0xff] %v4579
    %4600 = vst [vmem:[#allocation11 + $0x8] sm:$0xff] %v4596
    // Predicated region
    $region50: #{tpu_custom_call.1} parent=1 // pred_check
      _
    $region51: #{tpu_custom_call.1} parent=1 // pred_check_branch
      %4602 = sbr.rel (0) target = $region53
    $region52: #{tpu_custom_call.1} parent=1 // pred_region
      %s4604 = ssub.s32 256, 256
      %4605 = vsyncadd [#allocation4], %s4604
      %s4607 = sshll.u32 [#allocation11], 4
      %s4608 = int_to_ptr.vmem [resolvable:$true] %s4607
      %4610 = dma.vmem_to_hbm [thread:$0]  %s4608, 256, %s7, [#allocation4]
    $region53: #{tpu_custom_call.1} parent=1 // pred_fallthru
      _
    // Predicated region
    $region54: #{tpu_custom_call.1} parent=1 // pred_check
      _
    $region55: #{tpu_custom_call.1} parent=1 // pred_check_branch
      %4612 = sbr.rel (0) target = $region57
    $region56: #{tpu_custom_call.1} parent=1 // pred_region
      %4613 = dma.done [#allocation4], 256
    $region57: #{tpu_custom_call.1} parent=1 // pred_fallthru
      _
    %4614 = vsyncpa [#allocation3], 1
    %4615 = vsyncpa [#allocation6], 1
    %4616 = vsyncpa [#allocation9], 1
    %4617 = vsyncpa [#allocation4], 1

</llo_original>
